<compile_context>
chip_gen: v7x
topology: tpu7x:2x2x1
jax: 0.10.0
libtpu: 0.0.40
codegen_flags: <defaults>
</compile_context>

<pallas_src>
import jax
import jax.numpy as jnp
import numpy as np
from jax.experimental import pallas as pl
from jax.experimental.pallas import tpu as pltpu


# ---------------------------------------------------------------------------
# Kernel: whole T-step greedy decode for one batch block, per grid point.
# ---------------------------------------------------------------------------
def decoder_rnn_kernel(
    tok0_ref,      # (BB, NUM_EMB) one-hot f32 start tokens
    hid0_ref,      # (BB, H) initial hidden
    emb_ref,       # (NUM_EMB, H) embedding table
    w_gates_ref,   # (2H, 4H) packed GRU gate weights [ir|iz|in|0 ; hr|hz|0|hn]
    b_gates_ref,   # (1, 4H) packed biases [bir+bhr | biz+bhz | bin | bhn]
    w_out_ref,     # (H, V) output projection (pre-transposed)
    b_out_ref,     # (1, V)
    out_ref,       # (T, BB, 128) packed per-step [logp | h_new | 0]
):
    f32 = jnp.float32
    BB, H = hid0_ref.shape
    V = b_out_ref.shape[1]
    T, _, PACK = out_ref.shape

    # --- hoisted out of the step loop: weights, iota, pad (review item) ------
    emb = emb_ref[...]
    w_gates = w_gates_ref[...]
    b_gates = b_gates_ref[...]
    w_out = w_out_ref[...]
    b_out = b_out_ref[...]
    lane = jax.lax.broadcasted_iota(jnp.int32, (BB, V), 1)
    pad_w = PACK - V - H
    pad = jnp.zeros((BB, pad_w), f32) if pad_w > 0 else None

    def step(t, carry):
        hidden, onehot = carry

        # embedding lookup as one-hot @ table (MXU), then ReLU (module order)
        embedded = jnp.dot(onehot, emb, preferred_element_type=f32)
        x = jnp.maximum(embedded, 0.0)

        # one GRU step: single fused lane-dense gate matmul + single bias add
        xh = jnp.concatenate([x, hidden], axis=1)                    # (BB, 2H)
        g = jnp.dot(xh, w_gates, preferred_element_type=f32) + b_gates  # (BB, 4H)
        r = jax.nn.sigmoid(g[:, 0:H])
        z = jax.nn.sigmoid(g[:, H:2 * H])
        n = jnp.tanh(g[:, 2 * H:3 * H] + r * g[:, 3 * H:4 * H])
        h_new = (1.0 - z) * n + z * hidden

        # output projection + log_softmax(dim=1)
        logits = jnp.dot(h_new, w_out, preferred_element_type=f32) + b_out
        m = jnp.max(logits, axis=1, keepdims=True)
        s = logits - m
        logp = s - jnp.log(jnp.sum(jnp.exp(s), axis=1, keepdims=True))

        # greedy next-token feedback (first-max tie-break like torch.argmax)
        is_max = logits >= m
        nxt = jnp.min(jnp.where(is_max, lane, V), axis=1, keepdims=True)
        onehot_new = (lane == nxt).astype(f32)

        # one lane-dense (BB, 128) packed row per step: [logp | h_new | zeros]
        pieces = [logp, h_new] + ([pad] if pad is not None else [])
        out_ref[t] = jnp.concatenate(pieces, axis=1)

        return (h_new, onehot_new)

    jax.lax.fori_loop(0, T, step, (hid0_ref[...], tok0_ref[...]), unroll=True)


# ---------------------------------------------------------------------------
# Host-side parameter packing (PyTorch layout -> fused kernel layout)
# ---------------------------------------------------------------------------
def pack_params(p):
    H = p["w_hh"].shape[1]
    f32 = jnp.float32
    w_ih, w_hh = p["w_ih"], p["w_hh"]          # (3H, H), PyTorch gate order r,z,n
    b_ih, b_hh = p["b_ih"], p["b_hh"]          # (3H,)

    wir, wiz, win = w_ih[0:H].T, w_ih[H:2 * H].T, w_ih[2 * H:3 * H].T
    whr, whz, whn = w_hh[0:H].T, w_hh[H:2 * H].T, w_hh[2 * H:3 * H].T
    zeros = jnp.zeros((H, H), f32)

    # (2H, 4H) fused gate block:  top rows multiply x, bottom rows multiply h.
    #   lanes [0:H]   -> i_r + h_r
    #   lanes [H:2H]  -> i_z + h_z
    #   lanes [2H:3H] -> i_n            (h contribution zeroed)
    #   lanes [3H:4H] -> h_n            (x contribution zeroed)
    w_gates = jnp.concatenate([
        jnp.concatenate([wir, wiz, win, zeros], axis=1),
        jnp.concatenate([whr, whz, zeros, whn], axis=1),
    ], axis=0)

    b_gates = jnp.concatenate([
        b_ih[0:H] + b_hh[0:H],          # r: biases pre-added on host
        b_ih[H:2 * H] + b_hh[H:2 * H],  # z: biases pre-added on host
        b_ih[2 * H:3 * H],              # i_n bias (kept split: n uses r*h_n)
        b_hh[2 * H:3 * H],              # h_n bias
    ])[None, :]

    return dict(
        emb=p["emb"].astype(f32),
        w_gates=w_gates.astype(f32),
        b_gates=b_gates.astype(f32),
        w_out=p["w_out"].T.astype(f32),
        b_out=p["b_out"][None, :].astype(f32),
    )


# ---------------------------------------------------------------------------
# Wrapper: whole greedy decode in ONE pallas_call, grid = (batch blocks,)
# ---------------------------------------------------------------------------
def decoder_rnn_fused_decode(tokens0, hidden0, params, num_steps, batch_block=None):
    """tokens0: (B,) int32 start tokens; hidden0: (1, B, H) initial GRU hidden.
    Runs `num_steps` greedy decode steps fused inside one kernel.
    Returns (logp_all (T,B,V), hid_all (T,B,H), final_hidden (1,B,H))."""
    kp = pack_params(params)
    NUM_EMB, E = params["emb"].shape
    H = params["w_hh"].shape[1]
    V = params["w_out"].shape[0]
    # constraints implied by the module's forward (+ greedy feedback into the table)
    assert E == H and V == NUM_EMB

    B = tokens0.shape[0]
    if batch_block is None:
        # Keep >=2 batch blocks when possible so both v7x TensorCores get work;
        # otherwise collapse to one block (best on single-TC v5e / v6e).
        half = B // 2
        batch_block = half if (B >= 16 and B % 2 == 0 and half % 8 == 0) else B
    BB = min(batch_block, B)
    assert B % BB == 0
    T = num_steps
    PACK = 128
    assert V + H <= PACK

    tok0_onehot = jax.nn.one_hot(tokens0, NUM_EMB, dtype=jnp.float32)   # (B, NUM_EMB)
    hid0 = hidden0[0]                                                   # (B, H)

    weight_names = ["emb", "w_gates", "b_gates", "w_out", "b_out"]
    weights = [kp[nm] for nm in weight_names]

    def batch_spec(shape):   # per-batch-block inputs (tok0 one-hot, hid0)
        return pl.BlockSpec((BB, shape[1]), lambda i: (i, 0))

    def const_spec(shape):   # weights: same block every grid point -> resident
        return pl.BlockSpec(shape, lambda i: (0,) * len(shape))

    grid_spec = pltpu.PrefetchScalarGridSpec(
        num_scalar_prefetch=0,
        grid=(B // BB,),
        in_specs=[batch_spec(tok0_onehot.shape), batch_spec(hid0.shape)]
                 + [const_spec(w.shape) for w in weights],
        out_specs=pl.BlockSpec((T, BB, PACK), lambda i: (0, i, 0)),
    )

    # advisory scheduling hint for XLA around the custom call
    flops = int(2 * T * B * (NUM_EMB * H + (2 * H) * (4 * H) + H * V))
    transcendentals = int(T * B * (3 * H + V))
    bytes_accessed = int(4 * (tok0_onehot.size + hid0.size
                              + sum(int(w.size) for w in weights)
                              + T * B * PACK))

    packed = pl.pallas_call(
        decoder_rnn_kernel,
        grid_spec=grid_spec,
        out_shape=jax.ShapeDtypeStruct((T, B, PACK), jnp.float32),
        compiler_params=pltpu.CompilerParams(
            dimension_semantics=("parallel",)),
        cost_estimate=pl.CostEstimate(flops=flops,
                                      transcendentals=transcendentals,
                                      bytes_accessed=bytes_accessed),
    )(tok0_onehot, hid0, *weights)

    logp_all = packed[:, :, :V]
    hid_all = packed[:, :, V:V + H]
    return logp_all, hid_all, hid_all[-1][None]


def decoder_rnn_forward(token, hidden, params):
    """Exact DecoderRNN.forward semantics: token (1,) int32, hidden (1,1,H)
    -> (log_probs (1,V), new_hidden (1,1,H)). Batch is padded to 8 sublanes so
    matmuls never run at M=1 (rows are identical; row 0 is returned)."""
    PAD = 8
    H = hidden.shape[-1]
    tok_p = jnp.broadcast_to(token.astype(jnp.int32), (PAD,))
    hid_p = jnp.broadcast_to(hidden, (1, PAD, H))
    logp_all, _, h_fin = decoder_rnn_fused_decode(tok_p, hid_p, params,
                                                  num_steps=1, batch_block=PAD)
    return logp_all[0, 0:1], h_fin[:, 0:1]


# ---------------------------------------------------------------------------
# Params + pure-JAX reference (PyTorch layouts / semantics)
# ---------------------------------------------------------------------------
def init_params(key, hidden_size, output_size):
    H, V = hidden_size, output_size
    ks = jax.random.split(key, 7)
    sh = 1.0 / np.sqrt(H)
    u = lambda k, shape: jax.random.uniform(k, shape, jnp.float32, -sh, sh)
    return {
        # nn.Embedding(hidden_size, output_size): table (hidden_size, output_size)
        "emb":   jax.random.normal(ks[0], (H, V), jnp.float32),
        # nn.GRU(hidden_size, hidden_size)
        "w_ih":  u(ks[1], (3 * H, H)),
        "w_hh":  u(ks[2], (3 * H, H)),
        "b_ih":  u(ks[3], (3 * H,)),
        "b_hh":  u(ks[4], (3 * H,)),
        # nn.Linear(hidden_size, output_size)
        "w_out": u(ks[5], (V, H)),
        "b_out": u(ks[6], (V,)),
    }


def reference_decode(tokens0, hidden0, p, num_steps):
    H = p["w_hh"].shape[1]
    h = hidden0[0]
    tok = tokens0
    logps, hids = [], []
    for _ in range(num_steps):
        emb = p["emb"][tok]                              # (B, H)
        x = jax.nn.relu(emb)
        gi = x @ p["w_ih"].T + p["b_ih"]
        gh = h @ p["w_hh"].T + p["b_hh"]
        r = jax.nn.sigmoid(gi[:, :H] + gh[:, :H])
        z = jax.nn.sigmoid(gi[:, H:2 * H] + gh[:, H:2 * H])
        n = jnp.tanh(gi[:, 2 * H:] + r * gh[:, 2 * H:])
        h = (1.0 - z) * n + z * h
        logits = h @ p["w_out"].T + p["b_out"]
        logp = jax.nn.log_softmax(logits, axis=1)
        logps.append(logp)
        hids.append(h)
        tok = jnp.argmax(logp, axis=1).astype(jnp.int32)
    return jnp.stack(logps), jnp.stack(hids)


if __name__ == "__main__":
    HIDDEN = 32
    OUTPUT = 32   # module's forward requires output_size == hidden_size
    B, T = 16, 8  # 16 sequences (2 batch blocks of 8 sublanes), 8 fused decode steps

    key = jax.random.PRNGKey(0)
    kp, kh, kt = jax.random.split(key, 3)
    params = init_params(kp, HIDDEN, OUTPUT)

    tokens0 = jax.random.randint(kt, (B,), 0, HIDDEN, dtype=jnp.int32)
    hidden0 = jax.random.normal(kh, (1, B, HIDDEN), jnp.float32)

    logp_all, hid_all, h_fin = decoder_rnn_fused_decode(tokens0, hidden0, params, T)
    jax.block_until_ready((logp_all, hid_all, h_fin))

    ref_logp, ref_hid = reference_decode(tokens0, hidden0, params, T)
    np.testing.assert_allclose(np.asarray(logp_all), np.asarray(ref_logp), rtol=1e-4, atol=1e-5)
    np.testing.assert_allclose(np.asarray(hid_all), np.asarray(ref_hid), rtol=1e-4, atol=1e-5)

    # exact single-step module forward (batch=1), like DecoderRNN.forward(token, hidden)
    tok1 = jnp.array([3], dtype=jnp.int32)
    hid1 = jax.random.normal(jax.random.PRNGKey(1), (1, 1, HIDDEN), jnp.float32)
    logp1, h1 = decoder_rnn_forward(tok1, hid1, params)
    jax.block_until_ready((logp1, h1))
    r_logp, r_hid = reference_decode(tok1, hid1, params, 1)
    np.testing.assert_allclose(np.asarray(logp1), np.asarray(r_logp[0]), rtol=1e-4, atol=1e-5)
    np.testing.assert_allclose(np.asarray(h1[0]), np.asarray(r_hid[0]), rtol=1e-4, atol=1e-5)

    print("KERNEL_OK")
</pallas_src>

<mosaic_0001>
module attributes {stable_mosaic.version = 11 : i64} {
  func.func @decoder_rnn_kernel(%arg0: i32, %arg1: memref<8x32xf32, #tpu.memory_space<vmem>>, %arg2: memref<8x32xf32, #tpu.memory_space<vmem>>, %arg3: memref<32x32xf32, #tpu.memory_space<vmem>>, %arg4: memref<64x128xf32, #tpu.memory_space<vmem>>, %arg5: memref<1x128xf32, #tpu.memory_space<vmem>>, %arg6: memref<32x32xf32, #tpu.memory_space<vmem>>, %arg7: memref<1x32xf32, #tpu.memory_space<vmem>>, %arg8: memref<8x8x128xf32, #tpu.memory_space<vmem>>) attributes {dimension_semantics = [#tpu.dimension_semantics<parallel>], iteration_bounds = array<i64: 2>, scalar_prefetch = 0 : i64, scratch_operands = 0 : i64, tpu.core_type = #tpu.core_type<tc>, window_params = [{transform_indices = @transform_0, window_bounds = array<i64: 8, 32>}, {transform_indices = @transform_1, window_bounds = array<i64: 8, 32>}, {pipeline_mode = #tpu.pipeline_mode<synchronous>, transform_indices = @transform_2, window_bounds = array<i64: 32, 32>}, {pipeline_mode = #tpu.pipeline_mode<synchronous>, transform_indices = @transform_3, window_bounds = array<i64: 64, 128>}, {pipeline_mode = #tpu.pipeline_mode<synchronous>, transform_indices = @transform_4, window_bounds = array<i64: 1, 128>}, {pipeline_mode = #tpu.pipeline_mode<synchronous>, transform_indices = @transform_5, window_bounds = array<i64: 32, 32>}, {pipeline_mode = #tpu.pipeline_mode<synchronous>, transform_indices = @transform_6, window_bounds = array<i64: 1, 32>}, {transform_indices = @transform_7, window_bounds = array<i64: 8, 8, 128>}]} {
    %c0 = arith.constant 0 : index
    %c0_0 = arith.constant 0 : index
    %0 = vector.load %arg3[%c0, %c0_0] : memref<32x32xf32, #tpu.memory_space<vmem>>, vector<32x32xf32>
    %c0_1 = arith.constant 0 : index
    %c0_2 = arith.constant 0 : index
    %1 = vector.load %arg4[%c0_1, %c0_2] : memref<64x128xf32, #tpu.memory_space<vmem>>, vector<64x128xf32>
    %c0_3 = arith.constant 0 : index
    %c0_4 = arith.constant 0 : index
    %2 = vector.load %arg5[%c0_3, %c0_4] : memref<1x128xf32, #tpu.memory_space<vmem>>, vector<1x128xf32>
    %c0_5 = arith.constant 0 : index
    %c0_6 = arith.constant 0 : index
    %3 = vector.load %arg6[%c0_5, %c0_6] : memref<32x32xf32, #tpu.memory_space<vmem>>, vector<32x32xf32>
    %c0_7 = arith.constant 0 : index
    %c0_8 = arith.constant 0 : index
    %4 = vector.load %arg7[%c0_7, %c0_8] : memref<1x32xf32, #tpu.memory_space<vmem>>, vector<1x32xf32>
    %5 = tpu.iota {dimensions = array<i32: 1>} : vector<8x32xi32>
    %cst = arith.constant 0.000000e+00 : f32
    %6 = vector.broadcast %cst : f32 to vector<8x64xf32>
    %c0_9 = arith.constant 0 : index
    %c0_10 = arith.constant 0 : index
    %7 = vector.load %arg2[%c0_9, %c0_10] : memref<8x32xf32, #tpu.memory_space<vmem>>, vector<8x32xf32>
    %c0_11 = arith.constant 0 : index
    %c0_12 = arith.constant 0 : index
    %8 = vector.load %arg1[%c0_11, %c0_12] : memref<8x32xf32, #tpu.memory_space<vmem>>, vector<8x32xf32>
    %c0_i32 = arith.constant 0 : i32
    %cst_13 = arith.constant dense<0.000000e+00> : vector<8x32xf32>
    %9 = tpu.matmul %8, %0, %cst_13 {dimension_numbers = #tpu.dot_dimension_numbers<[1], [0], [0], [1], [0, 0, 1, 1], [], []>} : vector<8x32xf32>, vector<32x32xf32>, vector<8x32xf32> -> vector<8x32xf32>
    %cst_14 = arith.constant 0.000000e+00 : f32
    %10 = vector.broadcast %cst_14 : f32 to vector<8x32xf32>
    %11 = arith.maximumf %9, %10 : vector<8x32xf32>
    %12 = tpu.concatenate %11, %7 in 1 : vector<8x32xf32>, vector<8x32xf32> -> vector<8x64xf32>
    %cst_15 = arith.constant dense<0.000000e+00> : vector<8x128xf32>
    %13 = tpu.matmul %12, %1, %cst_15 {dimension_numbers = #tpu.dot_dimension_numbers<[1], [0], [0], [1], [0, 0, 1, 1], [], []>} : vector<8x64xf32>, vector<64x128xf32>, vector<8x128xf32> -> vector<8x128xf32>
    %14 = vector.broadcast %2 : vector<1x128xf32> to vector<8x128xf32>
    %15 = arith.addf %13, %14 : vector<8x128xf32>
    %16 = vector.extract_strided_slice %15 {offsets = [0, 0], sizes = [8, 32], strides = [1, 1]} : vector<8x128xf32> to vector<8x32xf32>
    %17 = arith.negf %16 : vector<8x32xf32>
    %18 = math.exp %17 : vector<8x32xf32>
    %cst_16 = arith.constant 1.000000e+00 : f32
    %19 = vector.broadcast %cst_16 : f32 to vector<8x32xf32>
    %20 = arith.addf %19, %18 : vector<8x32xf32>
    %21 = arith.divf %19, %20 : vector<8x32xf32>
    %22 = vector.extract_strided_slice %15 {offsets = [0, 32], sizes = [8, 32], strides = [1, 1]} : vector<8x128xf32> to vector<8x32xf32>
    %23 = arith.negf %22 : vector<8x32xf32>
    %24 = math.exp %23 : vector<8x32xf32>
    %cst_17 = arith.constant 1.000000e+00 : f32
    %25 = vector.broadcast %cst_17 : f32 to vector<8x32xf32>
    %26 = arith.addf %25, %24 : vector<8x32xf32>
    %27 = arith.divf %25, %26 : vector<8x32xf32>
    %28 = vector.extract_strided_slice %15 {offsets = [0, 64], sizes = [8, 32], strides = [1, 1]} : vector<8x128xf32> to vector<8x32xf32>
    %29 = vector.extract_strided_slice %15 {offsets = [0, 96], sizes = [8, 32], strides = [1, 1]} : vector<8x128xf32> to vector<8x32xf32>
    %30 = arith.mulf %21, %29 : vector<8x32xf32>
    %31 = arith.addf %28, %30 : vector<8x32xf32>
    %32 = math.tanh %31 : vector<8x32xf32>
    %cst_18 = arith.constant 1.000000e+00 : f32
    %33 = vector.broadcast %cst_18 : f32 to vector<8x32xf32>
    %34 = arith.subf %33, %27 : vector<8x32xf32>
    %35 = arith.mulf %34, %32 : vector<8x32xf32>
    %36 = arith.mulf %27, %7 : vector<8x32xf32>
    %37 = arith.addf %35, %36 : vector<8x32xf32>
    %cst_19 = arith.constant dense<0.000000e+00> : vector<8x32xf32>
    %38 = tpu.matmul %37, %3, %cst_19 {dimension_numbers = #tpu.dot_dimension_numbers<[1], [0], [0], [1], [0, 0, 1, 1], [], []>} : vector<8x32xf32>, vector<32x32xf32>, vector<8x32xf32> -> vector<8x32xf32>
    %39 = vector.broadcast %4 : vector<1x32xf32> to vector<8x32xf32>
    %40 = arith.addf %38, %39 : vector<8x32xf32>
    %cst_20 = arith.constant dense<0xFF800000> : vector<8xf32>
    %41 = vector.multi_reduction <maximumf>, %40, %cst_20 [1] : vector<8x32xf32> to vector<8xf32>
    %42 = vector.shape_cast %41 : vector<8xf32> to vector<8x1xf32>
    %43 = vector.broadcast %42 : vector<8x1xf32> to vector<8x32xf32>
    %44 = arith.subf %40, %43 : vector<8x32xf32>
    %45 = math.exp %44 : vector<8x32xf32>
    %cst_21 = arith.constant dense<0.000000e+00> : vector<8xf32>
    %46 = vector.multi_reduction <add>, %45, %cst_21 [1] : vector<8x32xf32> to vector<8xf32>
    %47 = vector.shape_cast %46 : vector<8xf32> to vector<8x1xf32>
    %48 = math.log %47 : vector<8x1xf32>
    %49 = vector.broadcast %48 : vector<8x1xf32> to vector<8x32xf32>
    %50 = arith.subf %44, %49 : vector<8x32xf32>
    %51 = vector.broadcast %42 : vector<8x1xf32> to vector<8x32xf32>
    %52 = arith.cmpf oge, %40, %51 : vector<8x32xf32>
    %c32_i32 = arith.constant 32 : i32
    %53 = vector.broadcast %c32_i32 : i32 to vector<8x32xi32>
    %54 = arith.select %52, %5, %53 : vector<8x32xi1>, vector<8x32xi32>
    %cst_22 = arith.constant dense<2147483647> : vector<8xi32>
    %55 = vector.multi_reduction <minsi>, %54, %cst_22 [1] : vector<8x32xi32> to vector<8xi32>
    %56 = vector.shape_cast %55 : vector<8xi32> to vector<8x1xi32>
    %57 = vector.broadcast %56 : vector<8x1xi32> to vector<8x32xi32>
    %58 = arith.cmpi eq, %5, %57 : vector<8x32xi32>
    %59 = arith.extui %58 : vector<8x32xi1> to vector<8x32xi32>
    %60 = arith.sitofp %59 : vector<8x32xi32> to vector<8x32xf32>
    %61 = tpu.concatenate %50, %37, %6 in 1 : vector<8x32xf32>, vector<8x32xf32>, vector<8x64xf32> -> vector<8x128xf32>
    %62 = arith.index_cast %c0_i32 : i32 to index
    %c0_23 = arith.constant 0 : index
    %c0_24 = arith.constant 0 : index
    %63 = vector.load %arg8[%62, %c0_23, %c0_24] : memref<8x8x128xf32, #tpu.memory_space<vmem>>, vector<1x8x128xf32>
    %64 = vector.shape_cast %63 : vector<1x8x128xf32> to vector<8x128xf32>
    %65 = vector.shape_cast %61 : vector<8x128xf32> to vector<1x8x128xf32>
    tpu.vector_store %arg8[%62, %c0_23, %c0_24], %65 {strides = array<i32>} : memref<8x8x128xf32, #tpu.memory_space<vmem>>, vector<1x8x128xf32>,
    %c1_i32 = arith.constant 1 : i32
    %cst_25 = arith.constant dense<0.000000e+00> : vector<8x32xf32>
    %66 = tpu.matmul %60, %0, %cst_25 {dimension_numbers = #tpu.dot_dimension_numbers<[1], [0], [0], [1], [0, 0, 1, 1], [], []>} : vector<8x32xf32>, vector<32x32xf32>, vector<8x32xf32> -> vector<8x32xf32>
    %cst_26 = arith.constant 0.000000e+00 : f32
    %67 = vector.broadcast %cst_26 : f32 to vector<8x32xf32>
    %68 = arith.maximumf %66, %67 : vector<8x32xf32>
    %69 = tpu.concatenate %68, %37 in 1 : vector<8x32xf32>, vector<8x32xf32> -> vector<8x64xf32>
    %cst_27 = arith.constant dense<0.000000e+00> : vector<8x128xf32>
    %70 = tpu.matmul %69, %1, %cst_27 {dimension_numbers = #tpu.dot_dimension_numbers<[1], [0], [0], [1], [0, 0, 1, 1], [], []>} : vector<8x64xf32>, vector<64x128xf32>, vector<8x128xf32> -> vector<8x128xf32>
    %71 = vector.broadcast %2 : vector<1x128xf32> to vector<8x128xf32>
    %72 = arith.addf %70, %71 : vector<8x128xf32>
    %73 = vector.extract_strided_slice %72 {offsets = [0, 0], sizes = [8, 32], strides = [1, 1]} : vector<8x128xf32> to vector<8x32xf32>
    %74 = arith.negf %73 : vector<8x32xf32>
    %75 = math.exp %74 : vector<8x32xf32>
    %cst_28 = arith.constant 1.000000e+00 : f32
    %76 = vector.broadcast %cst_28 : f32 to vector<8x32xf32>
    %77 = arith.addf %76, %75 : vector<8x32xf32>
    %78 = arith.divf %76, %77 : vector<8x32xf32>
    %79 = vector.extract_strided_slice %72 {offsets = [0, 32], sizes = [8, 32], strides = [1, 1]} : vector<8x128xf32> to vector<8x32xf32>
    %80 = arith.negf %79 : vector<8x32xf32>
    %81 = math.exp %80 : vector<8x32xf32>
    %cst_29 = arith.constant 1.000000e+00 : f32
    %82 = vector.broadcast %cst_29 : f32 to vector<8x32xf32>
    %83 = arith.addf %82, %81 : vector<8x32xf32>
    %84 = arith.divf %82, %83 : vector<8x32xf32>
    %85 = vector.extract_strided_slice %72 {offsets = [0, 64], sizes = [8, 32], strides = [1, 1]} : vector<8x128xf32> to vector<8x32xf32>
    %86 = vector.extract_strided_slice %72 {offsets = [0, 96], sizes = [8, 32], strides = [1, 1]} : vector<8x128xf32> to vector<8x32xf32>
    %87 = arith.mulf %78, %86 : vector<8x32xf32>
    %88 = arith.addf %85, %87 : vector<8x32xf32>
    %89 = math.tanh %88 : vector<8x32xf32>
    %cst_30 = arith.constant 1.000000e+00 : f32
    %90 = vector.broadcast %cst_30 : f32 to vector<8x32xf32>
    %91 = arith.subf %90, %84 : vector<8x32xf32>
    %92 = arith.mulf %91, %89 : vector<8x32xf32>
    %93 = arith.mulf %84, %37 : vector<8x32xf32>
    %94 = arith.addf %92, %93 : vector<8x32xf32>
    %cst_31 = arith.constant dense<0.000000e+00> : vector<8x32xf32>
    %95 = tpu.matmul %94, %3, %cst_31 {dimension_numbers = #tpu.dot_dimension_numbers<[1], [0], [0], [1], [0, 0, 1, 1], [], []>} : vector<8x32xf32>, vector<32x32xf32>, vector<8x32xf32> -> vector<8x32xf32>
    %96 = vector.broadcast %4 : vector<1x32xf32> to vector<8x32xf32>
    %97 = arith.addf %95, %96 : vector<8x32xf32>
    %cst_32 = arith.constant dense<0xFF800000> : vector<8xf32>
    %98 = vector.multi_reduction <maximumf>, %97, %cst_32 [1] : vector<8x32xf32> to vector<8xf32>
    %99 = vector.shape_cast %98 : vector<8xf32> to vector<8x1xf32>
    %100 = vector.broadcast %99 : vector<8x1xf32> to vector<8x32xf32>
    %101 = arith.subf %97, %100 : vector<8x32xf32>
    %102 = math.exp %101 : vector<8x32xf32>
    %cst_33 = arith.constant dense<0.000000e+00> : vector<8xf32>
    %103 = vector.multi_reduction <add>, %102, %cst_33 [1] : vector<8x32xf32> to vector<8xf32>
    %104 = vector.shape_cast %103 : vector<8xf32> to vector<8x1xf32>
    %105 = math.log %104 : vector<8x1xf32>
    %106 = vector.broadcast %105 : vector<8x1xf32> to vector<8x32xf32>
    %107 = arith.subf %101, %106 : vector<8x32xf32>
    %108 = vector.broadcast %99 : vector<8x1xf32> to vector<8x32xf32>
    %109 = arith.cmpf oge, %97, %108 : vector<8x32xf32>
    %c32_i32_34 = arith.constant 32 : i32
    %110 = vector.broadcast %c32_i32_34 : i32 to vector<8x32xi32>
    %111 = arith.select %109, %5, %110 : vector<8x32xi1>, vector<8x32xi32>
    %cst_35 = arith.constant dense<2147483647> : vector<8xi32>
    %112 = vector.multi_reduction <minsi>, %111, %cst_35 [1] : vector<8x32xi32> to vector<8xi32>
    %113 = vector.shape_cast %112 : vector<8xi32> to vector<8x1xi32>
    %114 = vector.broadcast %113 : vector<8x1xi32> to vector<8x32xi32>
    %115 = arith.cmpi eq, %5, %114 : vector<8x32xi32>
    %116 = arith.extui %115 : vector<8x32xi1> to vector<8x32xi32>
    %117 = arith.sitofp %116 : vector<8x32xi32> to vector<8x32xf32>
    %118 = tpu.concatenate %107, %94, %6 in 1 : vector<8x32xf32>, vector<8x32xf32>, vector<8x64xf32> -> vector<8x128xf32>
    %119 = arith.index_cast %c1_i32 : i32 to index
    %c0_36 = arith.constant 0 : index
    %c0_37 = arith.constant 0 : index
    %120 = vector.load %arg8[%119, %c0_36, %c0_37] : memref<8x8x128xf32, #tpu.memory_space<vmem>>, vector<1x8x128xf32>
    %121 = vector.shape_cast %120 : vector<1x8x128xf32> to vector<8x128xf32>
    %122 = vector.shape_cast %118 : vector<8x128xf32> to vector<1x8x128xf32>
    tpu.vector_store %arg8[%119, %c0_36, %c0_37], %122 {strides = array<i32>} : memref<8x8x128xf32, #tpu.memory_space<vmem>>, vector<1x8x128xf32>,
    %c2_i32 = arith.constant 2 : i32
    %cst_38 = arith.constant dense<0.000000e+00> : vector<8x32xf32>
    %123 = tpu.matmul %117, %0, %cst_38 {dimension_numbers = #tpu.dot_dimension_numbers<[1], [0], [0], [1], [0, 0, 1, 1], [], []>} : vector<8x32xf32>, vector<32x32xf32>, vector<8x32xf32> -> vector<8x32xf32>
    %cst_39 = arith.constant 0.000000e+00 : f32
    %124 = vector.broadcast %cst_39 : f32 to vector<8x32xf32>
    %125 = arith.maximumf %123, %124 : vector<8x32xf32>
    %126 = tpu.concatenate %125, %94 in 1 : vector<8x32xf32>, vector<8x32xf32> -> vector<8x64xf32>
    %cst_40 = arith.constant dense<0.000000e+00> : vector<8x128xf32>
    %127 = tpu.matmul %126, %1, %cst_40 {dimension_numbers = #tpu.dot_dimension_numbers<[1], [0], [0], [1], [0, 0, 1, 1], [], []>} : vector<8x64xf32>, vector<64x128xf32>, vector<8x128xf32> -> vector<8x128xf32>
    %128 = vector.broadcast %2 : vector<1x128xf32> to vector<8x128xf32>
    %129 = arith.addf %127, %128 : vector<8x128xf32>
    %130 = vector.extract_strided_slice %129 {offsets = [0, 0], sizes = [8, 32], strides = [1, 1]} : vector<8x128xf32> to vector<8x32xf32>
    %131 = arith.negf %130 : vector<8x32xf32>
    %132 = math.exp %131 : vector<8x32xf32>
    %cst_41 = arith.constant 1.000000e+00 : f32
    %133 = vector.broadcast %cst_41 : f32 to vector<8x32xf32>
    %134 = arith.addf %133, %132 : vector<8x32xf32>
    %135 = arith.divf %133, %134 : vector<8x32xf32>
    %136 = vector.extract_strided_slice %129 {offsets = [0, 32], sizes = [8, 32], strides = [1, 1]} : vector<8x128xf32> to vector<8x32xf32>
    %137 = arith.negf %136 : vector<8x32xf32>
    %138 = math.exp %137 : vector<8x32xf32>
    %cst_42 = arith.constant 1.000000e+00 : f32
    %139 = vector.broadcast %cst_42 : f32 to vector<8x32xf32>
    %140 = arith.addf %139, %138 : vector<8x32xf32>
    %141 = arith.divf %139, %140 : vector<8x32xf32>
    %142 = vector.extract_strided_slice %129 {offsets = [0, 64], sizes = [8, 32], strides = [1, 1]} : vector<8x128xf32> to vector<8x32xf32>
    %143 = vector.extract_strided_slice %129 {offsets = [0, 96], sizes = [8, 32], strides = [1, 1]} : vector<8x128xf32> to vector<8x32xf32>
    %144 = arith.mulf %135, %143 : vector<8x32xf32>
    %145 = arith.addf %142, %144 : vector<8x32xf32>
    %146 = math.tanh %145 : vector<8x32xf32>
    %cst_43 = arith.constant 1.000000e+00 : f32
    %147 = vector.broadcast %cst_43 : f32 to vector<8x32xf32>
    %148 = arith.subf %147, %141 : vector<8x32xf32>
    %149 = arith.mulf %148, %146 : vector<8x32xf32>
    %150 = arith.mulf %141, %94 : vector<8x32xf32>
    %151 = arith.addf %149, %150 : vector<8x32xf32>
    %cst_44 = arith.constant dense<0.000000e+00> : vector<8x32xf32>
    %152 = tpu.matmul %151, %3, %cst_44 {dimension_numbers = #tpu.dot_dimension_numbers<[1], [0], [0], [1], [0, 0, 1, 1], [], []>} : vector<8x32xf32>, vector<32x32xf32>, vector<8x32xf32> -> vector<8x32xf32>
    %153 = vector.broadcast %4 : vector<1x32xf32> to vector<8x32xf32>
    %154 = arith.addf %152, %153 : vector<8x32xf32>
    %cst_45 = arith.constant dense<0xFF800000> : vector<8xf32>
    %155 = vector.multi_reduction <maximumf>, %154, %cst_45 [1] : vector<8x32xf32> to vector<8xf32>
    %156 = vector.shape_cast %155 : vector<8xf32> to vector<8x1xf32>
    %157 = vector.broadcast %156 : vector<8x1xf32> to vector<8x32xf32>
    %158 = arith.subf %154, %157 : vector<8x32xf32>
    %159 = math.exp %158 : vector<8x32xf32>
    %cst_46 = arith.constant dense<0.000000e+00> : vector<8xf32>
    %160 = vector.multi_reduction <add>, %159, %cst_46 [1] : vector<8x32xf32> to vector<8xf32>
    %161 = vector.shape_cast %160 : vector<8xf32> to vector<8x1xf32>
    %162 = math.log %161 : vector<8x1xf32>
    %163 = vector.broadcast %162 : vector<8x1xf32> to vector<8x32xf32>
    %164 = arith.subf %158, %163 : vector<8x32xf32>
    %165 = vector.broadcast %156 : vector<8x1xf32> to vector<8x32xf32>
    %166 = arith.cmpf oge, %154, %165 : vector<8x32xf32>
    %c32_i32_47 = arith.constant 32 : i32
    %167 = vector.broadcast %c32_i32_47 : i32 to vector<8x32xi32>
    %168 = arith.select %166, %5, %167 : vector<8x32xi1>, vector<8x32xi32>
    %cst_48 = arith.constant dense<2147483647> : vector<8xi32>
    %169 = vector.multi_reduction <minsi>, %168, %cst_48 [1] : vector<8x32xi32> to vector<8xi32>
    %170 = vector.shape_cast %169 : vector<8xi32> to vector<8x1xi32>
    %171 = vector.broadcast %170 : vector<8x1xi32> to vector<8x32xi32>
    %172 = arith.cmpi eq, %5, %171 : vector<8x32xi32>
    %173 = arith.extui %172 : vector<8x32xi1> to vector<8x32xi32>
    %174 = arith.sitofp %173 : vector<8x32xi32> to vector<8x32xf32>
    %175 = tpu.concatenate %164, %151, %6 in 1 : vector<8x32xf32>, vector<8x32xf32>, vector<8x64xf32> -> vector<8x128xf32>
    %176 = arith.index_cast %c2_i32 : i32 to index
    %c0_49 = arith.constant 0 : index
    %c0_50 = arith.constant 0 : index
    %177 = vector.load %arg8[%176, %c0_49, %c0_50] : memref<8x8x128xf32, #tpu.memory_space<vmem>>, vector<1x8x128xf32>
    %178 = vector.shape_cast %177 : vector<1x8x128xf32> to vector<8x128xf32>
    %179 = vector.shape_cast %175 : vector<8x128xf32> to vector<1x8x128xf32>
    tpu.vector_store %arg8[%176, %c0_49, %c0_50], %179 {strides = array<i32>} : memref<8x8x128xf32, #tpu.memory_space<vmem>>, vector<1x8x128xf32>,
    %c3_i32 = arith.constant 3 : i32
    %cst_51 = arith.constant dense<0.000000e+00> : vector<8x32xf32>
    %180 = tpu.matmul %174, %0, %cst_51 {dimension_numbers = #tpu.dot_dimension_numbers<[1], [0], [0], [1], [0, 0, 1, 1], [], []>} : vector<8x32xf32>, vector<32x32xf32>, vector<8x32xf32> -> vector<8x32xf32>
    %cst_52 = arith.constant 0.000000e+00 : f32
    %181 = vector.broadcast %cst_52 : f32 to vector<8x32xf32>
    %182 = arith.maximumf %180, %181 : vector<8x32xf32>
    %183 = tpu.concatenate %182, %151 in 1 : vector<8x32xf32>, vector<8x32xf32> -> vector<8x64xf32>
    %cst_53 = arith.constant dense<0.000000e+00> : vector<8x128xf32>
    %184 = tpu.matmul %183, %1, %cst_53 {dimension_numbers = #tpu.dot_dimension_numbers<[1], [0], [0], [1], [0, 0, 1, 1], [], []>} : vector<8x64xf32>, vector<64x128xf32>, vector<8x128xf32> -> vector<8x128xf32>
    %185 = vector.broadcast %2 : vector<1x128xf32> to vector<8x128xf32>
    %186 = arith.addf %184, %185 : vector<8x128xf32>
    %187 = vector.extract_strided_slice %186 {offsets = [0, 0], sizes = [8, 32], strides = [1, 1]} : vector<8x128xf32> to vector<8x32xf32>
    %188 = arith.negf %187 : vector<8x32xf32>
    %189 = math.exp %188 : vector<8x32xf32>
    %cst_54 = arith.constant 1.000000e+00 : f32
    %190 = vector.broadcast %cst_54 : f32 to vector<8x32xf32>
    %191 = arith.addf %190, %189 : vector<8x32xf32>
    %192 = arith.divf %190, %191 : vector<8x32xf32>
    %193 = vector.extract_strided_slice %186 {offsets = [0, 32], sizes = [8, 32], strides = [1, 1]} : vector<8x128xf32> to vector<8x32xf32>
    %194 = arith.negf %193 : vector<8x32xf32>
    %195 = math.exp %194 : vector<8x32xf32>
    %cst_55 = arith.constant 1.000000e+00 : f32
    %196 = vector.broadcast %cst_55 : f32 to vector<8x32xf32>
    %197 = arith.addf %196, %195 : vector<8x32xf32>
    %198 = arith.divf %196, %197 : vector<8x32xf32>
    %199 = vector.extract_strided_slice %186 {offsets = [0, 64], sizes = [8, 32], strides = [1, 1]} : vector<8x128xf32> to vector<8x32xf32>
    %200 = vector.extract_strided_slice %186 {offsets = [0, 96], sizes = [8, 32], strides = [1, 1]} : vector<8x128xf32> to vector<8x32xf32>
    %201 = arith.mulf %192, %200 : vector<8x32xf32>
    %202 = arith.addf %199, %201 : vector<8x32xf32>
    %203 = math.tanh %202 : vector<8x32xf32>
    %cst_56 = arith.constant 1.000000e+00 : f32
    %204 = vector.broadcast %cst_56 : f32 to vector<8x32xf32>
    %205 = arith.subf %204, %198 : vector<8x32xf32>
    %206 = arith.mulf %205, %203 : vector<8x32xf32>
    %207 = arith.mulf %198, %151 : vector<8x32xf32>
    %208 = arith.addf %206, %207 : vector<8x32xf32>
    %cst_57 = arith.constant dense<0.000000e+00> : vector<8x32xf32>
    %209 = tpu.matmul %208, %3, %cst_57 {dimension_numbers = #tpu.dot_dimension_numbers<[1], [0], [0], [1], [0, 0, 1, 1], [], []>} : vector<8x32xf32>, vector<32x32xf32>, vector<8x32xf32> -> vector<8x32xf32>
    %210 = vector.broadcast %4 : vector<1x32xf32> to vector<8x32xf32>
    %211 = arith.addf %209, %210 : vector<8x32xf32>
    %cst_58 = arith.constant dense<0xFF800000> : vector<8xf32>
    %212 = vector.multi_reduction <maximumf>, %211, %cst_58 [1] : vector<8x32xf32> to vector<8xf32>
    %213 = vector.shape_cast %212 : vector<8xf32> to vector<8x1xf32>
    %214 = vector.broadcast %213 : vector<8x1xf32> to vector<8x32xf32>
    %215 = arith.subf %211, %214 : vector<8x32xf32>
    %216 = math.exp %215 : vector<8x32xf32>
    %cst_59 = arith.constant dense<0.000000e+00> : vector<8xf32>
    %217 = vector.multi_reduction <add>, %216, %cst_59 [1] : vector<8x32xf32> to vector<8xf32>
    %218 = vector.shape_cast %217 : vector<8xf32> to vector<8x1xf32>
    %219 = math.log %218 : vector<8x1xf32>
    %220 = vector.broadcast %219 : vector<8x1xf32> to vector<8x32xf32>
    %221 = arith.subf %215, %220 : vector<8x32xf32>
    %222 = vector.broadcast %213 : vector<8x1xf32> to vector<8x32xf32>
    %223 = arith.cmpf oge, %211, %222 : vector<8x32xf32>
    %c32_i32_60 = arith.constant 32 : i32
    %224 = vector.broadcast %c32_i32_60 : i32 to vector<8x32xi32>
    %225 = arith.select %223, %5, %224 : vector<8x32xi1>, vector<8x32xi32>
    %cst_61 = arith.constant dense<2147483647> : vector<8xi32>
    %226 = vector.multi_reduction <minsi>, %225, %cst_61 [1] : vector<8x32xi32> to vector<8xi32>
    %227 = vector.shape_cast %226 : vector<8xi32> to vector<8x1xi32>
    %228 = vector.broadcast %227 : vector<8x1xi32> to vector<8x32xi32>
    %229 = arith.cmpi eq, %5, %228 : vector<8x32xi32>
    %230 = arith.extui %229 : vector<8x32xi1> to vector<8x32xi32>
    %231 = arith.sitofp %230 : vector<8x32xi32> to vector<8x32xf32>
    %232 = tpu.concatenate %221, %208, %6 in 1 : vector<8x32xf32>, vector<8x32xf32>, vector<8x64xf32> -> vector<8x128xf32>
    %233 = arith.index_cast %c3_i32 : i32 to index
    %c0_62 = arith.constant 0 : index
    %c0_63 = arith.constant 0 : index
    %234 = vector.load %arg8[%233, %c0_62, %c0_63] : memref<8x8x128xf32, #tpu.memory_space<vmem>>, vector<1x8x128xf32>
    %235 = vector.shape_cast %234 : vector<1x8x128xf32> to vector<8x128xf32>
    %236 = vector.shape_cast %232 : vector<8x128xf32> to vector<1x8x128xf32>
    tpu.vector_store %arg8[%233, %c0_62, %c0_63], %236 {strides = array<i32>} : memref<8x8x128xf32, #tpu.memory_space<vmem>>, vector<1x8x128xf32>,
    %c4_i32 = arith.constant 4 : i32
    %cst_64 = arith.constant dense<0.000000e+00> : vector<8x32xf32>
    %237 = tpu.matmul %231, %0, %cst_64 {dimension_numbers = #tpu.dot_dimension_numbers<[1], [0], [0], [1], [0, 0, 1, 1], [], []>} : vector<8x32xf32>, vector<32x32xf32>, vector<8x32xf32> -> vector<8x32xf32>
    %cst_65 = arith.constant 0.000000e+00 : f32
    %238 = vector.broadcast %cst_65 : f32 to vector<8x32xf32>
    %239 = arith.maximumf %237, %238 : vector<8x32xf32>
    %240 = tpu.concatenate %239, %208 in 1 : vector<8x32xf32>, vector<8x32xf32> -> vector<8x64xf32>
    %cst_66 = arith.constant dense<0.000000e+00> : vector<8x128xf32>
    %241 = tpu.matmul %240, %1, %cst_66 {dimension_numbers = #tpu.dot_dimension_numbers<[1], [0], [0], [1], [0, 0, 1, 1], [], []>} : vector<8x64xf32>, vector<64x128xf32>, vector<8x128xf32> -> vector<8x128xf32>
    %242 = vector.broadcast %2 : vector<1x128xf32> to vector<8x128xf32>
    %243 = arith.addf %241, %242 : vector<8x128xf32>
    %244 = vector.extract_strided_slice %243 {offsets = [0, 0], sizes = [8, 32], strides = [1, 1]} : vector<8x128xf32> to vector<8x32xf32>
    %245 = arith.negf %244 : vector<8x32xf32>
    %246 = math.exp %245 : vector<8x32xf32>
    %cst_67 = arith.constant 1.000000e+00 : f32
    %247 = vector.broadcast %cst_67 : f32 to vector<8x32xf32>
    %248 = arith.addf %247, %246 : vector<8x32xf32>
    %249 = arith.divf %247, %248 : vector<8x32xf32>
    %250 = vector.extract_strided_slice %243 {offsets = [0, 32], sizes = [8, 32], strides = [1, 1]} : vector<8x128xf32> to vector<8x32xf32>
    %251 = arith.negf %250 : vector<8x32xf32>
    %252 = math.exp %251 : vector<8x32xf32>
    %cst_68 = arith.constant 1.000000e+00 : f32
    %253 = vector.broadcast %cst_68 : f32 to vector<8x32xf32>
    %254 = arith.addf %253, %252 : vector<8x32xf32>
    %255 = arith.divf %253, %254 : vector<8x32xf32>
    %256 = vector.extract_strided_slice %243 {offsets = [0, 64], sizes = [8, 32], strides = [1, 1]} : vector<8x128xf32> to vector<8x32xf32>
    %257 = vector.extract_strided_slice %243 {offsets = [0, 96], sizes = [8, 32], strides = [1, 1]} : vector<8x128xf32> to vector<8x32xf32>
    %258 = arith.mulf %249, %257 : vector<8x32xf32>
    %259 = arith.addf %256, %258 : vector<8x32xf32>
    %260 = math.tanh %259 : vector<8x32xf32>
    %cst_69 = arith.constant 1.000000e+00 : f32
    %261 = vector.broadcast %cst_69 : f32 to vector<8x32xf32>
    %262 = arith.subf %261, %255 : vector<8x32xf32>
    %263 = arith.mulf %262, %260 : vector<8x32xf32>
    %264 = arith.mulf %255, %208 : vector<8x32xf32>
    %265 = arith.addf %263, %264 : vector<8x32xf32>
    %cst_70 = arith.constant dense<0.000000e+00> : vector<8x32xf32>
    %266 = tpu.matmul %265, %3, %cst_70 {dimension_numbers = #tpu.dot_dimension_numbers<[1], [0], [0], [1], [0, 0, 1, 1], [], []>} : vector<8x32xf32>, vector<32x32xf32>, vector<8x32xf32> -> vector<8x32xf32>
    %267 = vector.broadcast %4 : vector<1x32xf32> to vector<8x32xf32>
    %268 = arith.addf %266, %267 : vector<8x32xf32>
    %cst_71 = arith.constant dense<0xFF800000> : vector<8xf32>
    %269 = vector.multi_reduction <maximumf>, %268, %cst_71 [1] : vector<8x32xf32> to vector<8xf32>
    %270 = vector.shape_cast %269 : vector<8xf32> to vector<8x1xf32>
    %271 = vector.broadcast %270 : vector<8x1xf32> to vector<8x32xf32>
    %272 = arith.subf %268, %271 : vector<8x32xf32>
    %273 = math.exp %272 : vector<8x32xf32>
    %cst_72 = arith.constant dense<0.000000e+00> : vector<8xf32>
    %274 = vector.multi_reduction <add>, %273, %cst_72 [1] : vector<8x32xf32> to vector<8xf32>
    %275 = vector.shape_cast %274 : vector<8xf32> to vector<8x1xf32>
    %276 = math.log %275 : vector<8x1xf32>
    %277 = vector.broadcast %276 : vector<8x1xf32> to vector<8x32xf32>
    %278 = arith.subf %272, %277 : vector<8x32xf32>
    %279 = vector.broadcast %270 : vector<8x1xf32> to vector<8x32xf32>
    %280 = arith.cmpf oge, %268, %279 : vector<8x32xf32>
    %c32_i32_73 = arith.constant 32 : i32
    %281 = vector.broadcast %c32_i32_73 : i32 to vector<8x32xi32>
    %282 = arith.select %280, %5, %281 : vector<8x32xi1>, vector<8x32xi32>
    %cst_74 = arith.constant dense<2147483647> : vector<8xi32>
    %283 = vector.multi_reduction <minsi>, %282, %cst_74 [1] : vector<8x32xi32> to vector<8xi32>
    %284 = vector.shape_cast %283 : vector<8xi32> to vector<8x1xi32>
    %285 = vector.broadcast %284 : vector<8x1xi32> to vector<8x32xi32>
    %286 = arith.cmpi eq, %5, %285 : vector<8x32xi32>
    %287 = arith.extui %286 : vector<8x32xi1> to vector<8x32xi32>
    %288 = arith.sitofp %287 : vector<8x32xi32> to vector<8x32xf32>
    %289 = tpu.concatenate %278, %265, %6 in 1 : vector<8x32xf32>, vector<8x32xf32>, vector<8x64xf32> -> vector<8x128xf32>
    %290 = arith.index_cast %c4_i32 : i32 to index
    %c0_75 = arith.constant 0 : index
    %c0_76 = arith.constant 0 : index
    %291 = vector.load %arg8[%290, %c0_75, %c0_76] : memref<8x8x128xf32, #tpu.memory_space<vmem>>, vector<1x8x128xf32>
    %292 = vector.shape_cast %291 : vector<1x8x128xf32> to vector<8x128xf32>
    %293 = vector.shape_cast %289 : vector<8x128xf32> to vector<1x8x128xf32>
    tpu.vector_store %arg8[%290, %c0_75, %c0_76], %293 {strides = array<i32>} : memref<8x8x128xf32, #tpu.memory_space<vmem>>, vector<1x8x128xf32>,
    %c5_i32 = arith.constant 5 : i32
    %cst_77 = arith.constant dense<0.000000e+00> : vector<8x32xf32>
    %294 = tpu.matmul %288, %0, %cst_77 {dimension_numbers = #tpu.dot_dimension_numbers<[1], [0], [0], [1], [0, 0, 1, 1], [], []>} : vector<8x32xf32>, vector<32x32xf32>, vector<8x32xf32> -> vector<8x32xf32>
    %cst_78 = arith.constant 0.000000e+00 : f32
    %295 = vector.broadcast %cst_78 : f32 to vector<8x32xf32>
    %296 = arith.maximumf %294, %295 : vector<8x32xf32>
    %297 = tpu.concatenate %296, %265 in 1 : vector<8x32xf32>, vector<8x32xf32> -> vector<8x64xf32>
    %cst_79 = arith.constant dense<0.000000e+00> : vector<8x128xf32>
    %298 = tpu.matmul %297, %1, %cst_79 {dimension_numbers = #tpu.dot_dimension_numbers<[1], [0], [0], [1], [0, 0, 1, 1], [], []>} : vector<8x64xf32>, vector<64x128xf32>, vector<8x128xf32> -> vector<8x128xf32>
    %299 = vector.broadcast %2 : vector<1x128xf32> to vector<8x128xf32>
    %300 = arith.addf %298, %299 : vector<8x128xf32>
    %301 = vector.extract_strided_slice %300 {offsets = [0, 0], sizes = [8, 32], strides = [1, 1]} : vector<8x128xf32> to vector<8x32xf32>
    %302 = arith.negf %301 : vector<8x32xf32>
    %303 = math.exp %302 : vector<8x32xf32>
    %cst_80 = arith.constant 1.000000e+00 : f32
    %304 = vector.broadcast %cst_80 : f32 to vector<8x32xf32>
    %305 = arith.addf %304, %303 : vector<8x32xf32>
    %306 = arith.divf %304, %305 : vector<8x32xf32>
    %307 = vector.extract_strided_slice %300 {offsets = [0, 32], sizes = [8, 32], strides = [1, 1]} : vector<8x128xf32> to vector<8x32xf32>
    %308 = arith.negf %307 : vector<8x32xf32>
    %309 = math.exp %308 : vector<8x32xf32>
    %cst_81 = arith.constant 1.000000e+00 : f32
    %310 = vector.broadcast %cst_81 : f32 to vector<8x32xf32>
    %311 = arith.addf %310, %309 : vector<8x32xf32>
    %312 = arith.divf %310, %311 : vector<8x32xf32>
    %313 = vector.extract_strided_slice %300 {offsets = [0, 64], sizes = [8, 32], strides = [1, 1]} : vector<8x128xf32> to vector<8x32xf32>
    %314 = vector.extract_strided_slice %300 {offsets = [0, 96], sizes = [8, 32], strides = [1, 1]} : vector<8x128xf32> to vector<8x32xf32>
    %315 = arith.mulf %306, %314 : vector<8x32xf32>
    %316 = arith.addf %313, %315 : vector<8x32xf32>
    %317 = math.tanh %316 : vector<8x32xf32>
    %cst_82 = arith.constant 1.000000e+00 : f32
    %318 = vector.broadcast %cst_82 : f32 to vector<8x32xf32>
    %319 = arith.subf %318, %312 : vector<8x32xf32>
    %320 = arith.mulf %319, %317 : vector<8x32xf32>
    %321 = arith.mulf %312, %265 : vector<8x32xf32>
    %322 = arith.addf %320, %321 : vector<8x32xf32>
    %cst_83 = arith.constant dense<0.000000e+00> : vector<8x32xf32>
    %323 = tpu.matmul %322, %3, %cst_83 {dimension_numbers = #tpu.dot_dimension_numbers<[1], [0], [0], [1], [0, 0, 1, 1], [], []>} : vector<8x32xf32>, vector<32x32xf32>, vector<8x32xf32> -> vector<8x32xf32>
    %324 = vector.broadcast %4 : vector<1x32xf32> to vector<8x32xf32>
    %325 = arith.addf %323, %324 : vector<8x32xf32>
    %cst_84 = arith.constant dense<0xFF800000> : vector<8xf32>
    %326 = vector.multi_reduction <maximumf>, %325, %cst_84 [1] : vector<8x32xf32> to vector<8xf32>
    %327 = vector.shape_cast %326 : vector<8xf32> to vector<8x1xf32>
    %328 = vector.broadcast %327 : vector<8x1xf32> to vector<8x32xf32>
    %329 = arith.subf %325, %328 : vector<8x32xf32>
    %330 = math.exp %329 : vector<8x32xf32>
    %cst_85 = arith.constant dense<0.000000e+00> : vector<8xf32>
    %331 = vector.multi_reduction <add>, %330, %cst_85 [1] : vector<8x32xf32> to vector<8xf32>
    %332 = vector.shape_cast %331 : vector<8xf32> to vector<8x1xf32>
    %333 = math.log %332 : vector<8x1xf32>
    %334 = vector.broadcast %333 : vector<8x1xf32> to vector<8x32xf32>
    %335 = arith.subf %329, %334 : vector<8x32xf32>
    %336 = vector.broadcast %327 : vector<8x1xf32> to vector<8x32xf32>
    %337 = arith.cmpf oge, %325, %336 : vector<8x32xf32>
    %c32_i32_86 = arith.constant 32 : i32
    %338 = vector.broadcast %c32_i32_86 : i32 to vector<8x32xi32>
    %339 = arith.select %337, %5, %338 : vector<8x32xi1>, vector<8x32xi32>
    %cst_87 = arith.constant dense<2147483647> : vector<8xi32>
    %340 = vector.multi_reduction <minsi>, %339, %cst_87 [1] : vector<8x32xi32> to vector<8xi32>
    %341 = vector.shape_cast %340 : vector<8xi32> to vector<8x1xi32>
    %342 = vector.broadcast %341 : vector<8x1xi32> to vector<8x32xi32>
    %343 = arith.cmpi eq, %5, %342 : vector<8x32xi32>
    %344 = arith.extui %343 : vector<8x32xi1> to vector<8x32xi32>
    %345 = arith.sitofp %344 : vector<8x32xi32> to vector<8x32xf32>
    %346 = tpu.concatenate %335, %322, %6 in 1 : vector<8x32xf32>, vector<8x32xf32>, vector<8x64xf32> -> vector<8x128xf32>
    %347 = arith.index_cast %c5_i32 : i32 to index
    %c0_88 = arith.constant 0 : index
    %c0_89 = arith.constant 0 : index
    %348 = vector.load %arg8[%347, %c0_88, %c0_89] : memref<8x8x128xf32, #tpu.memory_space<vmem>>, vector<1x8x128xf32>
    %349 = vector.shape_cast %348 : vector<1x8x128xf32> to vector<8x128xf32>
    %350 = vector.shape_cast %346 : vector<8x128xf32> to vector<1x8x128xf32>
    tpu.vector_store %arg8[%347, %c0_88, %c0_89], %350 {strides = array<i32>} : memref<8x8x128xf32, #tpu.memory_space<vmem>>, vector<1x8x128xf32>,
    %c6_i32 = arith.constant 6 : i32
    %cst_90 = arith.constant dense<0.000000e+00> : vector<8x32xf32>
    %351 = tpu.matmul %345, %0, %cst_90 {dimension_numbers = #tpu.dot_dimension_numbers<[1], [0], [0], [1], [0, 0, 1, 1], [], []>} : vector<8x32xf32>, vector<32x32xf32>, vector<8x32xf32> -> vector<8x32xf32>
    %cst_91 = arith.constant 0.000000e+00 : f32
    %352 = vector.broadcast %cst_91 : f32 to vector<8x32xf32>
    %353 = arith.maximumf %351, %352 : vector<8x32xf32>
    %354 = tpu.concatenate %353, %322 in 1 : vector<8x32xf32>, vector<8x32xf32> -> vector<8x64xf32>
    %cst_92 = arith.constant dense<0.000000e+00> : vector<8x128xf32>
    %355 = tpu.matmul %354, %1, %cst_92 {dimension_numbers = #tpu.dot_dimension_numbers<[1], [0], [0], [1], [0, 0, 1, 1], [], []>} : vector<8x64xf32>, vector<64x128xf32>, vector<8x128xf32> -> vector<8x128xf32>
    %356 = vector.broadcast %2 : vector<1x128xf32> to vector<8x128xf32>
    %357 = arith.addf %355, %356 : vector<8x128xf32>
    %358 = vector.extract_strided_slice %357 {offsets = [0, 0], sizes = [8, 32], strides = [1, 1]} : vector<8x128xf32> to vector<8x32xf32>
    %359 = arith.negf %358 : vector<8x32xf32>
    %360 = math.exp %359 : vector<8x32xf32>
    %cst_93 = arith.constant 1.000000e+00 : f32
    %361 = vector.broadcast %cst_93 : f32 to vector<8x32xf32>
    %362 = arith.addf %361, %360 : vector<8x32xf32>
    %363 = arith.divf %361, %362 : vector<8x32xf32>
    %364 = vector.extract_strided_slice %357 {offsets = [0, 32], sizes = [8, 32], strides = [1, 1]} : vector<8x128xf32> to vector<8x32xf32>
    %365 = arith.negf %364 : vector<8x32xf32>
    %366 = math.exp %365 : vector<8x32xf32>
    %cst_94 = arith.constant 1.000000e+00 : f32
    %367 = vector.broadcast %cst_94 : f32 to vector<8x32xf32>
    %368 = arith.addf %367, %366 : vector<8x32xf32>
    %369 = arith.divf %367, %368 : vector<8x32xf32>
    %370 = vector.extract_strided_slice %357 {offsets = [0, 64], sizes = [8, 32], strides = [1, 1]} : vector<8x128xf32> to vector<8x32xf32>
    %371 = vector.extract_strided_slice %357 {offsets = [0, 96], sizes = [8, 32], strides = [1, 1]} : vector<8x128xf32> to vector<8x32xf32>
    %372 = arith.mulf %363, %371 : vector<8x32xf32>
    %373 = arith.addf %370, %372 : vector<8x32xf32>
    %374 = math.tanh %373 : vector<8x32xf32>
    %cst_95 = arith.constant 1.000000e+00 : f32
    %375 = vector.broadcast %cst_95 : f32 to vector<8x32xf32>
    %376 = arith.subf %375, %369 : vector<8x32xf32>
    %377 = arith.mulf %376, %374 : vector<8x32xf32>
    %378 = arith.mulf %369, %322 : vector<8x32xf32>
    %379 = arith.addf %377, %378 : vector<8x32xf32>
    %cst_96 = arith.constant dense<0.000000e+00> : vector<8x32xf32>
    %380 = tpu.matmul %379, %3, %cst_96 {dimension_numbers = #tpu.dot_dimension_numbers<[1], [0], [0], [1], [0, 0, 1, 1], [], []>} : vector<8x32xf32>, vector<32x32xf32>, vector<8x32xf32> -> vector<8x32xf32>
    %381 = vector.broadcast %4 : vector<1x32xf32> to vector<8x32xf32>
    %382 = arith.addf %380, %381 : vector<8x32xf32>
    %cst_97 = arith.constant dense<0xFF800000> : vector<8xf32>
    %383 = vector.multi_reduction <maximumf>, %382, %cst_97 [1] : vector<8x32xf32> to vector<8xf32>
    %384 = vector.shape_cast %383 : vector<8xf32> to vector<8x1xf32>
    %385 = vector.broadcast %384 : vector<8x1xf32> to vector<8x32xf32>
    %386 = arith.subf %382, %385 : vector<8x32xf32>
    %387 = math.exp %386 : vector<8x32xf32>
    %cst_98 = arith.constant dense<0.000000e+00> : vector<8xf32>
    %388 = vector.multi_reduction <add>, %387, %cst_98 [1] : vector<8x32xf32> to vector<8xf32>
    %389 = vector.shape_cast %388 : vector<8xf32> to vector<8x1xf32>
    %390 = math.log %389 : vector<8x1xf32>
    %391 = vector.broadcast %390 : vector<8x1xf32> to vector<8x32xf32>
    %392 = arith.subf %386, %391 : vector<8x32xf32>
    %393 = vector.broadcast %384 : vector<8x1xf32> to vector<8x32xf32>
    %394 = arith.cmpf oge, %382, %393 : vector<8x32xf32>
    %c32_i32_99 = arith.constant 32 : i32
    %395 = vector.broadcast %c32_i32_99 : i32 to vector<8x32xi32>
    %396 = arith.select %394, %5, %395 : vector<8x32xi1>, vector<8x32xi32>
    %cst_100 = arith.constant dense<2147483647> : vector<8xi32>
    %397 = vector.multi_reduction <minsi>, %396, %cst_100 [1] : vector<8x32xi32> to vector<8xi32>
    %398 = vector.shape_cast %397 : vector<8xi32> to vector<8x1xi32>
    %399 = vector.broadcast %398 : vector<8x1xi32> to vector<8x32xi32>
    %400 = arith.cmpi eq, %5, %399 : vector<8x32xi32>
    %401 = arith.extui %400 : vector<8x32xi1> to vector<8x32xi32>
    %402 = arith.sitofp %401 : vector<8x32xi32> to vector<8x32xf32>
    %403 = tpu.concatenate %392, %379, %6 in 1 : vector<8x32xf32>, vector<8x32xf32>, vector<8x64xf32> -> vector<8x128xf32>
    %404 = arith.index_cast %c6_i32 : i32 to index
    %c0_101 = arith.constant 0 : index
    %c0_102 = arith.constant 0 : index
    %405 = vector.load %arg8[%404, %c0_101, %c0_102] : memref<8x8x128xf32, #tpu.memory_space<vmem>>, vector<1x8x128xf32>
    %406 = vector.shape_cast %405 : vector<1x8x128xf32> to vector<8x128xf32>
    %407 = vector.shape_cast %403 : vector<8x128xf32> to vector<1x8x128xf32>
    tpu.vector_store %arg8[%404, %c0_101, %c0_102], %407 {strides = array<i32>} : memref<8x8x128xf32, #tpu.memory_space<vmem>>, vector<1x8x128xf32>,
    %c7_i32 = arith.constant 7 : i32
    %cst_103 = arith.constant dense<0.000000e+00> : vector<8x32xf32>
    %408 = tpu.matmul %402, %0, %cst_103 {dimension_numbers = #tpu.dot_dimension_numbers<[1], [0], [0], [1], [0, 0, 1, 1], [], []>} : vector<8x32xf32>, vector<32x32xf32>, vector<8x32xf32> -> vector<8x32xf32>
    %cst_104 = arith.constant 0.000000e+00 : f32
    %409 = vector.broadcast %cst_104 : f32 to vector<8x32xf32>
    %410 = arith.maximumf %408, %409 : vector<8x32xf32>
    %411 = tpu.concatenate %410, %379 in 1 : vector<8x32xf32>, vector<8x32xf32> -> vector<8x64xf32>
    %cst_105 = arith.constant dense<0.000000e+00> : vector<8x128xf32>
    %412 = tpu.matmul %411, %1, %cst_105 {dimension_numbers = #tpu.dot_dimension_numbers<[1], [0], [0], [1], [0, 0, 1, 1], [], []>} : vector<8x64xf32>, vector<64x128xf32>, vector<8x128xf32> -> vector<8x128xf32>
    %413 = vector.broadcast %2 : vector<1x128xf32> to vector<8x128xf32>
    %414 = arith.addf %412, %413 : vector<8x128xf32>
    %415 = vector.extract_strided_slice %414 {offsets = [0, 0], sizes = [8, 32], strides = [1, 1]} : vector<8x128xf32> to vector<8x32xf32>
    %416 = arith.negf %415 : vector<8x32xf32>
    %417 = math.exp %416 : vector<8x32xf32>
    %cst_106 = arith.constant 1.000000e+00 : f32
    %418 = vector.broadcast %cst_106 : f32 to vector<8x32xf32>
    %419 = arith.addf %418, %417 : vector<8x32xf32>
    %420 = arith.divf %418, %419 : vector<8x32xf32>
    %421 = vector.extract_strided_slice %414 {offsets = [0, 32], sizes = [8, 32], strides = [1, 1]} : vector<8x128xf32> to vector<8x32xf32>
    %422 = arith.negf %421 : vector<8x32xf32>
    %423 = math.exp %422 : vector<8x32xf32>
    %cst_107 = arith.constant 1.000000e+00 : f32
    %424 = vector.broadcast %cst_107 : f32 to vector<8x32xf32>
    %425 = arith.addf %424, %423 : vector<8x32xf32>
    %426 = arith.divf %424, %425 : vector<8x32xf32>
    %427 = vector.extract_strided_slice %414 {offsets = [0, 64], sizes = [8, 32], strides = [1, 1]} : vector<8x128xf32> to vector<8x32xf32>
    %428 = vector.extract_strided_slice %414 {offsets = [0, 96], sizes = [8, 32], strides = [1, 1]} : vector<8x128xf32> to vector<8x32xf32>
    %429 = arith.mulf %420, %428 : vector<8x32xf32>
    %430 = arith.addf %427, %429 : vector<8x32xf32>
    %431 = math.tanh %430 : vector<8x32xf32>
    %cst_108 = arith.constant 1.000000e+00 : f32
    %432 = vector.broadcast %cst_108 : f32 to vector<8x32xf32>
    %433 = arith.subf %432, %426 : vector<8x32xf32>
    %434 = arith.mulf %433, %431 : vector<8x32xf32>
    %435 = arith.mulf %426, %379 : vector<8x32xf32>
    %436 = arith.addf %434, %435 : vector<8x32xf32>
    %cst_109 = arith.constant dense<0.000000e+00> : vector<8x32xf32>
    %437 = tpu.matmul %436, %3, %cst_109 {dimension_numbers = #tpu.dot_dimension_numbers<[1], [0], [0], [1], [0, 0, 1, 1], [], []>} : vector<8x32xf32>, vector<32x32xf32>, vector<8x32xf32> -> vector<8x32xf32>
    %438 = vector.broadcast %4 : vector<1x32xf32> to vector<8x32xf32>
    %439 = arith.addf %437, %438 : vector<8x32xf32>
    %cst_110 = arith.constant dense<0xFF800000> : vector<8xf32>
    %440 = vector.multi_reduction <maximumf>, %439, %cst_110 [1] : vector<8x32xf32> to vector<8xf32>
    %441 = vector.shape_cast %440 : vector<8xf32> to vector<8x1xf32>
    %442 = vector.broadcast %441 : vector<8x1xf32> to vector<8x32xf32>
    %443 = arith.subf %439, %442 : vector<8x32xf32>
    %444 = math.exp %443 : vector<8x32xf32>
    %cst_111 = arith.constant dense<0.000000e+00> : vector<8xf32>
    %445 = vector.multi_reduction <add>, %444, %cst_111 [1] : vector<8x32xf32> to vector<8xf32>
    %446 = vector.shape_cast %445 : vector<8xf32> to vector<8x1xf32>
    %447 = math.log %446 : vector<8x1xf32>
    %448 = vector.broadcast %447 : vector<8x1xf32> to vector<8x32xf32>
    %449 = arith.subf %443, %448 : vector<8x32xf32>
    %450 = vector.broadcast %441 : vector<8x1xf32> to vector<8x32xf32>
    %451 = arith.cmpf oge, %439, %450 : vector<8x32xf32>
    %c32_i32_112 = arith.constant 32 : i32
    %452 = vector.broadcast %c32_i32_112 : i32 to vector<8x32xi32>
    %453 = arith.select %451, %5, %452 : vector<8x32xi1>, vector<8x32xi32>
    %cst_113 = arith.constant dense<2147483647> : vector<8xi32>
    %454 = vector.multi_reduction <minsi>, %453, %cst_113 [1] : vector<8x32xi32> to vector<8xi32>
    %455 = vector.shape_cast %454 : vector<8xi32> to vector<8x1xi32>
    %456 = vector.broadcast %455 : vector<8x1xi32> to vector<8x32xi32>
    %457 = arith.cmpi eq, %5, %456 : vector<8x32xi32>
    %458 = arith.extui %457 : vector<8x32xi1> to vector<8x32xi32>
    %459 = arith.sitofp %458 : vector<8x32xi32> to vector<8x32xf32>
    %460 = tpu.concatenate %449, %436, %6 in 1 : vector<8x32xf32>, vector<8x32xf32>, vector<8x64xf32> -> vector<8x128xf32>
    %461 = arith.index_cast %c7_i32 : i32 to index
    %c0_114 = arith.constant 0 : index
    %c0_115 = arith.constant 0 : index
    %462 = vector.load %arg8[%461, %c0_114, %c0_115] : memref<8x8x128xf32, #tpu.memory_space<vmem>>, vector<1x8x128xf32>
    %463 = vector.shape_cast %462 : vector<1x8x128xf32> to vector<8x128xf32>
    %464 = vector.shape_cast %460 : vector<8x128xf32> to vector<1x8x128xf32>
    tpu.vector_store %arg8[%461, %c0_114, %c0_115], %464 {strides = array<i32>} : memref<8x8x128xf32, #tpu.memory_space<vmem>>, vector<1x8x128xf32>,
    %c8_i32 = arith.constant 8 : i32
    return
  }
  func.func @transform_0(%arg0: i32) -> (i32, i32) {
    %c0_i32 = arith.constant 0 : i32
    %c0_i32_0 = arith.constant 0 : i32
    return %arg0, %c0_i32 : i32, i32
  }
  func.func @transform_1(%arg0: i32) -> (i32, i32) {
    %c0_i32 = arith.constant 0 : i32
    %c0_i32_0 = arith.constant 0 : i32
    return %arg0, %c0_i32 : i32, i32
  }
  func.func @transform_2(%arg0: i32) -> (i32, i32) {
    %c0_i32 = arith.constant 0 : i32
    %c0_i32_0 = arith.constant 0 : i32
    %c0_i32_1 = arith.constant 0 : i32
    return %c0_i32, %c0_i32_0 : i32, i32
  }
  func.func @transform_3(%arg0: i32) -> (i32, i32) {
    %c0_i32 = arith.constant 0 : i32
    %c0_i32_0 = arith.constant 0 : i32
    %c0_i32_1 = arith.constant 0 : i32
    return %c0_i32, %c0_i32_0 : i32, i32
  }
  func.func @transform_4(%arg0: i32) -> (i32, i32) {
    %c0_i32 = arith.constant 0 : i32
    %c0_i32_0 = arith.constant 0 : i32
    %c0_i32_1 = arith.constant 0 : i32
    return %c0_i32, %c0_i32_0 : i32, i32
  }
  func.func @transform_5(%arg0: i32) -> (i32, i32) {
    %c0_i32 = arith.constant 0 : i32
    %c0_i32_0 = arith.constant 0 : i32
    %c0_i32_1 = arith.constant 0 : i32
    return %c0_i32, %c0_i32_0 : i32, i32
  }
  func.func @transform_6(%arg0: i32) -> (i32, i32) {
    %c0_i32 = arith.constant 0 : i32
    %c0_i32_0 = arith.constant 0 : i32
    %c0_i32_1 = arith.constant 0 : i32
    return %c0_i32, %c0_i32_0 : i32, i32
  }
  func.func @transform_7(%arg0: i32) -> (i32, i32, i32) {
    %c0_i32 = arith.constant 0 : i32
    %c0_i32_0 = arith.constant 0 : i32
    %c0_i32_1 = arith.constant 0 : i32
    return %c0_i32, %arg0, %c0_i32_0 : i32, i32, i32
  }
}

</mosaic_0001>

<llo_original>
// kernel: tpu_custom_call.1
$region0: #{tpu_custom_call.1}
  #allocation0 [shape = 'u32[]', space=smem, size = 0x4, offset = 0x4, fixed_abs, tag = 'smem constant byte address 0x4 - core index']
  #allocation1 [shape = 'u32[144,128]{1,0:T(1,128)}', space=vmem, size = 0x12000, scoped, tag = 'internal scratch']
  %s0 = inlined_call_operand.hbm [shape: f32[16,32], index: 0, kind: input, shape index: {}]
  %s1 = inlined_call_operand.hbm [shape: f32[16,32], index: 1, kind: input, shape index: {}]
  %s2 = inlined_call_operand.hbm [shape: f32[32,32], index: 2, kind: input, shape index: {}]
  %s3 = inlined_call_operand.hbm [shape: f32[64,128], index: 3, kind: input, shape index: {}]
  %s4 = inlined_call_operand.vmem [shape: f32[1,128], index: 4, kind: input, shape index: {}]
  %s5 = inlined_call_operand.hbm [shape: f32[32,32], index: 5, kind: input, shape index: {}]
  %s6 = inlined_call_operand.vmem [shape: f32[1,32], index: 6, kind: input, shape index: {}]
  %s7 = inlined_call_operand.hbm [shape: f32[8,16,128], index: 7, kind: output, shape index: {}]
  %s8 = sld [smem:[#allocation0]]
  $region81: #{tpu_custom_call.1} parent=0
    _
  %s10 = ssub.s32 1, %s8
  %s11 = scalar_select 0, %s10, %s8
  $region1: #{tpu_custom_call.1} parent=0
    #allocation2 [shape = 'u8[8192]{0}', space=vmem, size = 0x2000, scoped, tag = 'input window, operand 0']
    #allocation3 [shape = 's32[2]{0}', space=sflag, size = 0x8, scoped, tag = 'scoped memory for tpu_custom_call.1']
    #allocation4 [shape = 's32[2]{0}', space=sflag, size = 0x8, scoped, tag = 'scoped memory for tpu_custom_call.1']
    #allocation5 [shape = 'u8[8192]{0}', space=vmem, size = 0x2000, scoped, tag = 'input window, operand 1']
    #allocation6 [shape = 's32[2]{0}', space=sflag, size = 0x8, scoped, tag = 'scoped memory for tpu_custom_call.1']
    #allocation7 [shape = 'u8[16384]{0}', space=vmem, size = 0x4000, scoped, tag = 'input window, operand 2, single buffered']
    #allocation8 [shape = 'u8[32768]{0}', space=vmem, size = 0x8000, scoped, tag = 'input window, operand 3, single buffered']
    #allocation9 [shape = 's32[1]{0}', space=sflag, size = 0x4, scoped, tag = 'scoped memory for tpu_custom_call.1']
    #allocation10 [shape = 'u8[16384]{0}', space=vmem, size = 0x4000, scoped, tag = 'input window, operand 5, single buffered']
    #allocation11 [shape = 'u8[65536]{0}', space=vmem, size = 0x10000, scoped, tag = 'output window, operand 0']
    %12 = vsyncpa [#allocation3], 0
    %s13 = scalar_lea.sflag [#allocation3], 1
    %14 = vsyncpa %s13, 0
    %15 = vsyncpa [#allocation6], 0
    %s16 = scalar_lea.sflag [#allocation6], 1
    %17 = vsyncpa %s16, 0
    %18 = vsyncpa [#allocation9], 0
    %19 = vsyncpa [#allocation4], 0
    %s20 = scalar_lea.sflag [#allocation4], 1
    %21 = vsyncpa %s20, 0
    loop: start=0, step=1, limit=4
    $region2: #{tpu_custom_call.1} parent=1 // loop_pre_header
      _
    $region3: #{tpu_custom_call.1} parent=1 // loop_header
      %s23 = sphi 0, %s27
      %p24 = scmp.ge.s32.totalorder %s23, 4
      %s33 = sphi 0, %s35
      %s36 = sphi 0, %s33
      %s37 = sphi 0, %s36
      %s53 = sphi 0, %s37
      %s59 = sphi 0, %s61
      %s62 = sphi 0, %s59
      %s63 = sphi 0, %s62
      %s79 = sphi 0, %s63
      %s83 = sphi 0, %s83
      %s85 = sphi 0, %s83
      %s86 = sphi 0, %s85
      %s100 = sphi 0, %s86
      %s104 = sphi 0, %s104
      %s106 = sphi 0, %s104
      %s107 = sphi 0, %s106
      %s121 = sphi 0, %s107
      %s125 = sphi 0, %s125
      %s127 = sphi 0, %s125
      %s128 = sphi 0, %s127
      %s142 = sphi 0, %s128
      %s146 = sphi 0, %s146
      %s148 = sphi 0, %s146
      %s149 = sphi 0, %s148
      %s163 = sphi 0, %s149
      %s167 = sphi 0, %s167
      %s169 = sphi 0, %s167
      %s170 = sphi 0, %s169
      %s184 = sphi 0, %s170
      %s190 = sphi 0, %s192
      %s193 = sphi 0, %s190
      %s194 = sphi 0, %s193
      %s210 = sphi 0, %s194
    $region4: #{tpu_custom_call.1} parent=1 // loop_header_branch
      %26 = sbr.rel (%p24) target = $region8
    $region5: #{tpu_custom_call.1} parent=1 // loop_body
      %s28 = ssub.s32 %s23, 1
      %s29 = ssub.s32 %s23, 2
      %s30 = sadd.s32 %s23, 1
      %s31 = ssub.s32 %s23, %s30
      %p32 = scmp.eq.s32.totalorder %s31, 0
      %s34 = sadd.s32 %s33, 1
      %s35 = scalar_select %p32, %s33, %s34
      %p38 = pneg %p32
      %p39 = scmp.eq.s32.totalorder %s23, 1
      %p40 = por %p38, %p39
      %p41 = scmp.ne.s32.totalorder %s33, %s36
      %p42 = scmp.eq.s32.totalorder %s23, 0
      %p43 = por %p41, %p42
      %p44 = scmp.ne.s32.totalorder %s33, %s36
      %p45 = scmp.eq.s32.totalorder %s28, 1
      %p46 = por %p44, %p45
      %p47 = scmp.ne.s32.totalorder %s36, %s37
      %p48 = scmp.eq.s32.totalorder %s28, 0
      %p49 = por %p47, %p48
      %p50 = scmp.ne.s32.totalorder %s36, %s37
      %p51 = scmp.eq.s32.totalorder %s29, 1
      %p52 = por %p50, %p51
      %p54 = scmp.ne.s32.totalorder %s37, %s53
      %p55 = scmp.eq.s32.totalorder %s29, 0
      %p56 = por %p54, %p55
      %s57 = ssub.s32 %s23, %s30
      %p58 = scmp.eq.s32.totalorder %s57, 0
      %s60 = sadd.s32 %s59, 1
      %s61 = scalar_select %p58, %s59, %s60
      %p64 = pneg %p58
      %p65 = scmp.eq.s32.totalorder %s23, 1
      %p66 = por %p64, %p65
      %p67 = scmp.ne.s32.totalorder %s59, %s62
      %p68 = scmp.eq.s32.totalorder %s23, 0
      %p69 = por %p67, %p68
      %p70 = scmp.ne.s32.totalorder %s59, %s62
      %p71 = scmp.eq.s32.totalorder %s28, 1
      %p72 = por %p70, %p71
      %p73 = scmp.ne.s32.totalorder %s62, %s63
      %p74 = scmp.eq.s32.totalorder %s28, 0
      %p75 = por %p73, %p74
      %p76 = scmp.ne.s32.totalorder %s62, %s63
      %p77 = scmp.eq.s32.totalorder %s29, 1
      %p78 = por %p76, %p77
      %p80 = scmp.ne.s32.totalorder %s63, %s79
      %p81 = scmp.eq.s32.totalorder %s29, 0
      %p82 = por %p80, %p81
      %s84 = sadd.s32 %s83, 1
      %p87 = scmp.eq.s32.totalorder %s23, 1
      %p88 = scmp.ne.s32.totalorder %s83, %s85
      %p89 = scmp.eq.s32.totalorder %s23, 0
      %p90 = por %p88, %p89
      %p91 = scmp.ne.s32.totalorder %s83, %s85
      %p92 = scmp.eq.s32.totalorder %s28, 1
      %p93 = por %p91, %p92
      %p94 = scmp.ne.s32.totalorder %s85, %s86
      %p95 = scmp.eq.s32.totalorder %s28, 0
      %p96 = por %p94, %p95
      %p97 = scmp.ne.s32.totalorder %s85, %s86
      %p98 = scmp.eq.s32.totalorder %s29, 1
      %p99 = por %p97, %p98
      %p101 = scmp.ne.s32.totalorder %s86, %s100
      %p102 = scmp.eq.s32.totalorder %s29, 0
      %p103 = por %p101, %p102
      %s105 = sadd.s32 %s104, 1
      %p108 = scmp.eq.s32.totalorder %s23, 1
      %p109 = scmp.ne.s32.totalorder %s104, %s106
      %p110 = scmp.eq.s32.totalorder %s23, 0
      %p111 = por %p109, %p110
      %p112 = scmp.ne.s32.totalorder %s104, %s106
      %p113 = scmp.eq.s32.totalorder %s28, 1
      %p114 = por %p112, %p113
      %p115 = scmp.ne.s32.totalorder %s106, %s107
      %p116 = scmp.eq.s32.totalorder %s28, 0
      %p117 = por %p115, %p116
      %p118 = scmp.ne.s32.totalorder %s106, %s107
      %p119 = scmp.eq.s32.totalorder %s29, 1
      %p120 = por %p118, %p119
      %p122 = scmp.ne.s32.totalorder %s107, %s121
      %p123 = scmp.eq.s32.totalorder %s29, 0
      %p124 = por %p122, %p123
      %s126 = sadd.s32 %s125, 1
      %p129 = scmp.eq.s32.totalorder %s23, 1
      %p130 = scmp.ne.s32.totalorder %s125, %s127
      %p131 = scmp.eq.s32.totalorder %s23, 0
      %p132 = por %p130, %p131
      %p133 = scmp.ne.s32.totalorder %s125, %s127
      %p134 = scmp.eq.s32.totalorder %s28, 1
      %p135 = por %p133, %p134
      %p136 = scmp.ne.s32.totalorder %s127, %s128
      %p137 = scmp.eq.s32.totalorder %s28, 0
      %p138 = por %p136, %p137
      %p139 = scmp.ne.s32.totalorder %s127, %s128
      %p140 = scmp.eq.s32.totalorder %s29, 1
      %p141 = por %p139, %p140
      %p143 = scmp.ne.s32.totalorder %s128, %s142
      %p144 = scmp.eq.s32.totalorder %s29, 0
      %p145 = por %p143, %p144
      %s147 = sadd.s32 %s146, 1
      %p150 = scmp.eq.s32.totalorder %s23, 1
      %p151 = scmp.ne.s32.totalorder %s146, %s148
      %p152 = scmp.eq.s32.totalorder %s23, 0
      %p153 = por %p151, %p152
      %p154 = scmp.ne.s32.totalorder %s146, %s148
      %p155 = scmp.eq.s32.totalorder %s28, 1
      %p156 = por %p154, %p155
      %p157 = scmp.ne.s32.totalorder %s148, %s149
      %p158 = scmp.eq.s32.totalorder %s28, 0
      %p159 = por %p157, %p158
      %p160 = scmp.ne.s32.totalorder %s148, %s149
      %p161 = scmp.eq.s32.totalorder %s29, 1
      %p162 = por %p160, %p161
      %p164 = scmp.ne.s32.totalorder %s149, %s163
      %p165 = scmp.eq.s32.totalorder %s29, 0
      %p166 = por %p164, %p165
      %s168 = sadd.s32 %s167, 1
      %p171 = scmp.eq.s32.totalorder %s23, 1
      %p172 = scmp.ne.s32.totalorder %s167, %s169
      %p173 = scmp.eq.s32.totalorder %s23, 0
      %p174 = por %p172, %p173
      %p175 = scmp.ne.s32.totalorder %s167, %s169
      %p176 = scmp.eq.s32.totalorder %s28, 1
      %p177 = por %p175, %p176
      %p178 = scmp.ne.s32.totalorder %s169, %s170
      %p179 = scmp.eq.s32.totalorder %s28, 0
      %p180 = por %p178, %p179
      %p181 = scmp.ne.s32.totalorder %s169, %s170
      %p182 = scmp.eq.s32.totalorder %s29, 1
      %p183 = por %p181, %p182
      %p185 = scmp.ne.s32.totalorder %s170, %s184
      %p186 = scmp.eq.s32.totalorder %s29, 0
      %p187 = por %p185, %p186
      %s188 = ssub.s32 %s23, %s30
      %p189 = scmp.eq.s32.totalorder %s188, 0
      %s191 = sadd.s32 %s190, 1
      %s192 = scalar_select %p189, %s190, %s191
      %p195 = pneg %p189
      %p196 = scmp.eq.s32.totalorder %s23, 1
      %p197 = por %p195, %p196
      %p198 = scmp.ne.s32.totalorder %s190, %s193
      %p199 = scmp.eq.s32.totalorder %s23, 0
      %p200 = por %p198, %p199
      %p201 = scmp.ne.s32.totalorder %s190, %s193
      %p202 = scmp.eq.s32.totalorder %s28, 1
      %p203 = por %p201, %p202
      %p204 = scmp.ne.s32.totalorder %s193, %s194
      %p205 = scmp.eq.s32.totalorder %s28, 0
      %p206 = por %p204, %p205
      %p207 = scmp.ne.s32.totalorder %s193, %s194
      %p208 = scmp.eq.s32.totalorder %s29, 1
      %p209 = por %p207, %p208
      %p211 = scmp.ne.s32.totalorder %s194, %s210
      %p212 = scmp.eq.s32.totalorder %s29, 0
      %p213 = por %p211, %p212
      %p214 = scmp.le.s32.totalorder 1, %s23
      %p215 = scmp.lt.s32.totalorder %s23, 3
      %p216 = pnand %p214, %p215
      %p217 = pneg %p216
      // Predicated region
      $region9: #{tpu_custom_call.1} parent=5 // pred_check
        _
      $region10: #{tpu_custom_call.1} parent=5 // pred_check_branch
        %219 = sbr.rel (%p216) target = $region12
      $region11: #{tpu_custom_call.1} parent=5 // pred_region
        %s220 = ssub.s32 %s23, 1
        // Predicated region
        $region13: #{tpu_custom_call.1} parent=11 // pred_check
          %p221 = pneg %p96
        $region14: #{tpu_custom_call.1} parent=11 // pred_check_branch
          %223 = sbr.rel (%p221) target = $region16
        $region15: #{tpu_custom_call.1} parent=11 // pred_region
          %s225 = ssub.s32 512, 512
          %226 = vsyncadd [#allocation6], %s225
          %s227 = sshll.u32 [#allocation7], 4
          %s228 = int_to_ptr.vmem [resolvable:$true] %s227
          %233 = dma.hbm_to_vmem [thread:$0]  %s2, 512, %s228, [#allocation6], 128, 128, 8
        $region16: #{tpu_custom_call.1} parent=11 // pred_fallthru
          _
        // Predicated region
        $region17: #{tpu_custom_call.1} parent=11 // pred_check
          %p234 = pneg %p117
        $region18: #{tpu_custom_call.1} parent=11 // pred_check_branch
          %236 = sbr.rel (%p234) target = $region20
        $region19: #{tpu_custom_call.1} parent=11 // pred_region
          %s238 = ssub.s32 1024, 1024
          %239 = vsyncadd [#allocation9], %s238
          %s240 = sshll.u32 [#allocation8], 4
          %s241 = int_to_ptr.vmem [resolvable:$true] %s240
          %246 = dma.hbm_to_vmem [thread:$0]  %s3, 1024, %s241, [#allocation9], 128, 128, 8
        $region20: #{tpu_custom_call.1} parent=11 // pred_fallthru
          _
        // Predicated region
        $region21: #{tpu_custom_call.1} parent=11 // pred_check
          %p247 = pneg %p138
        $region22: #{tpu_custom_call.1} parent=11 // pred_check_branch
          %249 = sbr.rel (%p247) target = $region24
        $region23: #{tpu_custom_call.1} parent=11 // pred_region
          _
        $region24: #{tpu_custom_call.1} parent=11 // pred_fallthru
          _
        // Predicated region
        $region25: #{tpu_custom_call.1} parent=11 // pred_check
          %p250 = pneg %p159
        $region26: #{tpu_custom_call.1} parent=11 // pred_check_branch
          %252 = sbr.rel (%p250) target = $region28
        $region27: #{tpu_custom_call.1} parent=11 // pred_region
          %s254 = ssub.s32 512, 512
          %255 = vsyncadd [#allocation9], %s254
          %s256 = sshll.u32 [#allocation10], 4
          %s257 = int_to_ptr.vmem [resolvable:$true] %s256
          %262 = dma.hbm_to_vmem [thread:$0]  %s5, 512, %s257, [#allocation9], 128, 128, 8
        $region28: #{tpu_custom_call.1} parent=11 // pred_fallthru
          _
        // Predicated region
        $region29: #{tpu_custom_call.1} parent=11 // pred_check
          %p263 = pneg %p180
        $region30: #{tpu_custom_call.1} parent=11 // pred_check_branch
          %265 = sbr.rel (%p263) target = $region32
        $region31: #{tpu_custom_call.1} parent=11 // pred_region
          _
        $region32: #{tpu_custom_call.1} parent=11 // pred_fallthru
          _
      $region12: #{tpu_custom_call.1} parent=5 // pred_fallthru
        _
      %p266 = scmp.lt.s32.totalorder %s23, 2
      // Predicated region
      $region33: #{tpu_custom_call.1} parent=5 // pred_check
        %p267 = pneg %p266
      $region34: #{tpu_custom_call.1} parent=5 // pred_check_branch
        %269 = sbr.rel (%p267) target = $region36
      $region35: #{tpu_custom_call.1} parent=5 // pred_region
        // Predicated region
        $region37: #{tpu_custom_call.1} parent=35 // pred_check
          %p270 = pneg %p43
        $region38: #{tpu_custom_call.1} parent=35 // pred_check_branch
          %272 = sbr.rel (%p270) target = $region40
        $region39: #{tpu_custom_call.1} parent=35 // pred_region
          %s273 = sand.u32 %s33, 1
          %s274 = scalar_lea.sflag [#allocation3], %s273
          %s275 = sand.u32 %s33, 1
          %s276 = smul.addr %s275, 8
          %s277 = scalar_lea.vmem [#allocation2], %s276
          %s279 = ssub.s32 128, 128
          %280 = vsyncadd %s274, %s279
          %s281 = smul.addr %s23, 128
          %s282 = scalar_lea.hbm %s0, %s281
          %s284 = sshll.u32 %s277, 4
          %s285 = int_to_ptr.vmem [resolvable:$true] %s284
          %287 = dma.hbm_to_vmem [thread:$0]  %s282, 128, %s285, %s274
        $region40: #{tpu_custom_call.1} parent=35 // pred_fallthru
          _
        // Predicated region
        $region41: #{tpu_custom_call.1} parent=35 // pred_check
          %p288 = pneg %p69
        $region42: #{tpu_custom_call.1} parent=35 // pred_check_branch
          %290 = sbr.rel (%p288) target = $region44
        $region43: #{tpu_custom_call.1} parent=35 // pred_region
          %s291 = sand.u32 %s23, 1
          %s292 = scalar_lea.sflag [#allocation6], %s291
          %s293 = sand.u32 %s59, 1
          %s294 = smul.addr %s293, 8
          %s295 = scalar_lea.vmem [#allocation5], %s294
          %s297 = ssub.s32 128, 128
          %298 = vsyncadd %s292, %s297
          %s299 = smul.addr %s23, 128
          %s300 = scalar_lea.hbm %s1, %s299
          %s302 = sshll.u32 %s295, 4
          %s303 = int_to_ptr.vmem [resolvable:$true] %s302
          %305 = dma.hbm_to_vmem [thread:$0]  %s300, 128, %s303, %s292
        $region44: #{tpu_custom_call.1} parent=35 // pred_fallthru
          _
      $region36: #{tpu_custom_call.1} parent=5 // pred_fallthru
        _
      %p306 = scmp.le.s32.totalorder 1, %s23
      %p307 = scmp.lt.s32.totalorder %s23, 3
      %p308 = pnand %p306, %p307
      %p309 = pneg %p308
      // Predicated region
      $region45: #{tpu_custom_call.1} parent=5 // pred_check
        _
      $region46: #{tpu_custom_call.1} parent=5 // pred_check_branch
        %311 = sbr.rel (%p308) target = $region48
      $region47: #{tpu_custom_call.1} parent=5 // pred_region
        %s312 = ssub.s32 %s23, 1
        %s313 = sand.u32 %s36, 1
        %s314 = scalar_lea.sflag [#allocation3], %s313
        %s315 = sand.u32 %s36, 1
        %s316 = smul.addr %s315, 8
        %s317 = scalar_lea.vmem [#allocation2], %s316
        // Predicated region
        $region49: #{tpu_custom_call.1} parent=47 // pred_check
          %p318 = pneg %p49
        $region50: #{tpu_custom_call.1} parent=47 // pred_check_branch
          %320 = sbr.rel (%p318) target = $region52
        $region51: #{tpu_custom_call.1} parent=47 // pred_region
          %321 = dma.done %s314, 128
        $region52: #{tpu_custom_call.1} parent=47 // pred_fallthru
          _
        %s322 = sand.u32 %s28, 1
        %s323 = scalar_lea.sflag [#allocation6], %s322
        %s324 = sand.u32 %s62, 1
        %s325 = smul.addr %s324, 8
        %s326 = scalar_lea.vmem [#allocation5], %s325
        // Predicated region
        $region53: #{tpu_custom_call.1} parent=47 // pred_check
          %p327 = pneg %p75
        $region54: #{tpu_custom_call.1} parent=47 // pred_check_branch
          %329 = sbr.rel (%p327) target = $region56
        $region55: #{tpu_custom_call.1} parent=47 // pred_region
          %330 = dma.done %s323, 128
        $region56: #{tpu_custom_call.1} parent=47 // pred_fallthru
          _
        // Predicated region
        $region57: #{tpu_custom_call.1} parent=47 // pred_check
          %p331 = pneg %p96
        $region58: #{tpu_custom_call.1} parent=47 // pred_check_branch
          %333 = sbr.rel (%p331) target = $region60
        $region59: #{tpu_custom_call.1} parent=47 // pred_region
          %334 = dma.done [#allocation6], 512
        $region60: #{tpu_custom_call.1} parent=47 // pred_fallthru
          _
        // Predicated region
        $region61: #{tpu_custom_call.1} parent=47 // pred_check
          %p335 = pneg %p117
        $region62: #{tpu_custom_call.1} parent=47 // pred_check_branch
          %337 = sbr.rel (%p335) target = $region64
        $region63: #{tpu_custom_call.1} parent=47 // pred_region
          %338 = dma.done [#allocation9], 1024
        $region64: #{tpu_custom_call.1} parent=47 // pred_fallthru
          _
        // Predicated region
        $region65: #{tpu_custom_call.1} parent=47 // pred_check
          %p339 = pneg %p159
        $region66: #{tpu_custom_call.1} parent=47 // pred_check_branch
          %341 = sbr.rel (%p339) target = $region68
        $region67: #{tpu_custom_call.1} parent=47 // pred_region
          %342 = dma.done [#allocation9], 512
        $region68: #{tpu_custom_call.1} parent=47 // pred_fallthru
          _
        %s343 = sand.u32 %s36, 1
        %s344 = scalar_lea.sflag [#allocation3], %s343
        %s345 = sand.u32 %s36, 1
        %s346 = smul.addr %s345, 8
        %s347 = scalar_lea.vmem [#allocation2], %s346
        %p348 = pneg %p49
        %p349 = pneg %p46
        %s350 = sand.u32 %s28, 1
        %s351 = scalar_lea.sflag [#allocation6], %s350
        %s352 = sand.u32 %s62, 1
        %s353 = smul.addr %s352, 8
        %s354 = scalar_lea.vmem [#allocation5], %s353
        %p355 = pneg %p75
        %p356 = pneg %p72
        %p357 = pneg %p96
        %p358 = pneg %p93
        %p359 = pneg %p117
        %p360 = pneg %p114
        %p361 = pneg %p138
        %p362 = pneg %p135
        %p363 = pneg %p159
        %p364 = pneg %p156
        %p365 = pneg %p180
        %p366 = pneg %p177
        %p367 = pneg %p206
        %p368 = pneg %p203
        %s369 = sand.u32 %s193, 1
        %s370 = scalar_lea.sflag [#allocation4], %s369
        %s371 = sand.u32 %s193, 1
        %s372 = smul.addr %s371, 64
        %s373 = scalar_lea.vmem [#allocation11], %s372
        %v374 = vld [vmem:[#allocation7] sm:$0xff]
        %v375 = vld [vmem:[#allocation7 + $0x8] sm:$0xff]
        %v376 = vld [vmem:[#allocation7 + $0x10] sm:$0xff]
        %v377 = vld [vmem:[#allocation7 + $0x18] sm:$0xff]
        %v378 = vld [vmem:[#allocation8] sm:$0xff]
        %v379 = vld [vmem:[#allocation8 + $0x8] sm:$0xff]
        %v380 = vld [vmem:[#allocation8 + $0x10] sm:$0xff]
        %v381 = vld [vmem:[#allocation8 + $0x18] sm:$0xff]
        %v382 = vld [vmem:[#allocation8 + $0x20] sm:$0xff]
        %v383 = vld [vmem:[#allocation8 + $0x28] sm:$0xff]
        %v384 = vld [vmem:[#allocation8 + $0x30] sm:$0xff]
        %v385 = vld [vmem:[#allocation8 + $0x38] sm:$0xff]
        %v386 = vld [vmem:[%s4] sm:$0x1]
        %v387 = vld [vmem:[#allocation10] sm:$0xff]
        %v388 = vld [vmem:[#allocation10 + $0x8] sm:$0xff]
        %v389 = vld [vmem:[#allocation10 + $0x10] sm:$0xff]
        %v390 = vld [vmem:[#allocation10 + $0x18] sm:$0xff]
        %v391 = vld [vmem:[%s6] sm:$0x1]
        %v392 = vlaneseq
        %v393 = vand.u32 %v392, 127
        %v394 = vld [vmem:[%s326] sm:$0xff]
        %v395 = vld [vmem:[%s317] sm:$0xff]
        %vm396 = vcmask 261120
        %v398 = vsel %vm396, %v395, 0
        %400 = vmatprep.subr.mxu0 0.0
        %401 = vmatpush1.msra.mxu0 %v374
        %402 = vmatprep.subr.mxu0 0.0
        %403 = vmatpush1.msra.mxu0 %v375
        %404 = vmatprep.subr.mxu0 0.0
        %405 = vmatpush1.msra.mxu0 %v376
        %406 = vmatprep.subr.mxu0 0.0
        %407 = vmatpush1.msra.mxu0 %v377
        %408 = vmatprep.subr.mxu0 0.0
        %409 = vmatpush1.msra.mxu0 0.0
        %410 = vmatprep.subr.mxu0 0.0
        %411 = vmatpush1.msra.mxu0 0.0
        %412 = vmatprep.subr.mxu0 0.0
        %413 = vmatpush1.msra.mxu0 0.0
        %414 = vmatprep.subr.mxu0 0.0
        %415 = vmatpush1.msra.mxu0 0.0
        %416 = vmatprep.subr.mxu0 0.0
        %417 = vmatpush1.msra.mxu0 0.0
        %418 = vmatprep.subr.mxu0 0.0
        %419 = vmatpush1.msra.mxu0 0.0
        %420 = vmatprep.subr.mxu0 0.0
        %421 = vmatpush1.msra.mxu0 0.0
        %422 = vmatprep.subr.mxu0 0.0
        %423 = vmatpush1.msra.mxu0 0.0
        %424 = vmatprep.subr.mxu0 0.0
        %425 = vmatpush1.msra.mxu0 0.0
        %426 = vmatprep.subr.mxu0 0.0
        %427 = vmatpush1.msra.mxu0 0.0
        %428 = vmatprep.subr.mxu0 0.0
        %429 = vmatpush1.msra.mxu0 0.0
        %430 = vmatprep.subr.mxu0 0.0
        %431 = vmatpush1.msra.mxu0 0.0
        %432 = vmatprep.subr.mxu0 0.0
        %433 = vmatpush1.msra.mxu0 0.0
        %434 = vmatprep.subr.mxu0 0.0
        %435 = vmatpush1.msra.mxu0 0.0
        %436 = vmatprep.subr.mxu0 0.0
        %437 = vmatpush1.msra.mxu0 0.0
        %438 = vmatprep.subr.mxu0 0.0
        %439 = vmatpush1.msra.mxu0 0.0
        %440 = vmatprep.subr.mxu0 0.0
        %441 = vmatpush1.msra.mxu0 0.0
        %442 = vmatprep.subr.mxu0 0.0
        %443 = vmatpush1.msra.mxu0 0.0
        %444 = vmatprep.subr.mxu0 0.0
        %445 = vmatpush1.msra.mxu0 0.0
        %446 = vmatprep.subr.mxu0 0.0
        %447 = vmatpush1.msra.mxu0 0.0
        %448 = vmatprep.subr.mxu0 0.0
        %449 = vmatpush1.msra.mxu0 0.0
        %450 = vmatprep.subr.mxu0 0.0
        %451 = vmatpush1.msra.mxu0 0.0
        %452 = vmatprep.subr.mxu0 0.0
        %453 = vmatpush1.msra.mxu0 0.0
        %454 = vmatprep.subr.mxu0 0.0
        %455 = vmatpush1.msra.mxu0 0.0
        %456 = vmatprep.subr.mxu0 0.0
        %457 = vmatpush1.msra.mxu0 0.0
        %458 = vmatprep.subr.mxu0 0.0
        %459 = vmatpush1.msra.mxu0 0.0
        %460 = vmatprep.subr.mxu0 0.0
        %461 = vmatpush1.msra.mxu0 0.0
        %462 = vmatprep.subr.mxu0 0.0
        %463 = vmatpush1.msra.mxu0 0.0
        %464 = vmatprep.mubr.f32.mxu0 0.0
        %465 = vmatmul.mubr.f32.gmra.mrb[0].mxu0 %v398
        %v466 = vpop.f32.mrb[0].mxu0
        %v467 = vadd.f32 0.0, %v466
        %v468 = vpop.f32.mrb[0].mxu0
        %469 = vdwg.mxu0
        %v470 = vmax.f32 %v467, 0.0
        %472 = vrot.lane.b32.xlu0 %v394, 32
        %v473 = vpop.permute.xlu0 %472
        %v475 = vsel %vm396, %v470, %v473
        %v477 = vlaneseq
        %v478 = vshrl.u32 %v477, 7
        %v479 = vsub.s32 0, %v478
        %v480 = vrot.slane %v386, %v479
        %vm482 = vcmask 523264
        %v484 = vsel %vm482, %v475, 0
        %486 = vmatprep.subr.mxu0 0.0
        %487 = vmatpush1.msra.mxu0 %v378
        %488 = vmatprep.subr.mxu0 0.0
        %489 = vmatpush1.msra.mxu0 %v379
        %490 = vmatprep.subr.mxu0 0.0
        %491 = vmatpush1.msra.mxu0 %v380
        %492 = vmatprep.subr.mxu0 0.0
        %493 = vmatpush1.msra.mxu0 %v381
        %494 = vmatprep.subr.mxu0 0.0
        %495 = vmatpush1.msra.mxu0 %v382
        %496 = vmatprep.subr.mxu0 0.0
        %497 = vmatpush1.msra.mxu0 %v383
        %498 = vmatprep.subr.mxu0 0.0
        %499 = vmatpush1.msra.mxu0 %v384
        %500 = vmatprep.subr.mxu0 0.0
        %501 = vmatpush1.msra.mxu0 %v385
        %502 = vmatprep.subr.mxu0 0.0
        %503 = vmatpush1.msra.mxu0 0.0
        %504 = vmatprep.subr.mxu0 0.0
        %505 = vmatpush1.msra.mxu0 0.0
        %506 = vmatprep.subr.mxu0 0.0
        %507 = vmatpush1.msra.mxu0 0.0
        %508 = vmatprep.subr.mxu0 0.0
        %509 = vmatpush1.msra.mxu0 0.0
        %510 = vmatprep.subr.mxu0 0.0
        %511 = vmatpush1.msra.mxu0 0.0
        %512 = vmatprep.subr.mxu0 0.0
        %513 = vmatpush1.msra.mxu0 0.0
        %514 = vmatprep.subr.mxu0 0.0
        %515 = vmatpush1.msra.mxu0 0.0
        %516 = vmatprep.subr.mxu0 0.0
        %517 = vmatpush1.msra.mxu0 0.0
        %518 = vmatprep.subr.mxu0 0.0
        %519 = vmatpush1.msra.mxu0 0.0
        %520 = vmatprep.subr.mxu0 0.0
        %521 = vmatpush1.msra.mxu0 0.0
        %522 = vmatprep.subr.mxu0 0.0
        %523 = vmatpush1.msra.mxu0 0.0
        %524 = vmatprep.subr.mxu0 0.0
        %525 = vmatpush1.msra.mxu0 0.0
        %526 = vmatprep.subr.mxu0 0.0
        %527 = vmatpush1.msra.mxu0 0.0
        %528 = vmatprep.subr.mxu0 0.0
        %529 = vmatpush1.msra.mxu0 0.0
        %530 = vmatprep.subr.mxu0 0.0
        %531 = vmatpush1.msra.mxu0 0.0
        %532 = vmatprep.subr.mxu0 0.0
        %533 = vmatpush1.msra.mxu0 0.0
        %534 = vmatprep.subr.mxu0 0.0
        %535 = vmatpush1.msra.mxu0 0.0
        %536 = vmatprep.subr.mxu0 0.0
        %537 = vmatpush1.msra.mxu0 0.0
        %538 = vmatprep.subr.mxu0 0.0
        %539 = vmatpush1.msra.mxu0 0.0
        %540 = vmatprep.subr.mxu0 0.0
        %541 = vmatpush1.msra.mxu0 0.0
        %542 = vmatprep.subr.mxu0 0.0
        %543 = vmatpush1.msra.mxu0 0.0
        %544 = vmatprep.subr.mxu0 0.0
        %545 = vmatpush1.msra.mxu0 0.0
        %546 = vmatprep.subr.mxu0 0.0
        %547 = vmatpush1.msra.mxu0 0.0
        %548 = vmatprep.subr.mxu0 0.0
        %549 = vmatpush1.msra.mxu0 0.0
        %550 = vmatprep.mubr.f32.mxu0 0.0
        %551 = vmatmul.mubr.f32.gmra.mrb[0].mxu0 %v484
        %v552 = vpop.f32.mrb[0].mxu0
        %v553 = vadd.f32 %v480, %v552
        %v554 = vpop.f32.mrb[0].mxu0
        %555 = vdwg.mxu0
        %v556 = vxor.u32 %v553, 2147483648
        %v557 = vmul.f32 %v556, 1.442695
        %v558 = vpow.pop %v557
        %v559 = vadd.f32 %v558, 1.0
        %v560 = vrcp.pop %v559
        %v561 = vmul.f32 1.0, %v560
        %563 = vrot.lane.b32.xlu0 %v553, 32
        %v564 = vpop.permute.xlu0 %563
        %v566 = vmul.f32 %v561, %v564
        %568 = vrot.lane.b32.xlu0 %v566, 64
        %v569 = vpop.permute.xlu0 %568
        %v571 = vadd.f32 %v553, %v569
        %v572 = vtanh.pop %v571
        %v573 = vsub.f32 1.0, %v561
        %575 = vrot.lane.b32.xlu0 %v572, 96
        %v576 = vpop.permute.xlu0 %575
        %v578 = vmul.f32 %v573, %v576
        %v579 = vmul.f32 %v561, %v473
        %v580 = vadd.f32 %v578, %v579
        %v582 = vlaneseq
        %v583 = vshrl.u32 %v582, 7
        %v584 = vsub.s32 0, %v583
        %v585 = vrot.slane %v391, %v584
        %588 = vrot.lane.b32.xlu0 %v580, 96
        %v589 = vpop.permute.xlu0 %588
        %v590 = vsel %vm396, %v589, 0
        %592 = vmatprep.subr.mxu0 0.0
        %593 = vmatpush1.msra.mxu0 %v387
        %594 = vmatprep.subr.mxu0 0.0
        %595 = vmatpush1.msra.mxu0 %v388
        %596 = vmatprep.subr.mxu0 0.0
        %597 = vmatpush1.msra.mxu0 %v389
        %598 = vmatprep.subr.mxu0 0.0
        %599 = vmatpush1.msra.mxu0 %v390
        %600 = vmatprep.subr.mxu0 0.0
        %601 = vmatpush1.msra.mxu0 0.0
        %602 = vmatprep.subr.mxu0 0.0
        %603 = vmatpush1.msra.mxu0 0.0
        %604 = vmatprep.subr.mxu0 0.0
        %605 = vmatpush1.msra.mxu0 0.0
        %606 = vmatprep.subr.mxu0 0.0
        %607 = vmatpush1.msra.mxu0 0.0
        %608 = vmatprep.subr.mxu0 0.0
        %609 = vmatpush1.msra.mxu0 0.0
        %610 = vmatprep.subr.mxu0 0.0
        %611 = vmatpush1.msra.mxu0 0.0
        %612 = vmatprep.subr.mxu0 0.0
        %613 = vmatpush1.msra.mxu0 0.0
        %614 = vmatprep.subr.mxu0 0.0
        %615 = vmatpush1.msra.mxu0 0.0
        %616 = vmatprep.subr.mxu0 0.0
        %617 = vmatpush1.msra.mxu0 0.0
        %618 = vmatprep.subr.mxu0 0.0
        %619 = vmatpush1.msra.mxu0 0.0
        %620 = vmatprep.subr.mxu0 0.0
        %621 = vmatpush1.msra.mxu0 0.0
        %622 = vmatprep.subr.mxu0 0.0
        %623 = vmatpush1.msra.mxu0 0.0
        %624 = vmatprep.subr.mxu0 0.0
        %625 = vmatpush1.msra.mxu0 0.0
        %626 = vmatprep.subr.mxu0 0.0
        %627 = vmatpush1.msra.mxu0 0.0
        %628 = vmatprep.subr.mxu0 0.0
        %629 = vmatpush1.msra.mxu0 0.0
        %630 = vmatprep.subr.mxu0 0.0
        %631 = vmatpush1.msra.mxu0 0.0
        %632 = vmatprep.subr.mxu0 0.0
        %633 = vmatpush1.msra.mxu0 0.0
        %634 = vmatprep.subr.mxu0 0.0
        %635 = vmatpush1.msra.mxu0 0.0
        %636 = vmatprep.subr.mxu0 0.0
        %637 = vmatpush1.msra.mxu0 0.0
        %638 = vmatprep.subr.mxu0 0.0
        %639 = vmatpush1.msra.mxu0 0.0
        %640 = vmatprep.subr.mxu0 0.0
        %641 = vmatpush1.msra.mxu0 0.0
        %642 = vmatprep.subr.mxu0 0.0
        %643 = vmatpush1.msra.mxu0 0.0
        %644 = vmatprep.subr.mxu0 0.0
        %645 = vmatpush1.msra.mxu0 0.0
        %646 = vmatprep.subr.mxu0 0.0
        %647 = vmatpush1.msra.mxu0 0.0
        %648 = vmatprep.subr.mxu0 0.0
        %649 = vmatpush1.msra.mxu0 0.0
        %650 = vmatprep.subr.mxu0 0.0
        %651 = vmatpush1.msra.mxu0 0.0
        %652 = vmatprep.subr.mxu0 0.0
        %653 = vmatpush1.msra.mxu0 0.0
        %654 = vmatprep.subr.mxu0 0.0
        %655 = vmatpush1.msra.mxu0 0.0
        %656 = vmatprep.mubr.f32.mxu0 0.0
        %657 = vmatmul.mubr.f32.gmra.mrb[0].mxu0 %v590
        %v658 = vpop.f32.mrb[0].mxu0
        %v659 = vadd.f32 %v585, %v658
        %v660 = vpop.f32.mrb[0].mxu0
        %661 = vdwg.mxu0
        %v662 = vsel %vm396, %v659, -inf
        %663 = vmax.xlane.f32.xlu0 %v662
        %v664 = vpop.xlane.xlu0 %663
        %v665 = vsub.f32 %v659, %v664
        %v666 = vmul.f32 %v665, 1.442695
        %v667 = vpow.pop %v666
        %v668 = vsel %vm396, %v667, 0.0
        %669 = vadd.xlane.f32.xlu0 %v668
        %v670 = vpop.xlane.xlu0 %669
        %v671 = vlog2.pop %v670
        %v672 = vmul.f32 %v671, 0.6931472
        %v673 = vsub.f32 %v665, %v672
        %vm674 = vcmp.ge.f32.partialorder %v659, %v664
        %v675 = vsel %vm674, %v393, 32
        %v676 = vsel %vm396, %v675, 2147483647
        %v677 = vand.u32 %v676, 65535
        %v678 = vshra.s32 %v676, 16
        %v679 = vcvt.s32.f32 %v677
        %v680 = vcvt.s32.f32 %v678
        %681 = vmin.xlane.f32.xlu0 %v680
        %v682 = vpop.xlane.xlu0 %681
        %vm683 = vcmp.eq.f32.partialorder %v680, %v682
        %v684 = vsel %vm683, %v679, inf
        %685 = vmin.xlane.f32.xlu0 %v684
        %v686 = vpop.xlane.xlu0 %685
        %v687 = vcvt.f32.s32 %v686
        %v688 = vcvt.f32.s32 %v682
        %v689 = vshll.u32 %v688, 16
        %v690 = vadd.s32 %v689, %v687
        %vm691 = vcmp.eq.s32.totalorder %v393, %v690
        %v692 = vsel %vm691, 1, 0
        %v693 = vcvt.s32.f32 %v692
        %v694 = vsel %vm396, %v673, %v580
        %v695 = vsel %vm482, %v694, 0.0
        %696 = vst [vmem:[%s373] sm:$0xff] %v695
        %v698 = vsel %vm396, %v693, 0
        %700 = vmatprep.subr.mxu0 0.0
        %701 = vmatpush1.msra.mxu0 %v374
        %702 = vmatprep.subr.mxu0 0.0
        %703 = vmatpush1.msra.mxu0 %v375
        %704 = vmatprep.subr.mxu0 0.0
        %705 = vmatpush1.msra.mxu0 %v376
        %706 = vmatprep.subr.mxu0 0.0
        %707 = vmatpush1.msra.mxu0 %v377
        %708 = vmatprep.subr.mxu0 0.0
        %709 = vmatpush1.msra.mxu0 0.0
        %710 = vmatprep.subr.mxu0 0.0
        %711 = vmatpush1.msra.mxu0 0.0
        %712 = vmatprep.subr.mxu0 0.0
        %713 = vmatpush1.msra.mxu0 0.0
        %714 = vmatprep.subr.mxu0 0.0
        %715 = vmatpush1.msra.mxu0 0.0
        %716 = vmatprep.subr.mxu0 0.0
        %717 = vmatpush1.msra.mxu0 0.0
        %718 = vmatprep.subr.mxu0 0.0
        %719 = vmatpush1.msra.mxu0 0.0
        %720 = vmatprep.subr.mxu0 0.0
        %721 = vmatpush1.msra.mxu0 0.0
        %722 = vmatprep.subr.mxu0 0.0
        %723 = vmatpush1.msra.mxu0 0.0
        %724 = vmatprep.subr.mxu0 0.0
        %725 = vmatpush1.msra.mxu0 0.0
        %726 = vmatprep.subr.mxu0 0.0
        %727 = vmatpush1.msra.mxu0 0.0
        %728 = vmatprep.subr.mxu0 0.0
        %729 = vmatpush1.msra.mxu0 0.0
        %730 = vmatprep.subr.mxu0 0.0
        %731 = vmatpush1.msra.mxu0 0.0
        %732 = vmatprep.subr.mxu0 0.0
        %733 = vmatpush1.msra.mxu0 0.0
        %734 = vmatprep.subr.mxu0 0.0
        %735 = vmatpush1.msra.mxu0 0.0
        %736 = vmatprep.subr.mxu0 0.0
        %737 = vmatpush1.msra.mxu0 0.0
        %738 = vmatprep.subr.mxu0 0.0
        %739 = vmatpush1.msra.mxu0 0.0
        %740 = vmatprep.subr.mxu0 0.0
        %741 = vmatpush1.msra.mxu0 0.0
        %742 = vmatprep.subr.mxu0 0.0
        %743 = vmatpush1.msra.mxu0 0.0
        %744 = vmatprep.subr.mxu0 0.0
        %745 = vmatpush1.msra.mxu0 0.0
        %746 = vmatprep.subr.mxu0 0.0
        %747 = vmatpush1.msra.mxu0 0.0
        %748 = vmatprep.subr.mxu0 0.0
        %749 = vmatpush1.msra.mxu0 0.0
        %750 = vmatprep.subr.mxu0 0.0
        %751 = vmatpush1.msra.mxu0 0.0
        %752 = vmatprep.subr.mxu0 0.0
        %753 = vmatpush1.msra.mxu0 0.0
        %754 = vmatprep.subr.mxu0 0.0
        %755 = vmatpush1.msra.mxu0 0.0
        %756 = vmatprep.subr.mxu0 0.0
        %757 = vmatpush1.msra.mxu0 0.0
        %758 = vmatprep.subr.mxu0 0.0
        %759 = vmatpush1.msra.mxu0 0.0
        %760 = vmatprep.subr.mxu0 0.0
        %761 = vmatpush1.msra.mxu0 0.0
        %762 = vmatprep.subr.mxu0 0.0
        %763 = vmatpush1.msra.mxu0 0.0
        %764 = vmatprep.mubr.f32.mxu0 0.0
        %765 = vmatmul.mubr.f32.gmra.mrb[0].mxu0 %v698
        %v766 = vpop.f32.mrb[0].mxu0
        %v767 = vadd.f32 0.0, %v766
        %v768 = vpop.f32.mrb[0].mxu0
        %769 = vdwg.mxu0
        %v770 = vmax.f32 %v767, 0.0
        %v771 = vsel %vm396, %v770, %v580
        %v773 = vsel %vm482, %v771, 0
        %775 = vmatprep.subr.mxu0 0.0
        %776 = vmatpush1.msra.mxu0 %v378
        %777 = vmatprep.subr.mxu0 0.0
        %778 = vmatpush1.msra.mxu0 %v379
        %779 = vmatprep.subr.mxu0 0.0
        %780 = vmatpush1.msra.mxu0 %v380
        %781 = vmatprep.subr.mxu0 0.0
        %782 = vmatpush1.msra.mxu0 %v381
        %783 = vmatprep.subr.mxu0 0.0
        %784 = vmatpush1.msra.mxu0 %v382
        %785 = vmatprep.subr.mxu0 0.0
        %786 = vmatpush1.msra.mxu0 %v383
        %787 = vmatprep.subr.mxu0 0.0
        %788 = vmatpush1.msra.mxu0 %v384
        %789 = vmatprep.subr.mxu0 0.0
        %790 = vmatpush1.msra.mxu0 %v385
        %791 = vmatprep.subr.mxu0 0.0
        %792 = vmatpush1.msra.mxu0 0.0
        %793 = vmatprep.subr.mxu0 0.0
        %794 = vmatpush1.msra.mxu0 0.0
        %795 = vmatprep.subr.mxu0 0.0
        %796 = vmatpush1.msra.mxu0 0.0
        %797 = vmatprep.subr.mxu0 0.0
        %798 = vmatpush1.msra.mxu0 0.0
        %799 = vmatprep.subr.mxu0 0.0
        %800 = vmatpush1.msra.mxu0 0.0
        %801 = vmatprep.subr.mxu0 0.0
        %802 = vmatpush1.msra.mxu0 0.0
        %803 = vmatprep.subr.mxu0 0.0
        %804 = vmatpush1.msra.mxu0 0.0
        %805 = vmatprep.subr.mxu0 0.0
        %806 = vmatpush1.msra.mxu0 0.0
        %807 = vmatprep.subr.mxu0 0.0
        %808 = vmatpush1.msra.mxu0 0.0
        %809 = vmatprep.subr.mxu0 0.0
        %810 = vmatpush1.msra.mxu0 0.0
        %811 = vmatprep.subr.mxu0 0.0
        %812 = vmatpush1.msra.mxu0 0.0
        %813 = vmatprep.subr.mxu0 0.0
        %814 = vmatpush1.msra.mxu0 0.0
        %815 = vmatprep.subr.mxu0 0.0
        %816 = vmatpush1.msra.mxu0 0.0
        %817 = vmatprep.subr.mxu0 0.0
        %818 = vmatpush1.msra.mxu0 0.0
        %819 = vmatprep.subr.mxu0 0.0
        %820 = vmatpush1.msra.mxu0 0.0
        %821 = vmatprep.subr.mxu0 0.0
        %822 = vmatpush1.msra.mxu0 0.0
        %823 = vmatprep.subr.mxu0 0.0
        %824 = vmatpush1.msra.mxu0 0.0
        %825 = vmatprep.subr.mxu0 0.0
        %826 = vmatpush1.msra.mxu0 0.0
        %827 = vmatprep.subr.mxu0 0.0
        %828 = vmatpush1.msra.mxu0 0.0
        %829 = vmatprep.subr.mxu0 0.0
        %830 = vmatpush1.msra.mxu0 0.0
        %831 = vmatprep.subr.mxu0 0.0
        %832 = vmatpush1.msra.mxu0 0.0
        %833 = vmatprep.subr.mxu0 0.0
        %834 = vmatpush1.msra.mxu0 0.0
        %835 = vmatprep.subr.mxu0 0.0
        %836 = vmatpush1.msra.mxu0 0.0
        %837 = vmatprep.subr.mxu0 0.0
        %838 = vmatpush1.msra.mxu0 0.0
        %839 = vmatprep.mubr.f32.mxu0 0.0
        %840 = vmatmul.mubr.f32.gmra.mrb[0].mxu0 %v773
        %v841 = vpop.f32.mrb[0].mxu0
        %v842 = vadd.f32 %v480, %v841
        %v843 = vpop.f32.mrb[0].mxu0
        %844 = vdwg.mxu0
        %v845 = vxor.u32 %v842, 2147483648
        %v846 = vmul.f32 %v845, 1.442695
        %v847 = vpow.pop %v846
        %v848 = vadd.f32 %v847, 1.0
        %v849 = vrcp.pop %v848
        %v850 = vmul.f32 1.0, %v849
        %852 = vrot.lane.b32.xlu0 %v842, 32
        %v853 = vpop.permute.xlu0 %852
        %v855 = vmul.f32 %v850, %v853
        %857 = vrot.lane.b32.xlu0 %v855, 64
        %v858 = vpop.permute.xlu0 %857
        %v860 = vadd.f32 %v842, %v858
        %v861 = vtanh.pop %v860
        %v862 = vsub.f32 1.0, %v850
        %864 = vrot.lane.b32.xlu0 %v861, 96
        %v865 = vpop.permute.xlu0 %864
        %v867 = vmul.f32 %v862, %v865
        %v868 = vmul.f32 %v850, %v580
        %v869 = vadd.f32 %v867, %v868
        %871 = vrot.lane.b32.xlu0 %v869, 96
        %v872 = vpop.permute.xlu0 %871
        %v873 = vsel %vm396, %v872, 0
        %875 = vmatprep.subr.mxu0 0.0
        %876 = vmatpush1.msra.mxu0 %v387
        %877 = vmatprep.subr.mxu0 0.0
        %878 = vmatpush1.msra.mxu0 %v388
        %879 = vmatprep.subr.mxu0 0.0
        %880 = vmatpush1.msra.mxu0 %v389
        %881 = vmatprep.subr.mxu0 0.0
        %882 = vmatpush1.msra.mxu0 %v390
        %883 = vmatprep.subr.mxu0 0.0
        %884 = vmatpush1.msra.mxu0 0.0
        %885 = vmatprep.subr.mxu0 0.0
        %886 = vmatpush1.msra.mxu0 0.0
        %887 = vmatprep.subr.mxu0 0.0
        %888 = vmatpush1.msra.mxu0 0.0
        %889 = vmatprep.subr.mxu0 0.0
        %890 = vmatpush1.msra.mxu0 0.0
        %891 = vmatprep.subr.mxu0 0.0
        %892 = vmatpush1.msra.mxu0 0.0
        %893 = vmatprep.subr.mxu0 0.0
        %894 = vmatpush1.msra.mxu0 0.0
        %895 = vmatprep.subr.mxu0 0.0
        %896 = vmatpush1.msra.mxu0 0.0
        %897 = vmatprep.subr.mxu0 0.0
        %898 = vmatpush1.msra.mxu0 0.0
        %899 = vmatprep.subr.mxu0 0.0
        %900 = vmatpush1.msra.mxu0 0.0
        %901 = vmatprep.subr.mxu0 0.0
        %902 = vmatpush1.msra.mxu0 0.0
        %903 = vmatprep.subr.mxu0 0.0
        %904 = vmatpush1.msra.mxu0 0.0
        %905 = vmatprep.subr.mxu0 0.0
        %906 = vmatpush1.msra.mxu0 0.0
        %907 = vmatprep.subr.mxu0 0.0
        %908 = vmatpush1.msra.mxu0 0.0
        %909 = vmatprep.subr.mxu0 0.0
        %910 = vmatpush1.msra.mxu0 0.0
        %911 = vmatprep.subr.mxu0 0.0
        %912 = vmatpush1.msra.mxu0 0.0
        %913 = vmatprep.subr.mxu0 0.0
        %914 = vmatpush1.msra.mxu0 0.0
        %915 = vmatprep.subr.mxu0 0.0
        %916 = vmatpush1.msra.mxu0 0.0
        %917 = vmatprep.subr.mxu0 0.0
        %918 = vmatpush1.msra.mxu0 0.0
        %919 = vmatprep.subr.mxu0 0.0
        %920 = vmatpush1.msra.mxu0 0.0
        %921 = vmatprep.subr.mxu0 0.0
        %922 = vmatpush1.msra.mxu0 0.0
        %923 = vmatprep.subr.mxu0 0.0
        %924 = vmatpush1.msra.mxu0 0.0
        %925 = vmatprep.subr.mxu0 0.0
        %926 = vmatpush1.msra.mxu0 0.0
        %927 = vmatprep.subr.mxu0 0.0
        %928 = vmatpush1.msra.mxu0 0.0
        %929 = vmatprep.subr.mxu0 0.0
        %930 = vmatpush1.msra.mxu0 0.0
        %931 = vmatprep.subr.mxu0 0.0
        %932 = vmatpush1.msra.mxu0 0.0
        %933 = vmatprep.subr.mxu0 0.0
        %934 = vmatpush1.msra.mxu0 0.0
        %935 = vmatprep.subr.mxu0 0.0
        %936 = vmatpush1.msra.mxu0 0.0
        %937 = vmatprep.subr.mxu0 0.0
        %938 = vmatpush1.msra.mxu0 0.0
        %939 = vmatprep.mubr.f32.mxu0 0.0
        %940 = vmatmul.mubr.f32.gmra.mrb[0].mxu0 %v873
        %v941 = vpop.f32.mrb[0].mxu0
        %v942 = vadd.f32 %v585, %v941
        %v943 = vpop.f32.mrb[0].mxu0
        %944 = vdwg.mxu0
        %v945 = vsel %vm396, %v942, -inf
        %946 = vmax.xlane.f32.xlu0 %v945
        %v947 = vpop.xlane.xlu0 %946
        %v948 = vsub.f32 %v942, %v947
        %v949 = vmul.f32 %v948, 1.442695
        %v950 = vpow.pop %v949
        %v951 = vsel %vm396, %v950, 0.0
        %952 = vadd.xlane.f32.xlu0 %v951
        %v953 = vpop.xlane.xlu0 %952
        %v954 = vlog2.pop %v953
        %v955 = vmul.f32 %v954, 0.6931472
        %v956 = vsub.f32 %v948, %v955
        %vm957 = vcmp.ge.f32.partialorder %v942, %v947
        %v958 = vsel %vm957, %v393, 32
        %v959 = vsel %vm396, %v958, 2147483647
        %v960 = vand.u32 %v959, 65535
        %v961 = vshra.s32 %v959, 16
        %v962 = vcvt.s32.f32 %v960
        %v963 = vcvt.s32.f32 %v961
        %964 = vmin.xlane.f32.xlu0 %v963
        %v965 = vpop.xlane.xlu0 %964
        %vm966 = vcmp.eq.f32.partialorder %v963, %v965
        %v967 = vsel %vm966, %v962, inf
        %968 = vmin.xlane.f32.xlu0 %v967
        %v969 = vpop.xlane.xlu0 %968
        %v970 = vcvt.f32.s32 %v969
        %v971 = vcvt.f32.s32 %v965
        %v972 = vshll.u32 %v971, 16
        %v973 = vadd.s32 %v972, %v970
        %vm974 = vcmp.eq.s32.totalorder %v393, %v973
        %v975 = vsel %vm974, 1, 0
        %v976 = vcvt.s32.f32 %v975
        %v977 = vsel %vm396, %v956, %v869
        %v978 = vsel %vm482, %v977, 0.0
        %s979 = scalar_lea.vmem %s373, 8 [#allocation11]
        %980 = vst [vmem:[%s979] sm:$0xff] %v978
        %v982 = vsel %vm396, %v976, 0
        %984 = vmatprep.subr.mxu0 0.0
        %985 = vmatpush1.msra.mxu0 %v374
        %986 = vmatprep.subr.mxu0 0.0
        %987 = vmatpush1.msra.mxu0 %v375
        %988 = vmatprep.subr.mxu0 0.0
        %989 = vmatpush1.msra.mxu0 %v376
        %990 = vmatprep.subr.mxu0 0.0
        %991 = vmatpush1.msra.mxu0 %v377
        %992 = vmatprep.subr.mxu0 0.0
        %993 = vmatpush1.msra.mxu0 0.0
        %994 = vmatprep.subr.mxu0 0.0
        %995 = vmatpush1.msra.mxu0 0.0
        %996 = vmatprep.subr.mxu0 0.0
        %997 = vmatpush1.msra.mxu0 0.0
        %998 = vmatprep.subr.mxu0 0.0
        %999 = vmatpush1.msra.mxu0 0.0
        %1000 = vmatprep.subr.mxu0 0.0
        %1001 = vmatpush1.msra.mxu0 0.0
        %1002 = vmatprep.subr.mxu0 0.0
        %1003 = vmatpush1.msra.mxu0 0.0
        %1004 = vmatprep.subr.mxu0 0.0
        %1005 = vmatpush1.msra.mxu0 0.0
        %1006 = vmatprep.subr.mxu0 0.0
        %1007 = vmatpush1.msra.mxu0 0.0
        %1008 = vmatprep.subr.mxu0 0.0
        %1009 = vmatpush1.msra.mxu0 0.0
        %1010 = vmatprep.subr.mxu0 0.0
        %1011 = vmatpush1.msra.mxu0 0.0
        %1012 = vmatprep.subr.mxu0 0.0
        %1013 = vmatpush1.msra.mxu0 0.0
        %1014 = vmatprep.subr.mxu0 0.0
        %1015 = vmatpush1.msra.mxu0 0.0
        %1016 = vmatprep.subr.mxu0 0.0
        %1017 = vmatpush1.msra.mxu0 0.0
        %1018 = vmatprep.subr.mxu0 0.0
        %1019 = vmatpush1.msra.mxu0 0.0
        %1020 = vmatprep.subr.mxu0 0.0
        %1021 = vmatpush1.msra.mxu0 0.0
        %1022 = vmatprep.subr.mxu0 0.0
        %1023 = vmatpush1.msra.mxu0 0.0
        %1024 = vmatprep.subr.mxu0 0.0
        %1025 = vmatpush1.msra.mxu0 0.0
        %1026 = vmatprep.subr.mxu0 0.0
        %1027 = vmatpush1.msra.mxu0 0.0
        %1028 = vmatprep.subr.mxu0 0.0
        %1029 = vmatpush1.msra.mxu0 0.0
        %1030 = vmatprep.subr.mxu0 0.0
        %1031 = vmatpush1.msra.mxu0 0.0
        %1032 = vmatprep.subr.mxu0 0.0
        %1033 = vmatpush1.msra.mxu0 0.0
        %1034 = vmatprep.subr.mxu0 0.0
        %1035 = vmatpush1.msra.mxu0 0.0
        %1036 = vmatprep.subr.mxu0 0.0
        %1037 = vmatpush1.msra.mxu0 0.0
        %1038 = vmatprep.subr.mxu0 0.0
        %1039 = vmatpush1.msra.mxu0 0.0
        %1040 = vmatprep.subr.mxu0 0.0
        %1041 = vmatpush1.msra.mxu0 0.0
        %1042 = vmatprep.subr.mxu0 0.0
        %1043 = vmatpush1.msra.mxu0 0.0
        %1044 = vmatprep.subr.mxu0 0.0
        %1045 = vmatpush1.msra.mxu0 0.0
        %1046 = vmatprep.subr.mxu0 0.0
        %1047 = vmatpush1.msra.mxu0 0.0
        %1048 = vmatprep.mubr.f32.mxu0 0.0
        %1049 = vmatmul.mubr.f32.gmra.mrb[0].mxu0 %v982
        %v1050 = vpop.f32.mrb[0].mxu0
        %v1051 = vadd.f32 0.0, %v1050
        %v1052 = vpop.f32.mrb[0].mxu0
        %1053 = vdwg.mxu0
        %v1054 = vmax.f32 %v1051, 0.0
        %v1055 = vsel %vm396, %v1054, %v869
        %v1057 = vsel %vm482, %v1055, 0
        %1059 = vmatprep.subr.mxu0 0.0
        %1060 = vmatpush1.msra.mxu0 %v378
        %1061 = vmatprep.subr.mxu0 0.0
        %1062 = vmatpush1.msra.mxu0 %v379
        %1063 = vmatprep.subr.mxu0 0.0
        %1064 = vmatpush1.msra.mxu0 %v380
        %1065 = vmatprep.subr.mxu0 0.0
        %1066 = vmatpush1.msra.mxu0 %v381
        %1067 = vmatprep.subr.mxu0 0.0
        %1068 = vmatpush1.msra.mxu0 %v382
        %1069 = vmatprep.subr.mxu0 0.0
        %1070 = vmatpush1.msra.mxu0 %v383
        %1071 = vmatprep.subr.mxu0 0.0
        %1072 = vmatpush1.msra.mxu0 %v384
        %1073 = vmatprep.subr.mxu0 0.0
        %1074 = vmatpush1.msra.mxu0 %v385
        %1075 = vmatprep.subr.mxu0 0.0
        %1076 = vmatpush1.msra.mxu0 0.0
        %1077 = vmatprep.subr.mxu0 0.0
        %1078 = vmatpush1.msra.mxu0 0.0
        %1079 = vmatprep.subr.mxu0 0.0
        %1080 = vmatpush1.msra.mxu0 0.0
        %1081 = vmatprep.subr.mxu0 0.0
        %1082 = vmatpush1.msra.mxu0 0.0
        %1083 = vmatprep.subr.mxu0 0.0
        %1084 = vmatpush1.msra.mxu0 0.0
        %1085 = vmatprep.subr.mxu0 0.0
        %1086 = vmatpush1.msra.mxu0 0.0
        %1087 = vmatprep.subr.mxu0 0.0
        %1088 = vmatpush1.msra.mxu0 0.0
        %1089 = vmatprep.subr.mxu0 0.0
        %1090 = vmatpush1.msra.mxu0 0.0
        %1091 = vmatprep.subr.mxu0 0.0
        %1092 = vmatpush1.msra.mxu0 0.0
        %1093 = vmatprep.subr.mxu0 0.0
        %1094 = vmatpush1.msra.mxu0 0.0
        %1095 = vmatprep.subr.mxu0 0.0
        %1096 = vmatpush1.msra.mxu0 0.0
        %1097 = vmatprep.subr.mxu0 0.0
        %1098 = vmatpush1.msra.mxu0 0.0
        %1099 = vmatprep.subr.mxu0 0.0
        %1100 = vmatpush1.msra.mxu0 0.0
        %1101 = vmatprep.subr.mxu0 0.0
        %1102 = vmatpush1.msra.mxu0 0.0
        %1103 = vmatprep.subr.mxu0 0.0
        %1104 = vmatpush1.msra.mxu0 0.0
        %1105 = vmatprep.subr.mxu0 0.0
        %1106 = vmatpush1.msra.mxu0 0.0
        %1107 = vmatprep.subr.mxu0 0.0
        %1108 = vmatpush1.msra.mxu0 0.0
        %1109 = vmatprep.subr.mxu0 0.0
        %1110 = vmatpush1.msra.mxu0 0.0
        %1111 = vmatprep.subr.mxu0 0.0
        %1112 = vmatpush1.msra.mxu0 0.0
        %1113 = vmatprep.subr.mxu0 0.0
        %1114 = vmatpush1.msra.mxu0 0.0
        %1115 = vmatprep.subr.mxu0 0.0
        %1116 = vmatpush1.msra.mxu0 0.0
        %1117 = vmatprep.subr.mxu0 0.0
        %1118 = vmatpush1.msra.mxu0 0.0
        %1119 = vmatprep.subr.mxu0 0.0
        %1120 = vmatpush1.msra.mxu0 0.0
        %1121 = vmatprep.subr.mxu0 0.0
        %1122 = vmatpush1.msra.mxu0 0.0
        %1123 = vmatprep.mubr.f32.mxu0 0.0
        %1124 = vmatmul.mubr.f32.gmra.mrb[0].mxu0 %v1057
        %v1125 = vpop.f32.mrb[0].mxu0
        %v1126 = vadd.f32 %v480, %v1125
        %v1127 = vpop.f32.mrb[0].mxu0
        %1128 = vdwg.mxu0
        %v1129 = vxor.u32 %v1126, 2147483648
        %v1130 = vmul.f32 %v1129, 1.442695
        %v1131 = vpow.pop %v1130
        %v1132 = vadd.f32 %v1131, 1.0
        %v1133 = vrcp.pop %v1132
        %v1134 = vmul.f32 1.0, %v1133
        %1136 = vrot.lane.b32.xlu0 %v1126, 32
        %v1137 = vpop.permute.xlu0 %1136
        %v1139 = vmul.f32 %v1134, %v1137
        %1141 = vrot.lane.b32.xlu0 %v1139, 64
        %v1142 = vpop.permute.xlu0 %1141
        %v1144 = vadd.f32 %v1126, %v1142
        %v1145 = vtanh.pop %v1144
        %v1146 = vsub.f32 1.0, %v1134
        %1148 = vrot.lane.b32.xlu0 %v1145, 96
        %v1149 = vpop.permute.xlu0 %1148
        %v1151 = vmul.f32 %v1146, %v1149
        %v1152 = vmul.f32 %v1134, %v869
        %v1153 = vadd.f32 %v1151, %v1152
        %1155 = vrot.lane.b32.xlu0 %v1153, 96
        %v1156 = vpop.permute.xlu0 %1155
        %v1157 = vsel %vm396, %v1156, 0
        %1159 = vmatprep.subr.mxu0 0.0
        %1160 = vmatpush1.msra.mxu0 %v387
        %1161 = vmatprep.subr.mxu0 0.0
        %1162 = vmatpush1.msra.mxu0 %v388
        %1163 = vmatprep.subr.mxu0 0.0
        %1164 = vmatpush1.msra.mxu0 %v389
        %1165 = vmatprep.subr.mxu0 0.0
        %1166 = vmatpush1.msra.mxu0 %v390
        %1167 = vmatprep.subr.mxu0 0.0
        %1168 = vmatpush1.msra.mxu0 0.0
        %1169 = vmatprep.subr.mxu0 0.0
        %1170 = vmatpush1.msra.mxu0 0.0
        %1171 = vmatprep.subr.mxu0 0.0
        %1172 = vmatpush1.msra.mxu0 0.0
        %1173 = vmatprep.subr.mxu0 0.0
        %1174 = vmatpush1.msra.mxu0 0.0
        %1175 = vmatprep.subr.mxu0 0.0
        %1176 = vmatpush1.msra.mxu0 0.0
        %1177 = vmatprep.subr.mxu0 0.0
        %1178 = vmatpush1.msra.mxu0 0.0
        %1179 = vmatprep.subr.mxu0 0.0
        %1180 = vmatpush1.msra.mxu0 0.0
        %1181 = vmatprep.subr.mxu0 0.0
        %1182 = vmatpush1.msra.mxu0 0.0
        %1183 = vmatprep.subr.mxu0 0.0
        %1184 = vmatpush1.msra.mxu0 0.0
        %1185 = vmatprep.subr.mxu0 0.0
        %1186 = vmatpush1.msra.mxu0 0.0
        %1187 = vmatprep.subr.mxu0 0.0
        %1188 = vmatpush1.msra.mxu0 0.0
        %1189 = vmatprep.subr.mxu0 0.0
        %1190 = vmatpush1.msra.mxu0 0.0
        %1191 = vmatprep.subr.mxu0 0.0
        %1192 = vmatpush1.msra.mxu0 0.0
        %1193 = vmatprep.subr.mxu0 0.0
        %1194 = vmatpush1.msra.mxu0 0.0
        %1195 = vmatprep.subr.mxu0 0.0
        %1196 = vmatpush1.msra.mxu0 0.0
        %1197 = vmatprep.subr.mxu0 0.0
        %1198 = vmatpush1.msra.mxu0 0.0
        %1199 = vmatprep.subr.mxu0 0.0
        %1200 = vmatpush1.msra.mxu0 0.0
        %1201 = vmatprep.subr.mxu0 0.0
        %1202 = vmatpush1.msra.mxu0 0.0
        %1203 = vmatprep.subr.mxu0 0.0
        %1204 = vmatpush1.msra.mxu0 0.0
        %1205 = vmatprep.subr.mxu0 0.0
        %1206 = vmatpush1.msra.mxu0 0.0
        %1207 = vmatprep.subr.mxu0 0.0
        %1208 = vmatpush1.msra.mxu0 0.0
        %1209 = vmatprep.subr.mxu0 0.0
        %1210 = vmatpush1.msra.mxu0 0.0
        %1211 = vmatprep.subr.mxu0 0.0
        %1212 = vmatpush1.msra.mxu0 0.0
        %1213 = vmatprep.subr.mxu0 0.0
        %1214 = vmatpush1.msra.mxu0 0.0
        %1215 = vmatprep.subr.mxu0 0.0
        %1216 = vmatpush1.msra.mxu0 0.0
        %1217 = vmatprep.subr.mxu0 0.0
        %1218 = vmatpush1.msra.mxu0 0.0
        %1219 = vmatprep.subr.mxu0 0.0
        %1220 = vmatpush1.msra.mxu0 0.0
        %1221 = vmatprep.subr.mxu0 0.0
        %1222 = vmatpush1.msra.mxu0 0.0
        %1223 = vmatprep.mubr.f32.mxu0 0.0
        %1224 = vmatmul.mubr.f32.gmra.mrb[0].mxu0 %v1157
        %v1225 = vpop.f32.mrb[0].mxu0
        %v1226 = vadd.f32 %v585, %v1225
        %v1227 = vpop.f32.mrb[0].mxu0
        %1228 = vdwg.mxu0
        %v1229 = vsel %vm396, %v1226, -inf
        %1230 = vmax.xlane.f32.xlu0 %v1229
        %v1231 = vpop.xlane.xlu0 %1230
        %v1232 = vsub.f32 %v1226, %v1231
        %v1233 = vmul.f32 %v1232, 1.442695
        %v1234 = vpow.pop %v1233
        %v1235 = vsel %vm396, %v1234, 0.0
        %1236 = vadd.xlane.f32.xlu0 %v1235
        %v1237 = vpop.xlane.xlu0 %1236
        %v1238 = vlog2.pop %v1237
        %v1239 = vmul.f32 %v1238, 0.6931472
        %v1240 = vsub.f32 %v1232, %v1239
        %vm1241 = vcmp.ge.f32.partialorder %v1226, %v1231
        %v1242 = vsel %vm1241, %v393, 32
        %v1243 = vsel %vm396, %v1242, 2147483647
        %v1244 = vand.u32 %v1243, 65535
        %v1245 = vshra.s32 %v1243, 16
        %v1246 = vcvt.s32.f32 %v1244
        %v1247 = vcvt.s32.f32 %v1245
        %1248 = vmin.xlane.f32.xlu0 %v1247
        %v1249 = vpop.xlane.xlu0 %1248
        %vm1250 = vcmp.eq.f32.partialorder %v1247, %v1249
        %v1251 = vsel %vm1250, %v1246, inf
        %1252 = vmin.xlane.f32.xlu0 %v1251
        %v1253 = vpop.xlane.xlu0 %1252
        %v1254 = vcvt.f32.s32 %v1253
        %v1255 = vcvt.f32.s32 %v1249
        %v1256 = vshll.u32 %v1255, 16
        %v1257 = vadd.s32 %v1256, %v1254
        %vm1258 = vcmp.eq.s32.totalorder %v393, %v1257
        %v1259 = vsel %vm1258, 1, 0
        %v1260 = vcvt.s32.f32 %v1259
        %v1261 = vsel %vm396, %v1240, %v1153
        %v1262 = vsel %vm482, %v1261, 0.0
        %s1263 = scalar_lea.vmem %s373, 16 [#allocation11]
        %1264 = vst [vmem:[%s1263] sm:$0xff] %v1262
        %v1266 = vsel %vm396, %v1260, 0
        %1268 = vmatprep.subr.mxu0 0.0
        %1269 = vmatpush1.msra.mxu0 %v374
        %1270 = vmatprep.subr.mxu0 0.0
        %1271 = vmatpush1.msra.mxu0 %v375
        %1272 = vmatprep.subr.mxu0 0.0
        %1273 = vmatpush1.msra.mxu0 %v376
        %1274 = vmatprep.subr.mxu0 0.0
        %1275 = vmatpush1.msra.mxu0 %v377
        %1276 = vmatprep.subr.mxu0 0.0
        %1277 = vmatpush1.msra.mxu0 0.0
        %1278 = vmatprep.subr.mxu0 0.0
        %1279 = vmatpush1.msra.mxu0 0.0
        %1280 = vmatprep.subr.mxu0 0.0
        %1281 = vmatpush1.msra.mxu0 0.0
        %1282 = vmatprep.subr.mxu0 0.0
        %1283 = vmatpush1.msra.mxu0 0.0
        %1284 = vmatprep.subr.mxu0 0.0
        %1285 = vmatpush1.msra.mxu0 0.0
        %1286 = vmatprep.subr.mxu0 0.0
        %1287 = vmatpush1.msra.mxu0 0.0
        %1288 = vmatprep.subr.mxu0 0.0
        %1289 = vmatpush1.msra.mxu0 0.0
        %1290 = vmatprep.subr.mxu0 0.0
        %1291 = vmatpush1.msra.mxu0 0.0
        %1292 = vmatprep.subr.mxu0 0.0
        %1293 = vmatpush1.msra.mxu0 0.0
        %1294 = vmatprep.subr.mxu0 0.0
        %1295 = vmatpush1.msra.mxu0 0.0
        %1296 = vmatprep.subr.mxu0 0.0
        %1297 = vmatpush1.msra.mxu0 0.0
        %1298 = vmatprep.subr.mxu0 0.0
        %1299 = vmatpush1.msra.mxu0 0.0
        %1300 = vmatprep.subr.mxu0 0.0
        %1301 = vmatpush1.msra.mxu0 0.0
        %1302 = vmatprep.subr.mxu0 0.0
        %1303 = vmatpush1.msra.mxu0 0.0
        %1304 = vmatprep.subr.mxu0 0.0
        %1305 = vmatpush1.msra.mxu0 0.0
        %1306 = vmatprep.subr.mxu0 0.0
        %1307 = vmatpush1.msra.mxu0 0.0
        %1308 = vmatprep.subr.mxu0 0.0
        %1309 = vmatpush1.msra.mxu0 0.0
        %1310 = vmatprep.subr.mxu0 0.0
        %1311 = vmatpush1.msra.mxu0 0.0
        %1312 = vmatprep.subr.mxu0 0.0
        %1313 = vmatpush1.msra.mxu0 0.0
        %1314 = vmatprep.subr.mxu0 0.0
        %1315 = vmatpush1.msra.mxu0 0.0
        %1316 = vmatprep.subr.mxu0 0.0
        %1317 = vmatpush1.msra.mxu0 0.0
        %1318 = vmatprep.subr.mxu0 0.0
        %1319 = vmatpush1.msra.mxu0 0.0
        %1320 = vmatprep.subr.mxu0 0.0
        %1321 = vmatpush1.msra.mxu0 0.0
        %1322 = vmatprep.subr.mxu0 0.0
        %1323 = vmatpush1.msra.mxu0 0.0
        %1324 = vmatprep.subr.mxu0 0.0
        %1325 = vmatpush1.msra.mxu0 0.0
        %1326 = vmatprep.subr.mxu0 0.0
        %1327 = vmatpush1.msra.mxu0 0.0
        %1328 = vmatprep.subr.mxu0 0.0
        %1329 = vmatpush1.msra.mxu0 0.0
        %1330 = vmatprep.subr.mxu0 0.0
        %1331 = vmatpush1.msra.mxu0 0.0
        %1332 = vmatprep.mubr.f32.mxu0 0.0
        %1333 = vmatmul.mubr.f32.gmra.mrb[0].mxu0 %v1266
        %v1334 = vpop.f32.mrb[0].mxu0
        %v1335 = vadd.f32 0.0, %v1334
        %v1336 = vpop.f32.mrb[0].mxu0
        %1337 = vdwg.mxu0
        %v1338 = vmax.f32 %v1335, 0.0
        %v1339 = vsel %vm396, %v1338, %v1153
        %v1341 = vsel %vm482, %v1339, 0
        %1343 = vmatprep.subr.mxu0 0.0
        %1344 = vmatpush1.msra.mxu0 %v378
        %1345 = vmatprep.subr.mxu0 0.0
        %1346 = vmatpush1.msra.mxu0 %v379
        %1347 = vmatprep.subr.mxu0 0.0
        %1348 = vmatpush1.msra.mxu0 %v380
        %1349 = vmatprep.subr.mxu0 0.0
        %1350 = vmatpush1.msra.mxu0 %v381
        %1351 = vmatprep.subr.mxu0 0.0
        %1352 = vmatpush1.msra.mxu0 %v382
        %1353 = vmatprep.subr.mxu0 0.0
        %1354 = vmatpush1.msra.mxu0 %v383
        %1355 = vmatprep.subr.mxu0 0.0
        %1356 = vmatpush1.msra.mxu0 %v384
        %1357 = vmatprep.subr.mxu0 0.0
        %1358 = vmatpush1.msra.mxu0 %v385
        %1359 = vmatprep.subr.mxu0 0.0
        %1360 = vmatpush1.msra.mxu0 0.0
        %1361 = vmatprep.subr.mxu0 0.0
        %1362 = vmatpush1.msra.mxu0 0.0
        %1363 = vmatprep.subr.mxu0 0.0
        %1364 = vmatpush1.msra.mxu0 0.0
        %1365 = vmatprep.subr.mxu0 0.0
        %1366 = vmatpush1.msra.mxu0 0.0
        %1367 = vmatprep.subr.mxu0 0.0
        %1368 = vmatpush1.msra.mxu0 0.0
        %1369 = vmatprep.subr.mxu0 0.0
        %1370 = vmatpush1.msra.mxu0 0.0
        %1371 = vmatprep.subr.mxu0 0.0
        %1372 = vmatpush1.msra.mxu0 0.0
        %1373 = vmatprep.subr.mxu0 0.0
        %1374 = vmatpush1.msra.mxu0 0.0
        %1375 = vmatprep.subr.mxu0 0.0
        %1376 = vmatpush1.msra.mxu0 0.0
        %1377 = vmatprep.subr.mxu0 0.0
        %1378 = vmatpush1.msra.mxu0 0.0
        %1379 = vmatprep.subr.mxu0 0.0
        %1380 = vmatpush1.msra.mxu0 0.0
        %1381 = vmatprep.subr.mxu0 0.0
        %1382 = vmatpush1.msra.mxu0 0.0
        %1383 = vmatprep.subr.mxu0 0.0
        %1384 = vmatpush1.msra.mxu0 0.0
        %1385 = vmatprep.subr.mxu0 0.0
        %1386 = vmatpush1.msra.mxu0 0.0
        %1387 = vmatprep.subr.mxu0 0.0
        %1388 = vmatpush1.msra.mxu0 0.0
        %1389 = vmatprep.subr.mxu0 0.0
        %1390 = vmatpush1.msra.mxu0 0.0
        %1391 = vmatprep.subr.mxu0 0.0
        %1392 = vmatpush1.msra.mxu0 0.0
        %1393 = vmatprep.subr.mxu0 0.0
        %1394 = vmatpush1.msra.mxu0 0.0
        %1395 = vmatprep.subr.mxu0 0.0
        %1396 = vmatpush1.msra.mxu0 0.0
        %1397 = vmatprep.subr.mxu0 0.0
        %1398 = vmatpush1.msra.mxu0 0.0
        %1399 = vmatprep.subr.mxu0 0.0
        %1400 = vmatpush1.msra.mxu0 0.0
        %1401 = vmatprep.subr.mxu0 0.0
        %1402 = vmatpush1.msra.mxu0 0.0
        %1403 = vmatprep.subr.mxu0 0.0
        %1404 = vmatpush1.msra.mxu0 0.0
        %1405 = vmatprep.subr.mxu0 0.0
        %1406 = vmatpush1.msra.mxu0 0.0
        %1407 = vmatprep.mubr.f32.mxu0 0.0
        %1408 = vmatmul.mubr.f32.gmra.mrb[0].mxu0 %v1341
        %v1409 = vpop.f32.mrb[0].mxu0
        %v1410 = vadd.f32 %v480, %v1409
        %v1411 = vpop.f32.mrb[0].mxu0
        %1412 = vdwg.mxu0
        %v1413 = vxor.u32 %v1410, 2147483648
        %v1414 = vmul.f32 %v1413, 1.442695
        %v1415 = vpow.pop %v1414
        %v1416 = vadd.f32 %v1415, 1.0
        %v1417 = vrcp.pop %v1416
        %v1418 = vmul.f32 1.0, %v1417
        %1420 = vrot.lane.b32.xlu0 %v1410, 32
        %v1421 = vpop.permute.xlu0 %1420
        %v1423 = vmul.f32 %v1418, %v1421
        %1425 = vrot.lane.b32.xlu0 %v1423, 64
        %v1426 = vpop.permute.xlu0 %1425
        %v1428 = vadd.f32 %v1410, %v1426
        %v1429 = vtanh.pop %v1428
        %v1430 = vsub.f32 1.0, %v1418
        %1432 = vrot.lane.b32.xlu0 %v1429, 96
        %v1433 = vpop.permute.xlu0 %1432
        %v1435 = vmul.f32 %v1430, %v1433
        %v1436 = vmul.f32 %v1418, %v1153
        %v1437 = vadd.f32 %v1435, %v1436
        %1439 = vrot.lane.b32.xlu0 %v1437, 96
        %v1440 = vpop.permute.xlu0 %1439
        %v1441 = vsel %vm396, %v1440, 0
        %1443 = vmatprep.subr.mxu0 0.0
        %1444 = vmatpush1.msra.mxu0 %v387
        %1445 = vmatprep.subr.mxu0 0.0
        %1446 = vmatpush1.msra.mxu0 %v388
        %1447 = vmatprep.subr.mxu0 0.0
        %1448 = vmatpush1.msra.mxu0 %v389
        %1449 = vmatprep.subr.mxu0 0.0
        %1450 = vmatpush1.msra.mxu0 %v390
        %1451 = vmatprep.subr.mxu0 0.0
        %1452 = vmatpush1.msra.mxu0 0.0
        %1453 = vmatprep.subr.mxu0 0.0
        %1454 = vmatpush1.msra.mxu0 0.0
        %1455 = vmatprep.subr.mxu0 0.0
        %1456 = vmatpush1.msra.mxu0 0.0
        %1457 = vmatprep.subr.mxu0 0.0
        %1458 = vmatpush1.msra.mxu0 0.0
        %1459 = vmatprep.subr.mxu0 0.0
        %1460 = vmatpush1.msra.mxu0 0.0
        %1461 = vmatprep.subr.mxu0 0.0
        %1462 = vmatpush1.msra.mxu0 0.0
        %1463 = vmatprep.subr.mxu0 0.0
        %1464 = vmatpush1.msra.mxu0 0.0
        %1465 = vmatprep.subr.mxu0 0.0
        %1466 = vmatpush1.msra.mxu0 0.0
        %1467 = vmatprep.subr.mxu0 0.0
        %1468 = vmatpush1.msra.mxu0 0.0
        %1469 = vmatprep.subr.mxu0 0.0
        %1470 = vmatpush1.msra.mxu0 0.0
        %1471 = vmatprep.subr.mxu0 0.0
        %1472 = vmatpush1.msra.mxu0 0.0
        %1473 = vmatprep.subr.mxu0 0.0
        %1474 = vmatpush1.msra.mxu0 0.0
        %1475 = vmatprep.subr.mxu0 0.0
        %1476 = vmatpush1.msra.mxu0 0.0
        %1477 = vmatprep.subr.mxu0 0.0
        %1478 = vmatpush1.msra.mxu0 0.0
        %1479 = vmatprep.subr.mxu0 0.0
        %1480 = vmatpush1.msra.mxu0 0.0
        %1481 = vmatprep.subr.mxu0 0.0
        %1482 = vmatpush1.msra.mxu0 0.0
        %1483 = vmatprep.subr.mxu0 0.0
        %1484 = vmatpush1.msra.mxu0 0.0
        %1485 = vmatprep.subr.mxu0 0.0
        %1486 = vmatpush1.msra.mxu0 0.0
        %1487 = vmatprep.subr.mxu0 0.0
        %1488 = vmatpush1.msra.mxu0 0.0
        %1489 = vmatprep.subr.mxu0 0.0
        %1490 = vmatpush1.msra.mxu0 0.0
        %1491 = vmatprep.subr.mxu0 0.0
        %1492 = vmatpush1.msra.mxu0 0.0
        %1493 = vmatprep.subr.mxu0 0.0
        %1494 = vmatpush1.msra.mxu0 0.0
        %1495 = vmatprep.subr.mxu0 0.0
        %1496 = vmatpush1.msra.mxu0 0.0
        %1497 = vmatprep.subr.mxu0 0.0
        %1498 = vmatpush1.msra.mxu0 0.0
        %1499 = vmatprep.subr.mxu0 0.0
        %1500 = vmatpush1.msra.mxu0 0.0
        %1501 = vmatprep.subr.mxu0 0.0
        %1502 = vmatpush1.msra.mxu0 0.0
        %1503 = vmatprep.subr.mxu0 0.0
        %1504 = vmatpush1.msra.mxu0 0.0
        %1505 = vmatprep.subr.mxu0 0.0
        %1506 = vmatpush1.msra.mxu0 0.0
        %1507 = vmatprep.mubr.f32.mxu0 0.0
        %1508 = vmatmul.mubr.f32.gmra.mrb[0].mxu0 %v1441
        %v1509 = vpop.f32.mrb[0].mxu0
        %v1510 = vadd.f32 %v585, %v1509
        %v1511 = vpop.f32.mrb[0].mxu0
        %1512 = vdwg.mxu0
        %v1513 = vsel %vm396, %v1510, -inf
        %1514 = vmax.xlane.f32.xlu0 %v1513
        %v1515 = vpop.xlane.xlu0 %1514
        %v1516 = vsub.f32 %v1510, %v1515
        %v1517 = vmul.f32 %v1516, 1.442695
        %v1518 = vpow.pop %v1517
        %v1519 = vsel %vm396, %v1518, 0.0
        %1520 = vadd.xlane.f32.xlu0 %v1519
        %v1521 = vpop.xlane.xlu0 %1520
        %v1522 = vlog2.pop %v1521
        %v1523 = vmul.f32 %v1522, 0.6931472
        %v1524 = vsub.f32 %v1516, %v1523
        %vm1525 = vcmp.ge.f32.partialorder %v1510, %v1515
        %v1526 = vsel %vm1525, %v393, 32
        %v1527 = vsel %vm396, %v1526, 2147483647
        %v1528 = vand.u32 %v1527, 65535
        %v1529 = vshra.s32 %v1527, 16
        %v1530 = vcvt.s32.f32 %v1528
        %v1531 = vcvt.s32.f32 %v1529
        %1532 = vmin.xlane.f32.xlu0 %v1531
        %v1533 = vpop.xlane.xlu0 %1532
        %vm1534 = vcmp.eq.f32.partialorder %v1531, %v1533
        %v1535 = vsel %vm1534, %v1530, inf
        %1536 = vmin.xlane.f32.xlu0 %v1535
        %v1537 = vpop.xlane.xlu0 %1536
        %v1538 = vcvt.f32.s32 %v1537
        %v1539 = vcvt.f32.s32 %v1533
        %v1540 = vshll.u32 %v1539, 16
        %v1541 = vadd.s32 %v1540, %v1538
        %vm1542 = vcmp.eq.s32.totalorder %v393, %v1541
        %v1543 = vsel %vm1542, 1, 0
        %v1544 = vcvt.s32.f32 %v1543
        %v1545 = vsel %vm396, %v1524, %v1437
        %v1546 = vsel %vm482, %v1545, 0.0
        %s1547 = scalar_lea.vmem %s373, 24 [#allocation11]
        %1548 = vst [vmem:[%s1547] sm:$0xff] %v1546
        %v1550 = vsel %vm396, %v1544, 0
        %1552 = vmatprep.subr.mxu0 0.0
        %1553 = vmatpush1.msra.mxu0 %v374
        %1554 = vmatprep.subr.mxu0 0.0
        %1555 = vmatpush1.msra.mxu0 %v375
        %1556 = vmatprep.subr.mxu0 0.0
        %1557 = vmatpush1.msra.mxu0 %v376
        %1558 = vmatprep.subr.mxu0 0.0
        %1559 = vmatpush1.msra.mxu0 %v377
        %1560 = vmatprep.subr.mxu0 0.0
        %1561 = vmatpush1.msra.mxu0 0.0
        %1562 = vmatprep.subr.mxu0 0.0
        %1563 = vmatpush1.msra.mxu0 0.0
        %1564 = vmatprep.subr.mxu0 0.0
        %1565 = vmatpush1.msra.mxu0 0.0
        %1566 = vmatprep.subr.mxu0 0.0
        %1567 = vmatpush1.msra.mxu0 0.0
        %1568 = vmatprep.subr.mxu0 0.0
        %1569 = vmatpush1.msra.mxu0 0.0
        %1570 = vmatprep.subr.mxu0 0.0
        %1571 = vmatpush1.msra.mxu0 0.0
        %1572 = vmatprep.subr.mxu0 0.0
        %1573 = vmatpush1.msra.mxu0 0.0
        %1574 = vmatprep.subr.mxu0 0.0
        %1575 = vmatpush1.msra.mxu0 0.0
        %1576 = vmatprep.subr.mxu0 0.0
        %1577 = vmatpush1.msra.mxu0 0.0
        %1578 = vmatprep.subr.mxu0 0.0
        %1579 = vmatpush1.msra.mxu0 0.0
        %1580 = vmatprep.subr.mxu0 0.0
        %1581 = vmatpush1.msra.mxu0 0.0
        %1582 = vmatprep.subr.mxu0 0.0
        %1583 = vmatpush1.msra.mxu0 0.0
        %1584 = vmatprep.subr.mxu0 0.0
        %1585 = vmatpush1.msra.mxu0 0.0
        %1586 = vmatprep.subr.mxu0 0.0
        %1587 = vmatpush1.msra.mxu0 0.0
        %1588 = vmatprep.subr.mxu0 0.0
        %1589 = vmatpush1.msra.mxu0 0.0
        %1590 = vmatprep.subr.mxu0 0.0
        %1591 = vmatpush1.msra.mxu0 0.0
        %1592 = vmatprep.subr.mxu0 0.0
        %1593 = vmatpush1.msra.mxu0 0.0
        %1594 = vmatprep.subr.mxu0 0.0
        %1595 = vmatpush1.msra.mxu0 0.0
        %1596 = vmatprep.subr.mxu0 0.0
        %1597 = vmatpush1.msra.mxu0 0.0
        %1598 = vmatprep.subr.mxu0 0.0
        %1599 = vmatpush1.msra.mxu0 0.0
        %1600 = vmatprep.subr.mxu0 0.0
        %1601 = vmatpush1.msra.mxu0 0.0
        %1602 = vmatprep.subr.mxu0 0.0
        %1603 = vmatpush1.msra.mxu0 0.0
        %1604 = vmatprep.subr.mxu0 0.0
        %1605 = vmatpush1.msra.mxu0 0.0
        %1606 = vmatprep.subr.mxu0 0.0
        %1607 = vmatpush1.msra.mxu0 0.0
        %1608 = vmatprep.subr.mxu0 0.0
        %1609 = vmatpush1.msra.mxu0 0.0
        %1610 = vmatprep.subr.mxu0 0.0
        %1611 = vmatpush1.msra.mxu0 0.0
        %1612 = vmatprep.subr.mxu0 0.0
        %1613 = vmatpush1.msra.mxu0 0.0
        %1614 = vmatprep.subr.mxu0 0.0
        %1615 = vmatpush1.msra.mxu0 0.0
        %1616 = vmatprep.mubr.f32.mxu0 0.0
        %1617 = vmatmul.mubr.f32.gmra.mrb[0].mxu0 %v1550
        %v1618 = vpop.f32.mrb[0].mxu0
        %v1619 = vadd.f32 0.0, %v1618
        %v1620 = vpop.f32.mrb[0].mxu0
        %1621 = vdwg.mxu0
        %v1622 = vmax.f32 %v1619, 0.0
        %v1623 = vsel %vm396, %v1622, %v1437
        %v1625 = vsel %vm482, %v1623, 0
        %1627 = vmatprep.subr.mxu0 0.0
        %1628 = vmatpush1.msra.mxu0 %v378
        %1629 = vmatprep.subr.mxu0 0.0
        %1630 = vmatpush1.msra.mxu0 %v379
        %1631 = vmatprep.subr.mxu0 0.0
        %1632 = vmatpush1.msra.mxu0 %v380
        %1633 = vmatprep.subr.mxu0 0.0
        %1634 = vmatpush1.msra.mxu0 %v381
        %1635 = vmatprep.subr.mxu0 0.0
        %1636 = vmatpush1.msra.mxu0 %v382
        %1637 = vmatprep.subr.mxu0 0.0
        %1638 = vmatpush1.msra.mxu0 %v383
        %1639 = vmatprep.subr.mxu0 0.0
        %1640 = vmatpush1.msra.mxu0 %v384
        %1641 = vmatprep.subr.mxu0 0.0
        %1642 = vmatpush1.msra.mxu0 %v385
        %1643 = vmatprep.subr.mxu0 0.0
        %1644 = vmatpush1.msra.mxu0 0.0
        %1645 = vmatprep.subr.mxu0 0.0
        %1646 = vmatpush1.msra.mxu0 0.0
        %1647 = vmatprep.subr.mxu0 0.0
        %1648 = vmatpush1.msra.mxu0 0.0
        %1649 = vmatprep.subr.mxu0 0.0
        %1650 = vmatpush1.msra.mxu0 0.0
        %1651 = vmatprep.subr.mxu0 0.0
        %1652 = vmatpush1.msra.mxu0 0.0
        %1653 = vmatprep.subr.mxu0 0.0
        %1654 = vmatpush1.msra.mxu0 0.0
        %1655 = vmatprep.subr.mxu0 0.0
        %1656 = vmatpush1.msra.mxu0 0.0
        %1657 = vmatprep.subr.mxu0 0.0
        %1658 = vmatpush1.msra.mxu0 0.0
        %1659 = vmatprep.subr.mxu0 0.0
        %1660 = vmatpush1.msra.mxu0 0.0
        %1661 = vmatprep.subr.mxu0 0.0
        %1662 = vmatpush1.msra.mxu0 0.0
        %1663 = vmatprep.subr.mxu0 0.0
        %1664 = vmatpush1.msra.mxu0 0.0
        %1665 = vmatprep.subr.mxu0 0.0
        %1666 = vmatpush1.msra.mxu0 0.0
        %1667 = vmatprep.subr.mxu0 0.0
        %1668 = vmatpush1.msra.mxu0 0.0
        %1669 = vmatprep.subr.mxu0 0.0
        %1670 = vmatpush1.msra.mxu0 0.0
        %1671 = vmatprep.subr.mxu0 0.0
        %1672 = vmatpush1.msra.mxu0 0.0
        %1673 = vmatprep.subr.mxu0 0.0
        %1674 = vmatpush1.msra.mxu0 0.0
        %1675 = vmatprep.subr.mxu0 0.0
        %1676 = vmatpush1.msra.mxu0 0.0
        %1677 = vmatprep.subr.mxu0 0.0
        %1678 = vmatpush1.msra.mxu0 0.0
        %1679 = vmatprep.subr.mxu0 0.0
        %1680 = vmatpush1.msra.mxu0 0.0
        %1681 = vmatprep.subr.mxu0 0.0
        %1682 = vmatpush1.msra.mxu0 0.0
        %1683 = vmatprep.subr.mxu0 0.0
        %1684 = vmatpush1.msra.mxu0 0.0
        %1685 = vmatprep.subr.mxu0 0.0
        %1686 = vmatpush1.msra.mxu0 0.0
        %1687 = vmatprep.subr.mxu0 0.0
        %1688 = vmatpush1.msra.mxu0 0.0
        %1689 = vmatprep.subr.mxu0 0.0
        %1690 = vmatpush1.msra.mxu0 0.0
        %1691 = vmatprep.mubr.f32.mxu0 0.0
        %1692 = vmatmul.mubr.f32.gmra.mrb[0].mxu0 %v1625
        %v1693 = vpop.f32.mrb[0].mxu0
        %v1694 = vadd.f32 %v480, %v1693
        %v1695 = vpop.f32.mrb[0].mxu0
        %1696 = vdwg.mxu0
        %v1697 = vxor.u32 %v1694, 2147483648
        %v1698 = vmul.f32 %v1697, 1.442695
        %v1699 = vpow.pop %v1698
        %v1700 = vadd.f32 %v1699, 1.0
        %v1701 = vrcp.pop %v1700
        %v1702 = vmul.f32 1.0, %v1701
        %1704 = vrot.lane.b32.xlu0 %v1694, 32
        %v1705 = vpop.permute.xlu0 %1704
        %v1707 = vmul.f32 %v1702, %v1705
        %1709 = vrot.lane.b32.xlu0 %v1707, 64
        %v1710 = vpop.permute.xlu0 %1709
        %v1712 = vadd.f32 %v1694, %v1710
        %v1713 = vtanh.pop %v1712
        %v1714 = vsub.f32 1.0, %v1702
        %1716 = vrot.lane.b32.xlu0 %v1713, 96
        %v1717 = vpop.permute.xlu0 %1716
        %v1719 = vmul.f32 %v1714, %v1717
        %v1720 = vmul.f32 %v1702, %v1437
        %v1721 = vadd.f32 %v1719, %v1720
        %1723 = vrot.lane.b32.xlu0 %v1721, 96
        %v1724 = vpop.permute.xlu0 %1723
        %v1725 = vsel %vm396, %v1724, 0
        %1727 = vmatprep.subr.mxu0 0.0
        %1728 = vmatpush1.msra.mxu0 %v387
        %1729 = vmatprep.subr.mxu0 0.0
        %1730 = vmatpush1.msra.mxu0 %v388
        %1731 = vmatprep.subr.mxu0 0.0
        %1732 = vmatpush1.msra.mxu0 %v389
        %1733 = vmatprep.subr.mxu0 0.0
        %1734 = vmatpush1.msra.mxu0 %v390
        %1735 = vmatprep.subr.mxu0 0.0
        %1736 = vmatpush1.msra.mxu0 0.0
        %1737 = vmatprep.subr.mxu0 0.0
        %1738 = vmatpush1.msra.mxu0 0.0
        %1739 = vmatprep.subr.mxu0 0.0
        %1740 = vmatpush1.msra.mxu0 0.0
        %1741 = vmatprep.subr.mxu0 0.0
        %1742 = vmatpush1.msra.mxu0 0.0
        %1743 = vmatprep.subr.mxu0 0.0
        %1744 = vmatpush1.msra.mxu0 0.0
        %1745 = vmatprep.subr.mxu0 0.0
        %1746 = vmatpush1.msra.mxu0 0.0
        %1747 = vmatprep.subr.mxu0 0.0
        %1748 = vmatpush1.msra.mxu0 0.0
        %1749 = vmatprep.subr.mxu0 0.0
        %1750 = vmatpush1.msra.mxu0 0.0
        %1751 = vmatprep.subr.mxu0 0.0
        %1752 = vmatpush1.msra.mxu0 0.0
        %1753 = vmatprep.subr.mxu0 0.0
        %1754 = vmatpush1.msra.mxu0 0.0
        %1755 = vmatprep.subr.mxu0 0.0
        %1756 = vmatpush1.msra.mxu0 0.0
        %1757 = vmatprep.subr.mxu0 0.0
        %1758 = vmatpush1.msra.mxu0 0.0
        %1759 = vmatprep.subr.mxu0 0.0
        %1760 = vmatpush1.msra.mxu0 0.0
        %1761 = vmatprep.subr.mxu0 0.0
        %1762 = vmatpush1.msra.mxu0 0.0
        %1763 = vmatprep.subr.mxu0 0.0
        %1764 = vmatpush1.msra.mxu0 0.0
        %1765 = vmatprep.subr.mxu0 0.0
        %1766 = vmatpush1.msra.mxu0 0.0
        %1767 = vmatprep.subr.mxu0 0.0
        %1768 = vmatpush1.msra.mxu0 0.0
        %1769 = vmatprep.subr.mxu0 0.0
        %1770 = vmatpush1.msra.mxu0 0.0
        %1771 = vmatprep.subr.mxu0 0.0
        %1772 = vmatpush1.msra.mxu0 0.0
        %1773 = vmatprep.subr.mxu0 0.0
        %1774 = vmatpush1.msra.mxu0 0.0
        %1775 = vmatprep.subr.mxu0 0.0
        %1776 = vmatpush1.msra.mxu0 0.0
        %1777 = vmatprep.subr.mxu0 0.0
        %1778 = vmatpush1.msra.mxu0 0.0
        %1779 = vmatprep.subr.mxu0 0.0
        %1780 = vmatpush1.msra.mxu0 0.0
        %1781 = vmatprep.subr.mxu0 0.0
        %1782 = vmatpush1.msra.mxu0 0.0
        %1783 = vmatprep.subr.mxu0 0.0
        %1784 = vmatpush1.msra.mxu0 0.0
        %1785 = vmatprep.subr.mxu0 0.0
        %1786 = vmatpush1.msra.mxu0 0.0
        %1787 = vmatprep.subr.mxu0 0.0
        %1788 = vmatpush1.msra.mxu0 0.0
        %1789 = vmatprep.subr.mxu0 0.0
        %1790 = vmatpush1.msra.mxu0 0.0
        %1791 = vmatprep.mubr.f32.mxu0 0.0
        %1792 = vmatmul.mubr.f32.gmra.mrb[0].mxu0 %v1725
        %v1793 = vpop.f32.mrb[0].mxu0
        %v1794 = vadd.f32 %v585, %v1793
        %v1795 = vpop.f32.mrb[0].mxu0
        %1796 = vdwg.mxu0
        %v1797 = vsel %vm396, %v1794, -inf
        %1798 = vmax.xlane.f32.xlu0 %v1797
        %v1799 = vpop.xlane.xlu0 %1798
        %v1800 = vsub.f32 %v1794, %v1799
        %v1801 = vmul.f32 %v1800, 1.442695
        %v1802 = vpow.pop %v1801
        %v1803 = vsel %vm396, %v1802, 0.0
        %1804 = vadd.xlane.f32.xlu0 %v1803
        %v1805 = vpop.xlane.xlu0 %1804
        %v1806 = vlog2.pop %v1805
        %v1807 = vmul.f32 %v1806, 0.6931472
        %v1808 = vsub.f32 %v1800, %v1807
        %vm1809 = vcmp.ge.f32.partialorder %v1794, %v1799
        %v1810 = vsel %vm1809, %v393, 32
        %v1811 = vsel %vm396, %v1810, 2147483647
        %v1812 = vand.u32 %v1811, 65535
        %v1813 = vshra.s32 %v1811, 16
        %v1814 = vcvt.s32.f32 %v1812
        %v1815 = vcvt.s32.f32 %v1813
        %1816 = vmin.xlane.f32.xlu0 %v1815
        %v1817 = vpop.xlane.xlu0 %1816
        %vm1818 = vcmp.eq.f32.partialorder %v1815, %v1817
        %v1819 = vsel %vm1818, %v1814, inf
        %1820 = vmin.xlane.f32.xlu0 %v1819
        %v1821 = vpop.xlane.xlu0 %1820
        %v1822 = vcvt.f32.s32 %v1821
        %v1823 = vcvt.f32.s32 %v1817
        %v1824 = vshll.u32 %v1823, 16
        %v1825 = vadd.s32 %v1824, %v1822
        %vm1826 = vcmp.eq.s32.totalorder %v393, %v1825
        %v1827 = vsel %vm1826, 1, 0
        %v1828 = vcvt.s32.f32 %v1827
        %v1829 = vsel %vm396, %v1808, %v1721
        %v1830 = vsel %vm482, %v1829, 0.0
        %s1831 = scalar_lea.vmem %s373, 32 [#allocation11]
        %1832 = vst [vmem:[%s1831] sm:$0xff] %v1830
        %v1834 = vsel %vm396, %v1828, 0
        %1836 = vmatprep.subr.mxu0 0.0
        %1837 = vmatpush1.msra.mxu0 %v374
        %1838 = vmatprep.subr.mxu0 0.0
        %1839 = vmatpush1.msra.mxu0 %v375
        %1840 = vmatprep.subr.mxu0 0.0
        %1841 = vmatpush1.msra.mxu0 %v376
        %1842 = vmatprep.subr.mxu0 0.0
        %1843 = vmatpush1.msra.mxu0 %v377
        %1844 = vmatprep.subr.mxu0 0.0
        %1845 = vmatpush1.msra.mxu0 0.0
        %1846 = vmatprep.subr.mxu0 0.0
        %1847 = vmatpush1.msra.mxu0 0.0
        %1848 = vmatprep.subr.mxu0 0.0
        %1849 = vmatpush1.msra.mxu0 0.0
        %1850 = vmatprep.subr.mxu0 0.0
        %1851 = vmatpush1.msra.mxu0 0.0
        %1852 = vmatprep.subr.mxu0 0.0
        %1853 = vmatpush1.msra.mxu0 0.0
        %1854 = vmatprep.subr.mxu0 0.0
        %1855 = vmatpush1.msra.mxu0 0.0
        %1856 = vmatprep.subr.mxu0 0.0
        %1857 = vmatpush1.msra.mxu0 0.0
        %1858 = vmatprep.subr.mxu0 0.0
        %1859 = vmatpush1.msra.mxu0 0.0
        %1860 = vmatprep.subr.mxu0 0.0
        %1861 = vmatpush1.msra.mxu0 0.0
        %1862 = vmatprep.subr.mxu0 0.0
        %1863 = vmatpush1.msra.mxu0 0.0
        %1864 = vmatprep.subr.mxu0 0.0
        %1865 = vmatpush1.msra.mxu0 0.0
        %1866 = vmatprep.subr.mxu0 0.0
        %1867 = vmatpush1.msra.mxu0 0.0
        %1868 = vmatprep.subr.mxu0 0.0
        %1869 = vmatpush1.msra.mxu0 0.0
        %1870 = vmatprep.subr.mxu0 0.0
        %1871 = vmatpush1.msra.mxu0 0.0
        %1872 = vmatprep.subr.mxu0 0.0
        %1873 = vmatpush1.msra.mxu0 0.0
        %1874 = vmatprep.subr.mxu0 0.0
        %1875 = vmatpush1.msra.mxu0 0.0
        %1876 = vmatprep.subr.mxu0 0.0
        %1877 = vmatpush1.msra.mxu0 0.0
        %1878 = vmatprep.subr.mxu0 0.0
        %1879 = vmatpush1.msra.mxu0 0.0
        %1880 = vmatprep.subr.mxu0 0.0
        %1881 = vmatpush1.msra.mxu0 0.0
        %1882 = vmatprep.subr.mxu0 0.0
        %1883 = vmatpush1.msra.mxu0 0.0
        %1884 = vmatprep.subr.mxu0 0.0
        %1885 = vmatpush1.msra.mxu0 0.0
        %1886 = vmatprep.subr.mxu0 0.0
        %1887 = vmatpush1.msra.mxu0 0.0
        %1888 = vmatprep.subr.mxu0 0.0
        %1889 = vmatpush1.msra.mxu0 0.0
        %1890 = vmatprep.subr.mxu0 0.0
        %1891 = vmatpush1.msra.mxu0 0.0
        %1892 = vmatprep.subr.mxu0 0.0
        %1893 = vmatpush1.msra.mxu0 0.0
        %1894 = vmatprep.subr.mxu0 0.0
        %1895 = vmatpush1.msra.mxu0 0.0
        %1896 = vmatprep.subr.mxu0 0.0
        %1897 = vmatpush1.msra.mxu0 0.0
        %1898 = vmatprep.subr.mxu0 0.0
        %1899 = vmatpush1.msra.mxu0 0.0
        %1900 = vmatprep.mubr.f32.mxu0 0.0
        %1901 = vmatmul.mubr.f32.gmra.mrb[0].mxu0 %v1834
        %v1902 = vpop.f32.mrb[0].mxu0
        %v1903 = vadd.f32 0.0, %v1902
        %v1904 = vpop.f32.mrb[0].mxu0
        %1905 = vdwg.mxu0
        %v1906 = vmax.f32 %v1903, 0.0
        %v1907 = vsel %vm396, %v1906, %v1721
        %v1909 = vsel %vm482, %v1907, 0
        %1911 = vmatprep.subr.mxu0 0.0
        %1912 = vmatpush1.msra.mxu0 %v378
        %1913 = vmatprep.subr.mxu0 0.0
        %1914 = vmatpush1.msra.mxu0 %v379
        %1915 = vmatprep.subr.mxu0 0.0
        %1916 = vmatpush1.msra.mxu0 %v380
        %1917 = vmatprep.subr.mxu0 0.0
        %1918 = vmatpush1.msra.mxu0 %v381
        %1919 = vmatprep.subr.mxu0 0.0
        %1920 = vmatpush1.msra.mxu0 %v382
        %1921 = vmatprep.subr.mxu0 0.0
        %1922 = vmatpush1.msra.mxu0 %v383
        %1923 = vmatprep.subr.mxu0 0.0
        %1924 = vmatpush1.msra.mxu0 %v384
        %1925 = vmatprep.subr.mxu0 0.0
        %1926 = vmatpush1.msra.mxu0 %v385
        %1927 = vmatprep.subr.mxu0 0.0
        %1928 = vmatpush1.msra.mxu0 0.0
        %1929 = vmatprep.subr.mxu0 0.0
        %1930 = vmatpush1.msra.mxu0 0.0
        %1931 = vmatprep.subr.mxu0 0.0
        %1932 = vmatpush1.msra.mxu0 0.0
        %1933 = vmatprep.subr.mxu0 0.0
        %1934 = vmatpush1.msra.mxu0 0.0
        %1935 = vmatprep.subr.mxu0 0.0
        %1936 = vmatpush1.msra.mxu0 0.0
        %1937 = vmatprep.subr.mxu0 0.0
        %1938 = vmatpush1.msra.mxu0 0.0
        %1939 = vmatprep.subr.mxu0 0.0
        %1940 = vmatpush1.msra.mxu0 0.0
        %1941 = vmatprep.subr.mxu0 0.0
        %1942 = vmatpush1.msra.mxu0 0.0
        %1943 = vmatprep.subr.mxu0 0.0
        %1944 = vmatpush1.msra.mxu0 0.0
        %1945 = vmatprep.subr.mxu0 0.0
        %1946 = vmatpush1.msra.mxu0 0.0
        %1947 = vmatprep.subr.mxu0 0.0
        %1948 = vmatpush1.msra.mxu0 0.0
        %1949 = vmatprep.subr.mxu0 0.0
        %1950 = vmatpush1.msra.mxu0 0.0
        %1951 = vmatprep.subr.mxu0 0.0
        %1952 = vmatpush1.msra.mxu0 0.0
        %1953 = vmatprep.subr.mxu0 0.0
        %1954 = vmatpush1.msra.mxu0 0.0
        %1955 = vmatprep.subr.mxu0 0.0
        %1956 = vmatpush1.msra.mxu0 0.0
        %1957 = vmatprep.subr.mxu0 0.0
        %1958 = vmatpush1.msra.mxu0 0.0
        %1959 = vmatprep.subr.mxu0 0.0
        %1960 = vmatpush1.msra.mxu0 0.0
        %1961 = vmatprep.subr.mxu0 0.0
        %1962 = vmatpush1.msra.mxu0 0.0
        %1963 = vmatprep.subr.mxu0 0.0
        %1964 = vmatpush1.msra.mxu0 0.0
        %1965 = vmatprep.subr.mxu0 0.0
        %1966 = vmatpush1.msra.mxu0 0.0
        %1967 = vmatprep.subr.mxu0 0.0
        %1968 = vmatpush1.msra.mxu0 0.0
        %1969 = vmatprep.subr.mxu0 0.0
        %1970 = vmatpush1.msra.mxu0 0.0
        %1971 = vmatprep.subr.mxu0 0.0
        %1972 = vmatpush1.msra.mxu0 0.0
        %1973 = vmatprep.subr.mxu0 0.0
        %1974 = vmatpush1.msra.mxu0 0.0
        %1975 = vmatprep.mubr.f32.mxu0 0.0
        %1976 = vmatmul.mubr.f32.gmra.mrb[0].mxu0 %v1909
        %v1977 = vpop.f32.mrb[0].mxu0
        %v1978 = vadd.f32 %v480, %v1977
        %v1979 = vpop.f32.mrb[0].mxu0
        %1980 = vdwg.mxu0
        %v1981 = vxor.u32 %v1978, 2147483648
        %v1982 = vmul.f32 %v1981, 1.442695
        %v1983 = vpow.pop %v1982
        %v1984 = vadd.f32 %v1983, 1.0
        %v1985 = vrcp.pop %v1984
        %v1986 = vmul.f32 1.0, %v1985
        %1988 = vrot.lane.b32.xlu0 %v1978, 32
        %v1989 = vpop.permute.xlu0 %1988
        %v1991 = vmul.f32 %v1986, %v1989
        %1993 = vrot.lane.b32.xlu0 %v1991, 64
        %v1994 = vpop.permute.xlu0 %1993
        %v1996 = vadd.f32 %v1978, %v1994
        %v1997 = vtanh.pop %v1996
        %v1998 = vsub.f32 1.0, %v1986
        %2000 = vrot.lane.b32.xlu0 %v1997, 96
        %v2001 = vpop.permute.xlu0 %2000
        %v2003 = vmul.f32 %v1998, %v2001
        %v2004 = vmul.f32 %v1986, %v1721
        %v2005 = vadd.f32 %v2003, %v2004
        %2007 = vrot.lane.b32.xlu0 %v2005, 96
        %v2008 = vpop.permute.xlu0 %2007
        %v2009 = vsel %vm396, %v2008, 0
        %2011 = vmatprep.subr.mxu0 0.0
        %2012 = vmatpush1.msra.mxu0 %v387
        %2013 = vmatprep.subr.mxu0 0.0
        %2014 = vmatpush1.msra.mxu0 %v388
        %2015 = vmatprep.subr.mxu0 0.0
        %2016 = vmatpush1.msra.mxu0 %v389
        %2017 = vmatprep.subr.mxu0 0.0
        %2018 = vmatpush1.msra.mxu0 %v390
        %2019 = vmatprep.subr.mxu0 0.0
        %2020 = vmatpush1.msra.mxu0 0.0
        %2021 = vmatprep.subr.mxu0 0.0
        %2022 = vmatpush1.msra.mxu0 0.0
        %2023 = vmatprep.subr.mxu0 0.0
        %2024 = vmatpush1.msra.mxu0 0.0
        %2025 = vmatprep.subr.mxu0 0.0
        %2026 = vmatpush1.msra.mxu0 0.0
        %2027 = vmatprep.subr.mxu0 0.0
        %2028 = vmatpush1.msra.mxu0 0.0
        %2029 = vmatprep.subr.mxu0 0.0
        %2030 = vmatpush1.msra.mxu0 0.0
        %2031 = vmatprep.subr.mxu0 0.0
        %2032 = vmatpush1.msra.mxu0 0.0
        %2033 = vmatprep.subr.mxu0 0.0
        %2034 = vmatpush1.msra.mxu0 0.0
        %2035 = vmatprep.subr.mxu0 0.0
        %2036 = vmatpush1.msra.mxu0 0.0
        %2037 = vmatprep.subr.mxu0 0.0
        %2038 = vmatpush1.msra.mxu0 0.0
        %2039 = vmatprep.subr.mxu0 0.0
        %2040 = vmatpush1.msra.mxu0 0.0
        %2041 = vmatprep.subr.mxu0 0.0
        %2042 = vmatpush1.msra.mxu0 0.0
        %2043 = vmatprep.subr.mxu0 0.0
        %2044 = vmatpush1.msra.mxu0 0.0
        %2045 = vmatprep.subr.mxu0 0.0
        %2046 = vmatpush1.msra.mxu0 0.0
        %2047 = vmatprep.subr.mxu0 0.0
        %2048 = vmatpush1.msra.mxu0 0.0
        %2049 = vmatprep.subr.mxu0 0.0
        %2050 = vmatpush1.msra.mxu0 0.0
        %2051 = vmatprep.subr.mxu0 0.0
        %2052 = vmatpush1.msra.mxu0 0.0
        %2053 = vmatprep.subr.mxu0 0.0
        %2054 = vmatpush1.msra.mxu0 0.0
        %2055 = vmatprep.subr.mxu0 0.0
        %2056 = vmatpush1.msra.mxu0 0.0
        %2057 = vmatprep.subr.mxu0 0.0
        %2058 = vmatpush1.msra.mxu0 0.0
        %2059 = vmatprep.subr.mxu0 0.0
        %2060 = vmatpush1.msra.mxu0 0.0
        %2061 = vmatprep.subr.mxu0 0.0
        %2062 = vmatpush1.msra.mxu0 0.0
        %2063 = vmatprep.subr.mxu0 0.0
        %2064 = vmatpush1.msra.mxu0 0.0
        %2065 = vmatprep.subr.mxu0 0.0
        %2066 = vmatpush1.msra.mxu0 0.0
        %2067 = vmatprep.subr.mxu0 0.0
        %2068 = vmatpush1.msra.mxu0 0.0
        %2069 = vmatprep.subr.mxu0 0.0
        %2070 = vmatpush1.msra.mxu0 0.0
        %2071 = vmatprep.subr.mxu0 0.0
        %2072 = vmatpush1.msra.mxu0 0.0
        %2073 = vmatprep.subr.mxu0 0.0
        %2074 = vmatpush1.msra.mxu0 0.0
        %2075 = vmatprep.mubr.f32.mxu0 0.0
        %2076 = vmatmul.mubr.f32.gmra.mrb[0].mxu0 %v2009
        %v2077 = vpop.f32.mrb[0].mxu0
        %v2078 = vadd.f32 %v585, %v2077
        %v2079 = vpop.f32.mrb[0].mxu0
        %2080 = vdwg.mxu0
        %v2081 = vsel %vm396, %v2078, -inf
        %2082 = vmax.xlane.f32.xlu0 %v2081
        %v2083 = vpop.xlane.xlu0 %2082
        %v2084 = vsub.f32 %v2078, %v2083
        %v2085 = vmul.f32 %v2084, 1.442695
        %v2086 = vpow.pop %v2085
        %v2087 = vsel %vm396, %v2086, 0.0
        %2088 = vadd.xlane.f32.xlu0 %v2087
        %v2089 = vpop.xlane.xlu0 %2088
        %v2090 = vlog2.pop %v2089
        %v2091 = vmul.f32 %v2090, 0.6931472
        %v2092 = vsub.f32 %v2084, %v2091
        %vm2093 = vcmp.ge.f32.partialorder %v2078, %v2083
        %v2094 = vsel %vm2093, %v393, 32
        %v2095 = vsel %vm396, %v2094, 2147483647
        %v2096 = vand.u32 %v2095, 65535
        %v2097 = vshra.s32 %v2095, 16
        %v2098 = vcvt.s32.f32 %v2096
        %v2099 = vcvt.s32.f32 %v2097
        %2100 = vmin.xlane.f32.xlu0 %v2099
        %v2101 = vpop.xlane.xlu0 %2100
        %vm2102 = vcmp.eq.f32.partialorder %v2099, %v2101
        %v2103 = vsel %vm2102, %v2098, inf
        %2104 = vmin.xlane.f32.xlu0 %v2103
        %v2105 = vpop.xlane.xlu0 %2104
        %v2106 = vcvt.f32.s32 %v2105
        %v2107 = vcvt.f32.s32 %v2101
        %v2108 = vshll.u32 %v2107, 16
        %v2109 = vadd.s32 %v2108, %v2106
        %vm2110 = vcmp.eq.s32.totalorder %v393, %v2109
        %v2111 = vsel %vm2110, 1, 0
        %v2112 = vcvt.s32.f32 %v2111
        %v2113 = vsel %vm396, %v2092, %v2005
        %v2114 = vsel %vm482, %v2113, 0.0
        %s2115 = scalar_lea.vmem %s373, 40 [#allocation11]
        %2116 = vst [vmem:[%s2115] sm:$0xff] %v2114
        %v2118 = vsel %vm396, %v2112, 0
        %2120 = vmatprep.subr.mxu0 0.0
        %2121 = vmatpush1.msra.mxu0 %v374
        %2122 = vmatprep.subr.mxu0 0.0
        %2123 = vmatpush1.msra.mxu0 %v375
        %2124 = vmatprep.subr.mxu0 0.0
        %2125 = vmatpush1.msra.mxu0 %v376
        %2126 = vmatprep.subr.mxu0 0.0
        %2127 = vmatpush1.msra.mxu0 %v377
        %2128 = vmatprep.subr.mxu0 0.0
        %2129 = vmatpush1.msra.mxu0 0.0
        %2130 = vmatprep.subr.mxu0 0.0
        %2131 = vmatpush1.msra.mxu0 0.0
        %2132 = vmatprep.subr.mxu0 0.0
        %2133 = vmatpush1.msra.mxu0 0.0
        %2134 = vmatprep.subr.mxu0 0.0
        %2135 = vmatpush1.msra.mxu0 0.0
        %2136 = vmatprep.subr.mxu0 0.0
        %2137 = vmatpush1.msra.mxu0 0.0
        %2138 = vmatprep.subr.mxu0 0.0
        %2139 = vmatpush1.msra.mxu0 0.0
        %2140 = vmatprep.subr.mxu0 0.0
        %2141 = vmatpush1.msra.mxu0 0.0
        %2142 = vmatprep.subr.mxu0 0.0
        %2143 = vmatpush1.msra.mxu0 0.0
        %2144 = vmatprep.subr.mxu0 0.0
        %2145 = vmatpush1.msra.mxu0 0.0
        %2146 = vmatprep.subr.mxu0 0.0
        %2147 = vmatpush1.msra.mxu0 0.0
        %2148 = vmatprep.subr.mxu0 0.0
        %2149 = vmatpush1.msra.mxu0 0.0
        %2150 = vmatprep.subr.mxu0 0.0
        %2151 = vmatpush1.msra.mxu0 0.0
        %2152 = vmatprep.subr.mxu0 0.0
        %2153 = vmatpush1.msra.mxu0 0.0
        %2154 = vmatprep.subr.mxu0 0.0
        %2155 = vmatpush1.msra.mxu0 0.0
        %2156 = vmatprep.subr.mxu0 0.0
        %2157 = vmatpush1.msra.mxu0 0.0
        %2158 = vmatprep.subr.mxu0 0.0
        %2159 = vmatpush1.msra.mxu0 0.0
        %2160 = vmatprep.subr.mxu0 0.0
        %2161 = vmatpush1.msra.mxu0 0.0
        %2162 = vmatprep.subr.mxu0 0.0
        %2163 = vmatpush1.msra.mxu0 0.0
        %2164 = vmatprep.subr.mxu0 0.0
        %2165 = vmatpush1.msra.mxu0 0.0
        %2166 = vmatprep.subr.mxu0 0.0
        %2167 = vmatpush1.msra.mxu0 0.0
        %2168 = vmatprep.subr.mxu0 0.0
        %2169 = vmatpush1.msra.mxu0 0.0
        %2170 = vmatprep.subr.mxu0 0.0
        %2171 = vmatpush1.msra.mxu0 0.0
        %2172 = vmatprep.subr.mxu0 0.0
        %2173 = vmatpush1.msra.mxu0 0.0
        %2174 = vmatprep.subr.mxu0 0.0
        %2175 = vmatpush1.msra.mxu0 0.0
        %2176 = vmatprep.subr.mxu0 0.0
        %2177 = vmatpush1.msra.mxu0 0.0
        %2178 = vmatprep.subr.mxu0 0.0
        %2179 = vmatpush1.msra.mxu0 0.0
        %2180 = vmatprep.subr.mxu0 0.0
        %2181 = vmatpush1.msra.mxu0 0.0
        %2182 = vmatprep.subr.mxu0 0.0
        %2183 = vmatpush1.msra.mxu0 0.0
        %2184 = vmatprep.mubr.f32.mxu0 0.0
        %2185 = vmatmul.mubr.f32.gmra.mrb[0].mxu0 %v2118
        %v2186 = vpop.f32.mrb[0].mxu0
        %v2187 = vadd.f32 0.0, %v2186
        %v2188 = vpop.f32.mrb[0].mxu0
        %2189 = vdwg.mxu0
        %v2190 = vmax.f32 %v2187, 0.0
        %v2191 = vsel %vm396, %v2190, %v2005
        %v2193 = vsel %vm482, %v2191, 0
        %2195 = vmatprep.subr.mxu0 0.0
        %2196 = vmatpush1.msra.mxu0 %v378
        %2197 = vmatprep.subr.mxu0 0.0
        %2198 = vmatpush1.msra.mxu0 %v379
        %2199 = vmatprep.subr.mxu0 0.0
        %2200 = vmatpush1.msra.mxu0 %v380
        %2201 = vmatprep.subr.mxu0 0.0
        %2202 = vmatpush1.msra.mxu0 %v381
        %2203 = vmatprep.subr.mxu0 0.0
        %2204 = vmatpush1.msra.mxu0 %v382
        %2205 = vmatprep.subr.mxu0 0.0
        %2206 = vmatpush1.msra.mxu0 %v383
        %2207 = vmatprep.subr.mxu0 0.0
        %2208 = vmatpush1.msra.mxu0 %v384
        %2209 = vmatprep.subr.mxu0 0.0
        %2210 = vmatpush1.msra.mxu0 %v385
        %2211 = vmatprep.subr.mxu0 0.0
        %2212 = vmatpush1.msra.mxu0 0.0
        %2213 = vmatprep.subr.mxu0 0.0
        %2214 = vmatpush1.msra.mxu0 0.0
        %2215 = vmatprep.subr.mxu0 0.0
        %2216 = vmatpush1.msra.mxu0 0.0
        %2217 = vmatprep.subr.mxu0 0.0
        %2218 = vmatpush1.msra.mxu0 0.0
        %2219 = vmatprep.subr.mxu0 0.0
        %2220 = vmatpush1.msra.mxu0 0.0
        %2221 = vmatprep.subr.mxu0 0.0
        %2222 = vmatpush1.msra.mxu0 0.0
        %2223 = vmatprep.subr.mxu0 0.0
        %2224 = vmatpush1.msra.mxu0 0.0
        %2225 = vmatprep.subr.mxu0 0.0
        %2226 = vmatpush1.msra.mxu0 0.0
        %2227 = vmatprep.subr.mxu0 0.0
        %2228 = vmatpush1.msra.mxu0 0.0
        %2229 = vmatprep.subr.mxu0 0.0
        %2230 = vmatpush1.msra.mxu0 0.0
        %2231 = vmatprep.subr.mxu0 0.0
        %2232 = vmatpush1.msra.mxu0 0.0
        %2233 = vmatprep.subr.mxu0 0.0
        %2234 = vmatpush1.msra.mxu0 0.0
        %2235 = vmatprep.subr.mxu0 0.0
        %2236 = vmatpush1.msra.mxu0 0.0
        %2237 = vmatprep.subr.mxu0 0.0
        %2238 = vmatpush1.msra.mxu0 0.0
        %2239 = vmatprep.subr.mxu0 0.0
        %2240 = vmatpush1.msra.mxu0 0.0
        %2241 = vmatprep.subr.mxu0 0.0
        %2242 = vmatpush1.msra.mxu0 0.0
        %2243 = vmatprep.subr.mxu0 0.0
        %2244 = vmatpush1.msra.mxu0 0.0
        %2245 = vmatprep.subr.mxu0 0.0
        %2246 = vmatpush1.msra.mxu0 0.0
        %2247 = vmatprep.subr.mxu0 0.0
        %2248 = vmatpush1.msra.mxu0 0.0
        %2249 = vmatprep.subr.mxu0 0.0
        %2250 = vmatpush1.msra.mxu0 0.0
        %2251 = vmatprep.subr.mxu0 0.0
        %2252 = vmatpush1.msra.mxu0 0.0
        %2253 = vmatprep.subr.mxu0 0.0
        %2254 = vmatpush1.msra.mxu0 0.0
        %2255 = vmatprep.subr.mxu0 0.0
        %2256 = vmatpush1.msra.mxu0 0.0
        %2257 = vmatprep.subr.mxu0 0.0
        %2258 = vmatpush1.msra.mxu0 0.0
        %2259 = vmatprep.mubr.f32.mxu0 0.0
        %2260 = vmatmul.mubr.f32.gmra.mrb[0].mxu0 %v2193
        %v2261 = vpop.f32.mrb[0].mxu0
        %v2262 = vadd.f32 %v480, %v2261
        %v2263 = vpop.f32.mrb[0].mxu0
        %2264 = vdwg.mxu0
        %v2265 = vxor.u32 %v2262, 2147483648
        %v2266 = vmul.f32 %v2265, 1.442695
        %v2267 = vpow.pop %v2266
        %v2268 = vadd.f32 %v2267, 1.0
        %v2269 = vrcp.pop %v2268
        %v2270 = vmul.f32 1.0, %v2269
        %2272 = vrot.lane.b32.xlu0 %v2262, 32
        %v2273 = vpop.permute.xlu0 %2272
        %v2275 = vmul.f32 %v2270, %v2273
        %2277 = vrot.lane.b32.xlu0 %v2275, 64
        %v2278 = vpop.permute.xlu0 %2277
        %v2280 = vadd.f32 %v2262, %v2278
        %v2281 = vtanh.pop %v2280
        %v2282 = vsub.f32 1.0, %v2270
        %2284 = vrot.lane.b32.xlu0 %v2281, 96
        %v2285 = vpop.permute.xlu0 %2284
        %v2287 = vmul.f32 %v2282, %v2285
        %v2288 = vmul.f32 %v2270, %v2005
        %v2289 = vadd.f32 %v2287, %v2288
        %2291 = vrot.lane.b32.xlu0 %v2289, 96
        %v2292 = vpop.permute.xlu0 %2291
        %v2293 = vsel %vm396, %v2292, 0
        %2295 = vmatprep.subr.mxu0 0.0
        %2296 = vmatpush1.msra.mxu0 %v387
        %2297 = vmatprep.subr.mxu0 0.0
        %2298 = vmatpush1.msra.mxu0 %v388
        %2299 = vmatprep.subr.mxu0 0.0
        %2300 = vmatpush1.msra.mxu0 %v389
        %2301 = vmatprep.subr.mxu0 0.0
        %2302 = vmatpush1.msra.mxu0 %v390
        %2303 = vmatprep.subr.mxu0 0.0
        %2304 = vmatpush1.msra.mxu0 0.0
        %2305 = vmatprep.subr.mxu0 0.0
        %2306 = vmatpush1.msra.mxu0 0.0
        %2307 = vmatprep.subr.mxu0 0.0
        %2308 = vmatpush1.msra.mxu0 0.0
        %2309 = vmatprep.subr.mxu0 0.0
        %2310 = vmatpush1.msra.mxu0 0.0
        %2311 = vmatprep.subr.mxu0 0.0
        %2312 = vmatpush1.msra.mxu0 0.0
        %2313 = vmatprep.subr.mxu0 0.0
        %2314 = vmatpush1.msra.mxu0 0.0
        %2315 = vmatprep.subr.mxu0 0.0
        %2316 = vmatpush1.msra.mxu0 0.0
        %2317 = vmatprep.subr.mxu0 0.0
        %2318 = vmatpush1.msra.mxu0 0.0
        %2319 = vmatprep.subr.mxu0 0.0
        %2320 = vmatpush1.msra.mxu0 0.0
        %2321 = vmatprep.subr.mxu0 0.0
        %2322 = vmatpush1.msra.mxu0 0.0
        %2323 = vmatprep.subr.mxu0 0.0
        %2324 = vmatpush1.msra.mxu0 0.0
        %2325 = vmatprep.subr.mxu0 0.0
        %2326 = vmatpush1.msra.mxu0 0.0
        %2327 = vmatprep.subr.mxu0 0.0
        %2328 = vmatpush1.msra.mxu0 0.0
        %2329 = vmatprep.subr.mxu0 0.0
        %2330 = vmatpush1.msra.mxu0 0.0
        %2331 = vmatprep.subr.mxu0 0.0
        %2332 = vmatpush1.msra.mxu0 0.0
        %2333 = vmatprep.subr.mxu0 0.0
        %2334 = vmatpush1.msra.mxu0 0.0
        %2335 = vmatprep.subr.mxu0 0.0
        %2336 = vmatpush1.msra.mxu0 0.0
        %2337 = vmatprep.subr.mxu0 0.0
        %2338 = vmatpush1.msra.mxu0 0.0
        %2339 = vmatprep.subr.mxu0 0.0
        %2340 = vmatpush1.msra.mxu0 0.0
        %2341 = vmatprep.subr.mxu0 0.0
        %2342 = vmatpush1.msra.mxu0 0.0
        %2343 = vmatprep.subr.mxu0 0.0
        %2344 = vmatpush1.msra.mxu0 0.0
        %2345 = vmatprep.subr.mxu0 0.0
        %2346 = vmatpush1.msra.mxu0 0.0
        %2347 = vmatprep.subr.mxu0 0.0
        %2348 = vmatpush1.msra.mxu0 0.0
        %2349 = vmatprep.subr.mxu0 0.0
        %2350 = vmatpush1.msra.mxu0 0.0
        %2351 = vmatprep.subr.mxu0 0.0
        %2352 = vmatpush1.msra.mxu0 0.0
        %2353 = vmatprep.subr.mxu0 0.0
        %2354 = vmatpush1.msra.mxu0 0.0
        %2355 = vmatprep.subr.mxu0 0.0
        %2356 = vmatpush1.msra.mxu0 0.0
        %2357 = vmatprep.subr.mxu0 0.0
        %2358 = vmatpush1.msra.mxu0 0.0
        %2359 = vmatprep.mubr.f32.mxu0 0.0
        %2360 = vmatmul.mubr.f32.gmra.mrb[0].mxu0 %v2293
        %v2361 = vpop.f32.mrb[0].mxu0
        %v2362 = vadd.f32 %v585, %v2361
        %v2363 = vpop.f32.mrb[0].mxu0
        %2364 = vdwg.mxu0
        %v2365 = vsel %vm396, %v2362, -inf
        %2366 = vmax.xlane.f32.xlu0 %v2365
        %v2367 = vpop.xlane.xlu0 %2366
        %v2368 = vsub.f32 %v2362, %v2367
        %v2369 = vmul.f32 %v2368, 1.442695
        %v2370 = vpow.pop %v2369
        %v2371 = vsel %vm396, %v2370, 0.0
        %2372 = vadd.xlane.f32.xlu0 %v2371
        %v2373 = vpop.xlane.xlu0 %2372
        %v2374 = vlog2.pop %v2373
        %v2375 = vmul.f32 %v2374, 0.6931472
        %v2376 = vsub.f32 %v2368, %v2375
        %vm2377 = vcmp.ge.f32.partialorder %v2362, %v2367
        %v2378 = vsel %vm2377, %v393, 32
        %v2379 = vsel %vm396, %v2378, 2147483647
        %v2380 = vand.u32 %v2379, 65535
        %v2381 = vshra.s32 %v2379, 16
        %v2382 = vcvt.s32.f32 %v2380
        %v2383 = vcvt.s32.f32 %v2381
        %2384 = vmin.xlane.f32.xlu0 %v2383
        %v2385 = vpop.xlane.xlu0 %2384
        %vm2386 = vcmp.eq.f32.partialorder %v2383, %v2385
        %v2387 = vsel %vm2386, %v2382, inf
        %2388 = vmin.xlane.f32.xlu0 %v2387
        %v2389 = vpop.xlane.xlu0 %2388
        %v2390 = vcvt.f32.s32 %v2389
        %v2391 = vcvt.f32.s32 %v2385
        %v2392 = vshll.u32 %v2391, 16
        %v2393 = vadd.s32 %v2392, %v2390
        %vm2394 = vcmp.eq.s32.totalorder %v393, %v2393
        %v2395 = vsel %vm2394, 1, 0
        %v2396 = vcvt.s32.f32 %v2395
        %v2397 = vsel %vm396, %v2376, %v2289
        %v2398 = vsel %vm482, %v2397, 0.0
        %s2399 = scalar_lea.vmem %s373, 48 [#allocation11]
        %2400 = vst [vmem:[%s2399] sm:$0xff] %v2398
        %v2402 = vsel %vm396, %v2396, 0
        %2404 = vmatprep.subr.mxu0 0.0
        %2405 = vmatpush1.msra.mxu0 %v374
        %2406 = vmatprep.subr.mxu0 0.0
        %2407 = vmatpush1.msra.mxu0 %v375
        %2408 = vmatprep.subr.mxu0 0.0
        %2409 = vmatpush1.msra.mxu0 %v376
        %2410 = vmatprep.subr.mxu0 0.0
        %2411 = vmatpush1.msra.mxu0 %v377
        %2412 = vmatprep.subr.mxu0 0.0
        %2413 = vmatpush1.msra.mxu0 0.0
        %2414 = vmatprep.subr.mxu0 0.0
        %2415 = vmatpush1.msra.mxu0 0.0
        %2416 = vmatprep.subr.mxu0 0.0
        %2417 = vmatpush1.msra.mxu0 0.0
        %2418 = vmatprep.subr.mxu0 0.0
        %2419 = vmatpush1.msra.mxu0 0.0
        %2420 = vmatprep.subr.mxu0 0.0
        %2421 = vmatpush1.msra.mxu0 0.0
        %2422 = vmatprep.subr.mxu0 0.0
        %2423 = vmatpush1.msra.mxu0 0.0
        %2424 = vmatprep.subr.mxu0 0.0
        %2425 = vmatpush1.msra.mxu0 0.0
        %2426 = vmatprep.subr.mxu0 0.0
        %2427 = vmatpush1.msra.mxu0 0.0
        %2428 = vmatprep.subr.mxu0 0.0
        %2429 = vmatpush1.msra.mxu0 0.0
        %2430 = vmatprep.subr.mxu0 0.0
        %2431 = vmatpush1.msra.mxu0 0.0
        %2432 = vmatprep.subr.mxu0 0.0
        %2433 = vmatpush1.msra.mxu0 0.0
        %2434 = vmatprep.subr.mxu0 0.0
        %2435 = vmatpush1.msra.mxu0 0.0
        %2436 = vmatprep.subr.mxu0 0.0
        %2437 = vmatpush1.msra.mxu0 0.0
        %2438 = vmatprep.subr.mxu0 0.0
        %2439 = vmatpush1.msra.mxu0 0.0
        %2440 = vmatprep.subr.mxu0 0.0
        %2441 = vmatpush1.msra.mxu0 0.0
        %2442 = vmatprep.subr.mxu0 0.0
        %2443 = vmatpush1.msra.mxu0 0.0
        %2444 = vmatprep.subr.mxu0 0.0
        %2445 = vmatpush1.msra.mxu0 0.0
        %2446 = vmatprep.subr.mxu0 0.0
        %2447 = vmatpush1.msra.mxu0 0.0
        %2448 = vmatprep.subr.mxu0 0.0
        %2449 = vmatpush1.msra.mxu0 0.0
        %2450 = vmatprep.subr.mxu0 0.0
        %2451 = vmatpush1.msra.mxu0 0.0
        %2452 = vmatprep.subr.mxu0 0.0
        %2453 = vmatpush1.msra.mxu0 0.0
        %2454 = vmatprep.subr.mxu0 0.0
        %2455 = vmatpush1.msra.mxu0 0.0
        %2456 = vmatprep.subr.mxu0 0.0
        %2457 = vmatpush1.msra.mxu0 0.0
        %2458 = vmatprep.subr.mxu0 0.0
        %2459 = vmatpush1.msra.mxu0 0.0
        %2460 = vmatprep.subr.mxu0 0.0
        %2461 = vmatpush1.msra.mxu0 0.0
        %2462 = vmatprep.subr.mxu0 0.0
        %2463 = vmatpush1.msra.mxu0 0.0
        %2464 = vmatprep.subr.mxu0 0.0
        %2465 = vmatpush1.msra.mxu0 0.0
        %2466 = vmatprep.subr.mxu0 0.0
        %2467 = vmatpush1.msra.mxu0 0.0
        %2468 = vmatprep.mubr.f32.mxu0 0.0
        %2469 = vmatmul.mubr.f32.gmra.mrb[0].mxu0 %v2402
        %v2470 = vpop.f32.mrb[0].mxu0
        %v2471 = vadd.f32 0.0, %v2470
        %v2472 = vpop.f32.mrb[0].mxu0
        %2473 = vdwg.mxu0
        %v2474 = vmax.f32 %v2471, 0.0
        %v2475 = vsel %vm396, %v2474, %v2289
        %v2477 = vsel %vm482, %v2475, 0
        %2479 = vmatprep.subr.mxu0 0.0
        %2480 = vmatpush1.msra.mxu0 %v378
        %2481 = vmatprep.subr.mxu0 0.0
        %2482 = vmatpush1.msra.mxu0 %v379
        %2483 = vmatprep.subr.mxu0 0.0
        %2484 = vmatpush1.msra.mxu0 %v380
        %2485 = vmatprep.subr.mxu0 0.0
        %2486 = vmatpush1.msra.mxu0 %v381
        %2487 = vmatprep.subr.mxu0 0.0
        %2488 = vmatpush1.msra.mxu0 %v382
        %2489 = vmatprep.subr.mxu0 0.0
        %2490 = vmatpush1.msra.mxu0 %v383
        %2491 = vmatprep.subr.mxu0 0.0
        %2492 = vmatpush1.msra.mxu0 %v384
        %2493 = vmatprep.subr.mxu0 0.0
        %2494 = vmatpush1.msra.mxu0 %v385
        %2495 = vmatprep.subr.mxu0 0.0
        %2496 = vmatpush1.msra.mxu0 0.0
        %2497 = vmatprep.subr.mxu0 0.0
        %2498 = vmatpush1.msra.mxu0 0.0
        %2499 = vmatprep.subr.mxu0 0.0
        %2500 = vmatpush1.msra.mxu0 0.0
        %2501 = vmatprep.subr.mxu0 0.0
        %2502 = vmatpush1.msra.mxu0 0.0
        %2503 = vmatprep.subr.mxu0 0.0
        %2504 = vmatpush1.msra.mxu0 0.0
        %2505 = vmatprep.subr.mxu0 0.0
        %2506 = vmatpush1.msra.mxu0 0.0
        %2507 = vmatprep.subr.mxu0 0.0
        %2508 = vmatpush1.msra.mxu0 0.0
        %2509 = vmatprep.subr.mxu0 0.0
        %2510 = vmatpush1.msra.mxu0 0.0
        %2511 = vmatprep.subr.mxu0 0.0
        %2512 = vmatpush1.msra.mxu0 0.0
        %2513 = vmatprep.subr.mxu0 0.0
        %2514 = vmatpush1.msra.mxu0 0.0
        %2515 = vmatprep.subr.mxu0 0.0
        %2516 = vmatpush1.msra.mxu0 0.0
        %2517 = vmatprep.subr.mxu0 0.0
        %2518 = vmatpush1.msra.mxu0 0.0
        %2519 = vmatprep.subr.mxu0 0.0
        %2520 = vmatpush1.msra.mxu0 0.0
        %2521 = vmatprep.subr.mxu0 0.0
        %2522 = vmatpush1.msra.mxu0 0.0
        %2523 = vmatprep.subr.mxu0 0.0
        %2524 = vmatpush1.msra.mxu0 0.0
        %2525 = vmatprep.subr.mxu0 0.0
        %2526 = vmatpush1.msra.mxu0 0.0
        %2527 = vmatprep.subr.mxu0 0.0
        %2528 = vmatpush1.msra.mxu0 0.0
        %2529 = vmatprep.subr.mxu0 0.0
        %2530 = vmatpush1.msra.mxu0 0.0
        %2531 = vmatprep.subr.mxu0 0.0
        %2532 = vmatpush1.msra.mxu0 0.0
        %2533 = vmatprep.subr.mxu0 0.0
        %2534 = vmatpush1.msra.mxu0 0.0
        %2535 = vmatprep.subr.mxu0 0.0
        %2536 = vmatpush1.msra.mxu0 0.0
        %2537 = vmatprep.subr.mxu0 0.0
        %2538 = vmatpush1.msra.mxu0 0.0
        %2539 = vmatprep.subr.mxu0 0.0
        %2540 = vmatpush1.msra.mxu0 0.0
        %2541 = vmatprep.subr.mxu0 0.0
        %2542 = vmatpush1.msra.mxu0 0.0
        %2543 = vmatprep.mubr.f32.mxu0 0.0
        %2544 = vmatmul.mubr.f32.gmra.mrb[0].mxu0 %v2477
        %v2545 = vpop.f32.mrb[0].mxu0
        %v2546 = vadd.f32 %v480, %v2545
        %v2547 = vpop.f32.mrb[0].mxu0
        %2548 = vdwg.mxu0
        %v2549 = vxor.u32 %v2546, 2147483648
        %v2550 = vmul.f32 %v2549, 1.442695
        %v2551 = vpow.pop %v2550
        %v2552 = vadd.f32 %v2551, 1.0
        %v2553 = vrcp.pop %v2552
        %v2554 = vmul.f32 1.0, %v2553
        %2556 = vrot.lane.b32.xlu0 %v2546, 32
        %v2557 = vpop.permute.xlu0 %2556
        %v2559 = vmul.f32 %v2554, %v2557
        %2561 = vrot.lane.b32.xlu0 %v2559, 64
        %v2562 = vpop.permute.xlu0 %2561
        %v2564 = vadd.f32 %v2546, %v2562
        %v2565 = vtanh.pop %v2564
        %v2566 = vsub.f32 1.0, %v2554
        %2568 = vrot.lane.b32.xlu0 %v2565, 96
        %v2569 = vpop.permute.xlu0 %2568
        %v2571 = vmul.f32 %v2566, %v2569
        %v2572 = vmul.f32 %v2554, %v2289
        %v2573 = vadd.f32 %v2571, %v2572
        %2575 = vrot.lane.b32.xlu0 %v2573, 96
        %v2576 = vpop.permute.xlu0 %2575
        %v2577 = vsel %vm396, %v2576, 0
        %2579 = vmatprep.subr.mxu0 0.0
        %2580 = vmatpush1.msra.mxu0 %v387
        %2581 = vmatprep.subr.mxu0 0.0
        %2582 = vmatpush1.msra.mxu0 %v388
        %2583 = vmatprep.subr.mxu0 0.0
        %2584 = vmatpush1.msra.mxu0 %v389
        %2585 = vmatprep.subr.mxu0 0.0
        %2586 = vmatpush1.msra.mxu0 %v390
        %2587 = vmatprep.subr.mxu0 0.0
        %2588 = vmatpush1.msra.mxu0 0.0
        %2589 = vmatprep.subr.mxu0 0.0
        %2590 = vmatpush1.msra.mxu0 0.0
        %2591 = vmatprep.subr.mxu0 0.0
        %2592 = vmatpush1.msra.mxu0 0.0
        %2593 = vmatprep.subr.mxu0 0.0
        %2594 = vmatpush1.msra.mxu0 0.0
        %2595 = vmatprep.subr.mxu0 0.0
        %2596 = vmatpush1.msra.mxu0 0.0
        %2597 = vmatprep.subr.mxu0 0.0
        %2598 = vmatpush1.msra.mxu0 0.0
        %2599 = vmatprep.subr.mxu0 0.0
        %2600 = vmatpush1.msra.mxu0 0.0
        %2601 = vmatprep.subr.mxu0 0.0
        %2602 = vmatpush1.msra.mxu0 0.0
        %2603 = vmatprep.subr.mxu0 0.0
        %2604 = vmatpush1.msra.mxu0 0.0
        %2605 = vmatprep.subr.mxu0 0.0
        %2606 = vmatpush1.msra.mxu0 0.0
        %2607 = vmatprep.subr.mxu0 0.0
        %2608 = vmatpush1.msra.mxu0 0.0
        %2609 = vmatprep.subr.mxu0 0.0
        %2610 = vmatpush1.msra.mxu0 0.0
        %2611 = vmatprep.subr.mxu0 0.0
        %2612 = vmatpush1.msra.mxu0 0.0
        %2613 = vmatprep.subr.mxu0 0.0
        %2614 = vmatpush1.msra.mxu0 0.0
        %2615 = vmatprep.subr.mxu0 0.0
        %2616 = vmatpush1.msra.mxu0 0.0
        %2617 = vmatprep.subr.mxu0 0.0
        %2618 = vmatpush1.msra.mxu0 0.0
        %2619 = vmatprep.subr.mxu0 0.0
        %2620 = vmatpush1.msra.mxu0 0.0
        %2621 = vmatprep.subr.mxu0 0.0
        %2622 = vmatpush1.msra.mxu0 0.0
        %2623 = vmatprep.subr.mxu0 0.0
        %2624 = vmatpush1.msra.mxu0 0.0
        %2625 = vmatprep.subr.mxu0 0.0
        %2626 = vmatpush1.msra.mxu0 0.0
        %2627 = vmatprep.subr.mxu0 0.0
        %2628 = vmatpush1.msra.mxu0 0.0
        %2629 = vmatprep.subr.mxu0 0.0
        %2630 = vmatpush1.msra.mxu0 0.0
        %2631 = vmatprep.subr.mxu0 0.0
        %2632 = vmatpush1.msra.mxu0 0.0
        %2633 = vmatprep.subr.mxu0 0.0
        %2634 = vmatpush1.msra.mxu0 0.0
        %2635 = vmatprep.subr.mxu0 0.0
        %2636 = vmatpush1.msra.mxu0 0.0
        %2637 = vmatprep.subr.mxu0 0.0
        %2638 = vmatpush1.msra.mxu0 0.0
        %2639 = vmatprep.subr.mxu0 0.0
        %2640 = vmatpush1.msra.mxu0 0.0
        %2641 = vmatprep.subr.mxu0 0.0
        %2642 = vmatpush1.msra.mxu0 0.0
        %2643 = vmatprep.mubr.f32.mxu0 0.0
        %2644 = vmatmul.mubr.f32.gmra.mrb[0].mxu0 %v2577
        %v2645 = vpop.f32.mrb[0].mxu0
        %v2646 = vadd.f32 %v585, %v2645
        %v2647 = vpop.f32.mrb[0].mxu0
        %2648 = vdwg.mxu0
        %v2649 = vsel %vm396, %v2646, -inf
        %2650 = vmax.xlane.f32.xlu0 %v2649
        %v2651 = vpop.xlane.xlu0 %2650
        %v2652 = vsub.f32 %v2646, %v2651
        %v2653 = vmul.f32 %v2652, 1.442695
        %v2654 = vpow.pop %v2653
        %v2655 = vsel %vm396, %v2654, 0.0
        %2656 = vadd.xlane.f32.xlu0 %v2655
        %v2657 = vpop.xlane.xlu0 %2656
        %v2658 = vlog2.pop %v2657
        %v2659 = vmul.f32 %v2658, 0.6931472
        %v2660 = vsub.f32 %v2652, %v2659
        %v2661 = vsel %vm396, %v2660, %v2573
        %v2662 = vsel %vm482, %v2661, 0.0
        %s2663 = scalar_lea.vmem %s373, 56 [#allocation11]
        %2664 = vst [vmem:[%s2663] sm:$0xff] %v2662
        %s2665 = sand.u32 %s193, 1
        %s2666 = scalar_lea.sflag [#allocation4], %s2665
        %s2667 = sand.u32 %s193, 1
        %s2668 = smul.addr %s2667, 64
        %s2669 = scalar_lea.vmem [#allocation11], %s2668
        // Predicated region
        $region69: #{tpu_custom_call.1} parent=47 // pred_check
          %p2670 = pneg %p203
        $region70: #{tpu_custom_call.1} parent=47 // pred_check_branch
          %2672 = sbr.rel (%p2670) target = $region72
        $region71: #{tpu_custom_call.1} parent=47 // pred_region
          %s2674 = ssub.s32 1024, 1024
          %2675 = vsyncadd %s2666, %s2674
          %s2676 = smul.addr %s28, 128
          %s2677 = scalar_lea.hbm %s7, %s2676
          %s2678 = sshll.u32 %s2669, 4
          %s2679 = int_to_ptr.vmem [resolvable:$true] %s2678
          %2684 = dma.vmem_to_hbm [thread:$0]  %s2679, 1024, %s2677, %s2666, 128, 256, 8
        $region72: #{tpu_custom_call.1} parent=47 // pred_fallthru
          _
      $region48: #{tpu_custom_call.1} parent=5 // pred_fallthru
        _
      %p2685 = scmp.le.s32.totalorder 2, %s23
      // Predicated region
      $region73: #{tpu_custom_call.1} parent=5 // pred_check
        %p2686 = pneg %p2685
      $region74: #{tpu_custom_call.1} parent=5 // pred_check_branch
        %2688 = sbr.rel (%p2686) target = $region76
      $region75: #{tpu_custom_call.1} parent=5 // pred_region
        %s2689 = ssub.s32 %s23, 2
        // Predicated region
        $region77: #{tpu_custom_call.1} parent=75 // pred_check
          %p2690 = pneg %p209
        $region78: #{tpu_custom_call.1} parent=75 // pred_check_branch
          %2692 = sbr.rel (%p2690) target = $region80
        $region79: #{tpu_custom_call.1} parent=75 // pred_region
          %s2693 = sand.u32 %s194, 1
          %s2694 = scalar_lea.sflag [#allocation4], %s2693
          %s2695 = sand.u32 %s194, 1
          %s2696 = smul.addr %s2695, 64
          %s2697 = scalar_lea.vmem [#allocation11], %s2696
          %2698 = dma.done %s2694, 1024
        $region80: #{tpu_custom_call.1} parent=75 // pred_fallthru
          _
      $region76: #{tpu_custom_call.1} parent=5 // pred_fallthru
        _
    $region6: #{tpu_custom_call.1} parent=1 // loop_footer
      %s27 = sadd.s32 1, %s23
    $region7: #{tpu_custom_call.1} parent=1 // loop_footer_branch
      %22 = sbr.rel target = $region3
    $region8: #{tpu_custom_call.1} parent=1 // loop_exit
      _
    %2699 = vsyncpa [#allocation3], 1
    %s2700 = scalar_lea.sflag [#allocation3], 1
    %2701 = vsyncpa %s2700, 1
    %2702 = vsyncpa [#allocation6], 1
    %s2703 = scalar_lea.sflag [#allocation6], 1
    %2704 = vsyncpa %s2703, 1
    %2705 = vsyncpa [#allocation9], 1
    %2706 = vsyncpa [#allocation4], 1
    %s2707 = scalar_lea.sflag [#allocation4], 1
    %2708 = vsyncpa %s2707, 1

</llo_original>
